<compile_context>
chip_gen: v6e
topology: v6e:2x2x1
jax: 0.10.0
libtpu: 0.0.40
codegen_flags: <defaults>
</compile_context>

<pallas_src>
import functools

import numpy as np
import jax
import jax.numpy as jnp
from jax.experimental import pallas as pl
from jax.experimental.pallas import tpu as pltpu


# ----------------------------------------------------------------------------
# Host-side pooling / bilinear-resize matrices (exact PyTorch index math).
# ----------------------------------------------------------------------------
def _adaptive_pool_matrix(in_size, out_size):
    P = np.zeros((out_size, in_size), np.float32)
    for i in range(out_size):
        start = (i * in_size) // out_size
        end = -(-((i + 1) * in_size) // out_size)  # ceil
        P[i, start:end] = 1.0 / float(end - start)
    return P


def _bilinear_matrix(out_size, in_size, align_corners=False):
    U = np.zeros((out_size, in_size), np.float32)
    for i in range(out_size):
        if align_corners and out_size > 1:
            src = i * (in_size - 1) / (out_size - 1)
        else:
            src = (i + 0.5) * in_size / out_size - 0.5
            src = max(src, 0.0)
        i0 = min(int(np.floor(src)), in_size - 1)
        i1 = min(i0 + 1, in_size - 1)
        frac = src - i0
        U[i, i0] += 1.0 - frac
        U[i, i1] += frac
    return U


# ----------------------------------------------------------------------------
# Pallas kernel: one grid step processes B samples, all in (channels, H*W) layout.
# ----------------------------------------------------------------------------
def _pp_context_kernel(x_ref, pt_ref, w1_ref, b1_ref, ut_ref, w3_ref, b3_ref,
                       mask_ref, out_ref, *, B, Cmid, Cout, HW, pad, stage_qs,
                       offsets):
    f32 = jnp.float32
    hi = jax.lax.Precision.HIGHEST
    BCmid = B * Cmid

    # Adaptive average pooling of every stage at once: (B*Cin, HW) @ (HW, Q).
    x = x_ref[...]
    pooled = jnp.dot(x, pt_ref[...], precision=hi, preferred_element_type=f32)

    # Per stage: 1x1 conv (BN scale folded, block-diag over the B samples) + bias
    # + ReLU, then bilinear upsample into a lane-padded feature map (B*Cmid, HW+2*pad).
    w1_all = w1_ref[...]
    b1_all = b1_ref[...]
    ut_all = ut_ref[...]
    featp = None
    col = 0
    for si, q in enumerate(stage_qs):
        w1s = w1_all[si * BCmid:(si + 1) * BCmid, :]
        b1s = b1_all[si * BCmid:(si + 1) * BCmid, :]
        y = jnp.dot(w1s, pooled[:, col:col + q], precision=hi,
                    preferred_element_type=f32) + b1s
        y = jnp.maximum(y, 0.0)
        up = jnp.dot(y, ut_all[col:col + q, :], precision=hi,
                     preferred_element_type=f32)
        featp = up if featp is None else featp + up
        col += q

    # conv_out: 3x3 conv (pad=1, bias-free) + folded BN + ReLU.  Taps are static
    # lane-window slices of the padded feature row, masked at the spatial edges,
    # stacked on the sublane axis -> one K=9*Cmid matmul per sample.
    masks = mask_ref[...]                           # (9, HW)
    w3t = w3_ref[...]                               # (Cout, 9*Cmid)
    b3 = b3_ref[...]                                # (Cout, 1)
    for b in range(B):
        fb = featp[b * Cmid:(b + 1) * Cmid, :]      # (Cmid, HW + 2*pad)
        taps = jnp.concatenate(
            [fb[:, pad + off: pad + off + HW] * masks[k:k + 1, :]
             for k, off in enumerate(offsets)],
            axis=0)                                 # (9*Cmid, HW)
        o = jnp.dot(w3t, taps, precision=hi, preferred_element_type=f32) + b3
        out_ref[b * Cout:(b + 1) * Cout, :] = jnp.maximum(o, 0.0)


# ----------------------------------------------------------------------------
# Wrapper
# ----------------------------------------------------------------------------
def _pick_block_batch(N, Cin, Cout, max_b=8):
    """Samples per grid step: amortize per-step overhead, keep the second-minor
    BlockSpec dims 8-aligned (or full), and prefer >= 2 grid steps (megacore)."""
    def ok(b):
        return (N % b == 0
                and ((b * Cin) % 8 == 0 or b == N)
                and ((b * Cout) % 8 == 0 or b == N))
    pref = [b for b in range(1, min(max_b, N) + 1) if ok(b) and N // b >= 2]
    if pref:
        return max(pref)
    anyb = [b for b in range(1, min(max_b, N) + 1) if ok(b)]
    return max(anyb) if anyb else N


def pp_context_forward(x_nchw, params, *, bin_sizes, align_corners=False):
    N, Cin, H, W = x_nchw.shape
    stages = params["stages"]
    w3, s3, b3 = params["conv_out"]
    Cmid = stages[0][0].shape[1]
    Cout = w3.shape[-1]
    HW = H * W
    pad = W + 1                                    # covers the largest 3x3 tap offset
    HWP = HW + 2 * pad

    B = _pick_block_batch(N, Cin, Cout)

    # ---- host-side constants: pooling / lane-padded upsample matrices, tap offsets,
    #      spatial edge masks (static, depend only on H, W, bin_sizes).
    pt_cols, ut_rows, stage_qs = [], [], []
    for s in bin_sizes:
        Pr = _adaptive_pool_matrix(H, s)
        Pc = _adaptive_pool_matrix(W, s)
        Ur = _bilinear_matrix(H, s, align_corners)
        Uc = _bilinear_matrix(W, s, align_corners)
        pt_cols.append(np.kron(Pr, Pc).T)                       # (HW, s*s)
        u_pad = np.zeros((s * s, HWP), np.float32)
        u_pad[:, pad:pad + HW] = np.kron(Ur, Uc).T              # lane-padded upsample
        ut_rows.append(u_pad)
        stage_qs.append(s * s)
    pt_all = jnp.asarray(np.concatenate(pt_cols, axis=1))       # (HW, Q)
    ut_all = jnp.asarray(np.concatenate(ut_rows, axis=0))       # (Q, HW + 2*pad)

    offsets, mask_rows = [], []
    hh, ww = np.meshgrid(np.arange(H), np.arange(W), indexing="ij")
    for dr in (-1, 0, 1):
        for dc in (-1, 0, 1):
            offsets.append(dr * W + dc)
            valid = ((hh + dr >= 0) & (hh + dr < H) &
                     (ww + dc >= 0) & (ww + dc < W))
            mask_rows.append(valid.astype(np.float32).reshape(-1))
    masks = jnp.asarray(np.stack(mask_rows, axis=0))            # (9, HW)

    # ---- fold BN scales into conv weights; block-diagonalize the 1x1 convs over B.
    eye_b = jnp.eye(B, dtype=jnp.float32)
    w1_blocks, b1_blocks = [], []
    for (w1, s1, b1) in stages:                                 # w1: (Cin, Cmid)
        w1s_t = (w1 * s1[None, :]).T                            # (Cmid, Cin), scale folded
        w1_blocks.append(jnp.kron(eye_b, w1s_t))                # (B*Cmid, B*Cin)
        b1_blocks.append(jnp.tile(b1.reshape(Cmid, 1), (B, 1))) # (B*Cmid, 1)
    w1_all = jnp.concatenate(w1_blocks, axis=0)                 # (S*B*Cmid, B*Cin)
    b1_all = jnp.concatenate(b1_blocks, axis=0)                 # (S*B*Cmid, 1)

    w3t = jnp.transpose(w3 * s3.reshape(1, 1, 1, -1),
                        (3, 0, 1, 2)).reshape(Cout, 9 * Cmid)   # (Cout, 9*Cmid), k-major
    b3c = b3.reshape(Cout, 1)

    consts = (pt_all, w1_all, b1_all, ut_all, w3t, b3c, masks)

    kernel = functools.partial(
        _pp_context_kernel,
        B=B, Cmid=Cmid, Cout=Cout, HW=HW, pad=pad,
        stage_qs=tuple(stage_qs), offsets=tuple(offsets))

    x2d = x_nchw.reshape(N * Cin, HW)                           # native NCHW flattening

    def const_spec(a):
        nd = a.ndim
        return pl.BlockSpec(a.shape, lambda n, _nd=nd: (0,) * _nd)

    out2d = pl.pallas_call(
        kernel,
        out_shape=jax.ShapeDtypeStruct((N * Cout, HW), jnp.float32),
        grid_spec=pltpu.PrefetchScalarGridSpec(
            num_scalar_prefetch=0,
            grid=(N // B,),
            in_specs=[pl.BlockSpec((B * Cin, HW), lambda n: (n, 0))]
                     + [const_spec(a) for a in consts],
            out_specs=pl.BlockSpec((B * Cout, HW), lambda n: (n, 0)),
        ),
        compiler_params=pltpu.CompilerParams(
            dimension_semantics=("parallel",),
            vmem_limit_bytes=32 * 1024 * 1024),
    )(x2d, *consts)

    return out2d.reshape(N, Cout, H, W)


# ----------------------------------------------------------------------------
# Deterministic parameter init (Conv weights + folded eval-mode BatchNorm)
# ----------------------------------------------------------------------------
def _bn_fold(key, c, eps=1e-5):
    k1, k2, k3, k4 = jax.random.split(key, 4)
    gamma = 1.0 + 0.1 * jax.random.normal(k1, (c,), jnp.float32)
    beta = 0.1 * jax.random.normal(k2, (c,), jnp.float32)
    mean = 0.1 * jax.random.normal(k3, (c,), jnp.float32)
    var = jnp.abs(jax.random.normal(k4, (c,), jnp.float32)) + 0.5
    scale = gamma / jnp.sqrt(var + eps)
    bias = beta - mean * scale
    return scale, bias


def init_params(key, cin, cmid, cout, bin_sizes):
    keys = jax.random.split(key, 2 * len(bin_sizes) + 2)
    stages = []
    for i in range(len(bin_sizes)):
        w1 = 0.3 * jax.random.normal(keys[2 * i], (cin, cmid), jnp.float32)
        s1, b1 = _bn_fold(keys[2 * i + 1], cmid)
        stages.append((w1, s1, b1))
    w3 = 0.1 * jax.random.normal(keys[-2], (3, 3, cmid, cout), jnp.float32)   # HWIO
    s3, b3 = _bn_fold(keys[-1], cout)
    return {"stages": tuple(stages), "conv_out": (w3, s3, b3)}


# ----------------------------------------------------------------------------
# Pure-JAX reference (same math, no Pallas, no param packing) for correctness.
# ----------------------------------------------------------------------------
def reference_forward(x_nchw, params, *, bin_sizes, align_corners=False):
    N, Cin, H, W = x_nchw.shape
    hi = jax.lax.Precision.HIGHEST
    x = jnp.transpose(x_nchw, (0, 2, 3, 1))                     # NHWC
    out = None
    for (w1, s1, b1), s in zip(params["stages"], bin_sizes):
        Pr = jnp.asarray(_adaptive_pool_matrix(H, s))
        Pc = jnp.asarray(_adaptive_pool_matrix(W, s))
        Ur = jnp.asarray(_bilinear_matrix(H, s, align_corners))
        Uc = jnp.asarray(_bilinear_matrix(W, s, align_corners))
        pooled = jnp.einsum('ph,qw,nhwc->npqc', Pr, Pc, x, precision=hi)
        y = jnp.maximum(jnp.einsum('npqc,cd->npqd', pooled, w1, precision=hi)
                        * s1 + b1, 0.0)
        up = jnp.einsum('hp,wq,npqd->nhwd', Ur, Uc, y, precision=hi)
        out = up if out is None else out + up
    w3, s3, b3 = params["conv_out"]
    conv = jax.lax.conv_general_dilated(
        out, w3, (1, 1), 'SAME',
        dimension_numbers=('NHWC', 'HWIO', 'NHWC'), precision=hi)
    res = jnp.maximum(conv * s3 + b3, 0.0)
    return jnp.transpose(res, (0, 3, 1, 2))                     # back to NCHW


# ----------------------------------------------------------------------------
if __name__ == "__main__":
    N, Cin, H, W = 2, 4, 16, 16
    Cmid, Cout = 8, 8
    bin_sizes = (1, 3)

    key = jax.random.PRNGKey(0)
    kx, kp = jax.random.split(key)
    x = jax.random.normal(kx, (N, Cin, H, W), jnp.float32)
    params = init_params(kp, Cin, Cmid, Cout, bin_sizes)

    fwd = jax.jit(functools.partial(pp_context_forward,
                                    bin_sizes=bin_sizes, align_corners=False))
    y = jax.block_until_ready(fwd(x, params))

    assert y.shape == (N, Cout, H, W)
    assert bool(jnp.all(jnp.isfinite(y)))

    y_ref = reference_forward(x, params, bin_sizes=bin_sizes, align_corners=False)
    max_err = float(jnp.max(jnp.abs(y - y_ref)))
    assert max_err < 1e-4, f"mismatch vs JAX reference (max abs err {max_err:.3e})"

    print("KERNEL_OK")
</pallas_src>

<mosaic_0001>
module attributes {stable_mosaic.version = 11 : i64} {
  func.func @_pp_context_kernel(%arg0: i32, %arg1: memref<8x256xf32, #tpu.memory_space<vmem>>, %arg2: memref<256x10xf32, #tpu.memory_space<vmem>>, %arg3: memref<32x8xf32, #tpu.memory_space<vmem>>, %arg4: memref<32x1xf32, #tpu.memory_space<vmem>>, %arg5: memref<10x290xf32, #tpu.memory_space<vmem>>, %arg6: memref<8x72xf32, #tpu.memory_space<vmem>>, %arg7: memref<8x1xf32, #tpu.memory_space<vmem>>, %arg8: memref<9x256xf32, #tpu.memory_space<vmem>>, %arg9: memref<16x256xf32, #tpu.memory_space<vmem>>) attributes {dimension_semantics = [#tpu.dimension_semantics<parallel>], iteration_bounds = array<i64: 1>, scalar_prefetch = 0 : i64, scratch_operands = 0 : i64, tpu.core_type = #tpu.core_type<tc>, window_params = [{transform_indices = @transform_0, window_bounds = array<i64: 8, 256>}, {pipeline_mode = #tpu.pipeline_mode<synchronous>, transform_indices = @transform_1, window_bounds = array<i64: 256, 10>}, {pipeline_mode = #tpu.pipeline_mode<synchronous>, transform_indices = @transform_2, window_bounds = array<i64: 32, 8>}, {pipeline_mode = #tpu.pipeline_mode<synchronous>, transform_indices = @transform_3, window_bounds = array<i64: 32, 1>}, {pipeline_mode = #tpu.pipeline_mode<synchronous>, transform_indices = @transform_4, window_bounds = array<i64: 10, 290>}, {pipeline_mode = #tpu.pipeline_mode<synchronous>, transform_indices = @transform_5, window_bounds = array<i64: 8, 72>}, {pipeline_mode = #tpu.pipeline_mode<synchronous>, transform_indices = @transform_6, window_bounds = array<i64: 8, 1>}, {pipeline_mode = #tpu.pipeline_mode<synchronous>, transform_indices = @transform_7, window_bounds = array<i64: 9, 256>}, {transform_indices = @transform_8, window_bounds = array<i64: 16, 256>}]} {
    %c0 = arith.constant 0 : index
    %c0_0 = arith.constant 0 : index
    %0 = vector.load %arg1[%c0, %c0_0] : memref<8x256xf32, #tpu.memory_space<vmem>>, vector<8x256xf32>
    %c0_1 = arith.constant 0 : index
    %c0_2 = arith.constant 0 : index
    %1 = vector.load %arg2[%c0_1, %c0_2] : memref<256x10xf32, #tpu.memory_space<vmem>>, vector<256x10xf32>
    %cst = arith.constant dense<0.000000e+00> : vector<8x10xf32>
    %2 = tpu.matmul %0, %1, %cst {dimension_numbers = #tpu.dot_dimension_numbers<[1], [0], [0], [1], [0, 0, 1, 1], [], []>, precision = #tpu.contract_precision<fp32>} : vector<8x256xf32>, vector<256x10xf32>, vector<8x10xf32> -> vector<8x10xf32>
    %c0_3 = arith.constant 0 : index
    %c0_4 = arith.constant 0 : index
    %3 = vector.load %arg3[%c0_3, %c0_4] : memref<32x8xf32, #tpu.memory_space<vmem>>, vector<32x8xf32>
    %c0_5 = arith.constant 0 : index
    %c0_6 = arith.constant 0 : index
    %4 = vector.load %arg4[%c0_5, %c0_6] : memref<32x1xf32, #tpu.memory_space<vmem>>, vector<32x1xf32>
    %c0_7 = arith.constant 0 : index
    %c0_8 = arith.constant 0 : index
    %5 = vector.load %arg5[%c0_7, %c0_8] : memref<10x290xf32, #tpu.memory_space<vmem>>, vector<10x290xf32>
    %6 = vector.extract_strided_slice %3 {offsets = [0, 0], sizes = [16, 8], strides = [1, 1]} : vector<32x8xf32> to vector<16x8xf32>
    %7 = vector.extract_strided_slice %4 {offsets = [0, 0], sizes = [16, 1], strides = [1, 1]} : vector<32x1xf32> to vector<16x1xf32>
    %8 = vector.extract_strided_slice %2 {offsets = [0, 0], sizes = [8, 1], strides = [1, 1]} : vector<8x10xf32> to vector<8x1xf32>
    %cst_9 = arith.constant dense<0.000000e+00> : vector<16x1xf32>
    %9 = tpu.matmul %6, %8, %cst_9 {dimension_numbers = #tpu.dot_dimension_numbers<[1], [0], [0], [1], [0, 0, 1, 1], [], []>, precision = #tpu.contract_precision<fp32>} : vector<16x8xf32>, vector<8x1xf32>, vector<16x1xf32> -> vector<16x1xf32>
    %10 = arith.addf %9, %7 : vector<16x1xf32>
    %cst_10 = arith.constant 0.000000e+00 : f32
    %11 = vector.broadcast %cst_10 : f32 to vector<16x1xf32>
    %12 = arith.maximumf %10, %11 : vector<16x1xf32>
    %13 = vector.extract_strided_slice %5 {offsets = [0, 0], sizes = [1, 290], strides = [1, 1]} : vector<10x290xf32> to vector<1x290xf32>
    %cst_11 = arith.constant dense<0.000000e+00> : vector<16x290xf32>
    %14 = tpu.matmul %12, %13, %cst_11 {dimension_numbers = #tpu.dot_dimension_numbers<[1], [0], [0], [1], [0, 0, 1, 1], [], []>, precision = #tpu.contract_precision<fp32>} : vector<16x1xf32>, vector<1x290xf32>, vector<16x290xf32> -> vector<16x290xf32>
    %15 = vector.extract_strided_slice %3 {offsets = [16, 0], sizes = [16, 8], strides = [1, 1]} : vector<32x8xf32> to vector<16x8xf32>
    %16 = vector.extract_strided_slice %4 {offsets = [16, 0], sizes = [16, 1], strides = [1, 1]} : vector<32x1xf32> to vector<16x1xf32>
    %17 = vector.extract_strided_slice %2 {offsets = [0, 1], sizes = [8, 9], strides = [1, 1]} : vector<8x10xf32> to vector<8x9xf32>
    %cst_12 = arith.constant dense<0.000000e+00> : vector<16x9xf32>
    %18 = tpu.matmul %15, %17, %cst_12 {dimension_numbers = #tpu.dot_dimension_numbers<[1], [0], [0], [1], [0, 0, 1, 1], [], []>, precision = #tpu.contract_precision<fp32>} : vector<16x8xf32>, vector<8x9xf32>, vector<16x9xf32> -> vector<16x9xf32>
    %19 = vector.broadcast %16 : vector<16x1xf32> to vector<16x9xf32>
    %20 = arith.addf %18, %19 : vector<16x9xf32>
    %cst_13 = arith.constant 0.000000e+00 : f32
    %21 = vector.broadcast %cst_13 : f32 to vector<16x9xf32>
    %22 = arith.maximumf %20, %21 : vector<16x9xf32>
    %23 = vector.extract_strided_slice %5 {offsets = [1, 0], sizes = [9, 290], strides = [1, 1]} : vector<10x290xf32> to vector<9x290xf32>
    %cst_14 = arith.constant dense<0.000000e+00> : vector<16x290xf32>
    %24 = tpu.matmul %22, %23, %cst_14 {dimension_numbers = #tpu.dot_dimension_numbers<[1], [0], [0], [1], [0, 0, 1, 1], [], []>, precision = #tpu.contract_precision<fp32>} : vector<16x9xf32>, vector<9x290xf32>, vector<16x290xf32> -> vector<16x290xf32>
    %25 = arith.addf %14, %24 : vector<16x290xf32>
    %c0_15 = arith.constant 0 : index
    %c0_16 = arith.constant 0 : index
    %26 = vector.load %arg8[%c0_15, %c0_16] : memref<9x256xf32, #tpu.memory_space<vmem>>, vector<9x256xf32>
    %c0_17 = arith.constant 0 : index
    %c0_18 = arith.constant 0 : index
    %27 = vector.load %arg6[%c0_17, %c0_18] : memref<8x72xf32, #tpu.memory_space<vmem>>, vector<8x72xf32>
    %c0_19 = arith.constant 0 : index
    %c0_20 = arith.constant 0 : index
    %28 = vector.load %arg7[%c0_19, %c0_20] : memref<8x1xf32, #tpu.memory_space<vmem>>, vector<8x1xf32>
    %29 = vector.extract_strided_slice %25 {offsets = [0, 0], sizes = [8, 290], strides = [1, 1]} : vector<16x290xf32> to vector<8x290xf32>
    %30 = vector.extract_strided_slice %29 {offsets = [0, 0], sizes = [8, 256], strides = [1, 1]} : vector<8x290xf32> to vector<8x256xf32>
    %31 = vector.extract_strided_slice %26 {offsets = [0, 0], sizes = [1, 256], strides = [1, 1]} : vector<9x256xf32> to vector<1x256xf32>
    %32 = vector.broadcast %31 : vector<1x256xf32> to vector<8x256xf32>
    %33 = arith.mulf %30, %32 : vector<8x256xf32>
    %34 = vector.extract_strided_slice %29 {offsets = [0, 1], sizes = [8, 256], strides = [1, 1]} : vector<8x290xf32> to vector<8x256xf32>
    %35 = vector.extract_strided_slice %26 {offsets = [1, 0], sizes = [1, 256], strides = [1, 1]} : vector<9x256xf32> to vector<1x256xf32>
    %36 = vector.broadcast %35 : vector<1x256xf32> to vector<8x256xf32>
    %37 = arith.mulf %34, %36 : vector<8x256xf32>
    %38 = vector.extract_strided_slice %29 {offsets = [0, 2], sizes = [8, 256], strides = [1, 1]} : vector<8x290xf32> to vector<8x256xf32>
    %39 = vector.extract_strided_slice %26 {offsets = [2, 0], sizes = [1, 256], strides = [1, 1]} : vector<9x256xf32> to vector<1x256xf32>
    %40 = vector.broadcast %39 : vector<1x256xf32> to vector<8x256xf32>
    %41 = arith.mulf %38, %40 : vector<8x256xf32>
    %42 = vector.extract_strided_slice %29 {offsets = [0, 16], sizes = [8, 256], strides = [1, 1]} : vector<8x290xf32> to vector<8x256xf32>
    %43 = vector.extract_strided_slice %26 {offsets = [3, 0], sizes = [1, 256], strides = [1, 1]} : vector<9x256xf32> to vector<1x256xf32>
    %44 = vector.broadcast %43 : vector<1x256xf32> to vector<8x256xf32>
    %45 = arith.mulf %42, %44 : vector<8x256xf32>
    %46 = vector.extract_strided_slice %29 {offsets = [0, 17], sizes = [8, 256], strides = [1, 1]} : vector<8x290xf32> to vector<8x256xf32>
    %47 = vector.extract_strided_slice %26 {offsets = [4, 0], sizes = [1, 256], strides = [1, 1]} : vector<9x256xf32> to vector<1x256xf32>
    %48 = vector.broadcast %47 : vector<1x256xf32> to vector<8x256xf32>
    %49 = arith.mulf %46, %48 : vector<8x256xf32>
    %50 = vector.extract_strided_slice %29 {offsets = [0, 18], sizes = [8, 256], strides = [1, 1]} : vector<8x290xf32> to vector<8x256xf32>
    %51 = vector.extract_strided_slice %26 {offsets = [5, 0], sizes = [1, 256], strides = [1, 1]} : vector<9x256xf32> to vector<1x256xf32>
    %52 = vector.broadcast %51 : vector<1x256xf32> to vector<8x256xf32>
    %53 = arith.mulf %50, %52 : vector<8x256xf32>
    %54 = vector.extract_strided_slice %29 {offsets = [0, 32], sizes = [8, 256], strides = [1, 1]} : vector<8x290xf32> to vector<8x256xf32>
    %55 = vector.extract_strided_slice %26 {offsets = [6, 0], sizes = [1, 256], strides = [1, 1]} : vector<9x256xf32> to vector<1x256xf32>
    %56 = vector.broadcast %55 : vector<1x256xf32> to vector<8x256xf32>
    %57 = arith.mulf %54, %56 : vector<8x256xf32>
    %58 = vector.extract_strided_slice %29 {offsets = [0, 33], sizes = [8, 256], strides = [1, 1]} : vector<8x290xf32> to vector<8x256xf32>
    %59 = vector.extract_strided_slice %26 {offsets = [7, 0], sizes = [1, 256], strides = [1, 1]} : vector<9x256xf32> to vector<1x256xf32>
    %60 = vector.broadcast %59 : vector<1x256xf32> to vector<8x256xf32>
    %61 = arith.mulf %58, %60 : vector<8x256xf32>
    %62 = vector.extract_strided_slice %29 {offsets = [0, 34], sizes = [8, 256], strides = [1, 1]} : vector<8x290xf32> to vector<8x256xf32>
    %63 = vector.extract_strided_slice %26 {offsets = [8, 0], sizes = [1, 256], strides = [1, 1]} : vector<9x256xf32> to vector<1x256xf32>
    %64 = vector.broadcast %63 : vector<1x256xf32> to vector<8x256xf32>
    %65 = arith.mulf %62, %64 : vector<8x256xf32>
    %66 = tpu.concatenate %33, %37, %41, %45, %49, %53, %57, %61, %65 in 0 : vector<8x256xf32>, vector<8x256xf32>, vector<8x256xf32>, vector<8x256xf32>, vector<8x256xf32>, vector<8x256xf32>, vector<8x256xf32>, vector<8x256xf32>, vector<8x256xf32> -> vector<72x256xf32>
    %cst_21 = arith.constant dense<0.000000e+00> : vector<8x256xf32>
    %67 = tpu.matmul %27, %66, %cst_21 {dimension_numbers = #tpu.dot_dimension_numbers<[1], [0], [0], [1], [0, 0, 1, 1], [], []>, precision = #tpu.contract_precision<fp32>} : vector<8x72xf32>, vector<72x256xf32>, vector<8x256xf32> -> vector<8x256xf32>
    %68 = vector.broadcast %28 : vector<8x1xf32> to vector<8x256xf32>
    %69 = arith.addf %67, %68 : vector<8x256xf32>
    %cst_22 = arith.constant 0.000000e+00 : f32
    %70 = vector.broadcast %cst_22 : f32 to vector<8x256xf32>
    %71 = arith.maximumf %69, %70 : vector<8x256xf32>
    %c0_23 = arith.constant 0 : index
    %c0_24 = arith.constant 0 : index
    %72 = vector.load %arg9[%c0_23, %c0_24] : memref<16x256xf32, #tpu.memory_space<vmem>>, vector<8x256xf32>
    tpu.vector_store %arg9[%c0_23, %c0_24], %71 {strides = array<i32>} : memref<16x256xf32, #tpu.memory_space<vmem>>, vector<8x256xf32>,
    %73 = vector.extract_strided_slice %25 {offsets = [8, 0], sizes = [8, 290], strides = [1, 1]} : vector<16x290xf32> to vector<8x290xf32>
    %74 = vector.extract_strided_slice %73 {offsets = [0, 0], sizes = [8, 256], strides = [1, 1]} : vector<8x290xf32> to vector<8x256xf32>
    %75 = vector.extract_strided_slice %26 {offsets = [0, 0], sizes = [1, 256], strides = [1, 1]} : vector<9x256xf32> to vector<1x256xf32>
    %76 = vector.broadcast %75 : vector<1x256xf32> to vector<8x256xf32>
    %77 = arith.mulf %74, %76 : vector<8x256xf32>
    %78 = vector.extract_strided_slice %73 {offsets = [0, 1], sizes = [8, 256], strides = [1, 1]} : vector<8x290xf32> to vector<8x256xf32>
    %79 = vector.extract_strided_slice %26 {offsets = [1, 0], sizes = [1, 256], strides = [1, 1]} : vector<9x256xf32> to vector<1x256xf32>
    %80 = vector.broadcast %79 : vector<1x256xf32> to vector<8x256xf32>
    %81 = arith.mulf %78, %80 : vector<8x256xf32>
    %82 = vector.extract_strided_slice %73 {offsets = [0, 2], sizes = [8, 256], strides = [1, 1]} : vector<8x290xf32> to vector<8x256xf32>
    %83 = vector.extract_strided_slice %26 {offsets = [2, 0], sizes = [1, 256], strides = [1, 1]} : vector<9x256xf32> to vector<1x256xf32>
    %84 = vector.broadcast %83 : vector<1x256xf32> to vector<8x256xf32>
    %85 = arith.mulf %82, %84 : vector<8x256xf32>
    %86 = vector.extract_strided_slice %73 {offsets = [0, 16], sizes = [8, 256], strides = [1, 1]} : vector<8x290xf32> to vector<8x256xf32>
    %87 = vector.extract_strided_slice %26 {offsets = [3, 0], sizes = [1, 256], strides = [1, 1]} : vector<9x256xf32> to vector<1x256xf32>
    %88 = vector.broadcast %87 : vector<1x256xf32> to vector<8x256xf32>
    %89 = arith.mulf %86, %88 : vector<8x256xf32>
    %90 = vector.extract_strided_slice %73 {offsets = [0, 17], sizes = [8, 256], strides = [1, 1]} : vector<8x290xf32> to vector<8x256xf32>
    %91 = vector.extract_strided_slice %26 {offsets = [4, 0], sizes = [1, 256], strides = [1, 1]} : vector<9x256xf32> to vector<1x256xf32>
    %92 = vector.broadcast %91 : vector<1x256xf32> to vector<8x256xf32>
    %93 = arith.mulf %90, %92 : vector<8x256xf32>
    %94 = vector.extract_strided_slice %73 {offsets = [0, 18], sizes = [8, 256], strides = [1, 1]} : vector<8x290xf32> to vector<8x256xf32>
    %95 = vector.extract_strided_slice %26 {offsets = [5, 0], sizes = [1, 256], strides = [1, 1]} : vector<9x256xf32> to vector<1x256xf32>
    %96 = vector.broadcast %95 : vector<1x256xf32> to vector<8x256xf32>
    %97 = arith.mulf %94, %96 : vector<8x256xf32>
    %98 = vector.extract_strided_slice %73 {offsets = [0, 32], sizes = [8, 256], strides = [1, 1]} : vector<8x290xf32> to vector<8x256xf32>
    %99 = vector.extract_strided_slice %26 {offsets = [6, 0], sizes = [1, 256], strides = [1, 1]} : vector<9x256xf32> to vector<1x256xf32>
    %100 = vector.broadcast %99 : vector<1x256xf32> to vector<8x256xf32>
    %101 = arith.mulf %98, %100 : vector<8x256xf32>
    %102 = vector.extract_strided_slice %73 {offsets = [0, 33], sizes = [8, 256], strides = [1, 1]} : vector<8x290xf32> to vector<8x256xf32>
    %103 = vector.extract_strided_slice %26 {offsets = [7, 0], sizes = [1, 256], strides = [1, 1]} : vector<9x256xf32> to vector<1x256xf32>
    %104 = vector.broadcast %103 : vector<1x256xf32> to vector<8x256xf32>
    %105 = arith.mulf %102, %104 : vector<8x256xf32>
    %106 = vector.extract_strided_slice %73 {offsets = [0, 34], sizes = [8, 256], strides = [1, 1]} : vector<8x290xf32> to vector<8x256xf32>
    %107 = vector.extract_strided_slice %26 {offsets = [8, 0], sizes = [1, 256], strides = [1, 1]} : vector<9x256xf32> to vector<1x256xf32>
    %108 = vector.broadcast %107 : vector<1x256xf32> to vector<8x256xf32>
    %109 = arith.mulf %106, %108 : vector<8x256xf32>
    %110 = tpu.concatenate %77, %81, %85, %89, %93, %97, %101, %105, %109 in 0 : vector<8x256xf32>, vector<8x256xf32>, vector<8x256xf32>, vector<8x256xf32>, vector<8x256xf32>, vector<8x256xf32>, vector<8x256xf32>, vector<8x256xf32>, vector<8x256xf32> -> vector<72x256xf32>
    %cst_25 = arith.constant dense<0.000000e+00> : vector<8x256xf32>
    %111 = tpu.matmul %27, %110, %cst_25 {dimension_numbers = #tpu.dot_dimension_numbers<[1], [0], [0], [1], [0, 0, 1, 1], [], []>, precision = #tpu.contract_precision<fp32>} : vector<8x72xf32>, vector<72x256xf32>, vector<8x256xf32> -> vector<8x256xf32>
    %112 = vector.broadcast %28 : vector<8x1xf32> to vector<8x256xf32>
    %113 = arith.addf %111, %112 : vector<8x256xf32>
    %cst_26 = arith.constant 0.000000e+00 : f32
    %114 = vector.broadcast %cst_26 : f32 to vector<8x256xf32>
    %115 = arith.maximumf %113, %114 : vector<8x256xf32>
    %c8 = arith.constant 8 : index
    %c0_27 = arith.constant 0 : index
    %116 = vector.load %arg9[%c8, %c0_27] : memref<16x256xf32, #tpu.memory_space<vmem>>, vector<8x256xf32>
    tpu.vector_store %arg9[%c8, %c0_27], %115 {strides = array<i32>} : memref<16x256xf32, #tpu.memory_space<vmem>>, vector<8x256xf32>,
    return
  }
  func.func @transform_0(%arg0: i32) -> (i32, i32) {
    %c0_i32 = arith.constant 0 : i32
    %c0_i32_0 = arith.constant 0 : i32
    return %arg0, %c0_i32 : i32, i32
  }
  func.func @transform_1(%arg0: i32) -> (i32, i32) {
    %c0_i32 = arith.constant 0 : i32
    %c0_i32_0 = arith.constant 0 : i32
    %c0_i32_1 = arith.constant 0 : i32
    return %c0_i32, %c0_i32_0 : i32, i32
  }
  func.func @transform_2(%arg0: i32) -> (i32, i32) {
    %c0_i32 = arith.constant 0 : i32
    %c0_i32_0 = arith.constant 0 : i32
    %c0_i32_1 = arith.constant 0 : i32
    return %c0_i32, %c0_i32_0 : i32, i32
  }
  func.func @transform_3(%arg0: i32) -> (i32, i32) {
    %c0_i32 = arith.constant 0 : i32
    %c0_i32_0 = arith.constant 0 : i32
    %c0_i32_1 = arith.constant 0 : i32
    return %c0_i32, %c0_i32_0 : i32, i32
  }
  func.func @transform_4(%arg0: i32) -> (i32, i32) {
    %c0_i32 = arith.constant 0 : i32
    %c0_i32_0 = arith.constant 0 : i32
    %c0_i32_1 = arith.constant 0 : i32
    return %c0_i32, %c0_i32_0 : i32, i32
  }
  func.func @transform_5(%arg0: i32) -> (i32, i32) {
    %c0_i32 = arith.constant 0 : i32
    %c0_i32_0 = arith.constant 0 : i32
    %c0_i32_1 = arith.constant 0 : i32
    return %c0_i32, %c0_i32_0 : i32, i32
  }
  func.func @transform_6(%arg0: i32) -> (i32, i32) {
    %c0_i32 = arith.constant 0 : i32
    %c0_i32_0 = arith.constant 0 : i32
    %c0_i32_1 = arith.constant 0 : i32
    return %c0_i32, %c0_i32_0 : i32, i32
  }
  func.func @transform_7(%arg0: i32) -> (i32, i32) {
    %c0_i32 = arith.constant 0 : i32
    %c0_i32_0 = arith.constant 0 : i32
    %c0_i32_1 = arith.constant 0 : i32
    return %c0_i32, %c0_i32_0 : i32, i32
  }
  func.func @transform_8(%arg0: i32) -> (i32, i32) {
    %c0_i32 = arith.constant 0 : i32
    %c0_i32_0 = arith.constant 0 : i32
    return %arg0, %c0_i32 : i32, i32
  }
}

</mosaic_0001>

<llo_original>
// kernel: pp_context_forward.1
$region0: #{pp_context_forward.1}
  #allocation0 [shape = 'u32[]', space=smem, size = 0x4, offset = 0x4, fixed_abs, tag = 'smem constant byte address 0x4 - core index']
  #allocation1 [shape = 'u32[144,128]{1,0:T(1,128)}', space=vmem, size = 0x12000, scoped, tag = 'internal scratch']
  %s0 = inlined_call_operand.vmem [shape: f32[8,256], index: 0, kind: input, shape index: {}]
  %s1 = inlined_call_operand.vmem [shape: f32[256,10], index: 1, kind: input, shape index: {}]
  %s2 = inlined_call_operand.vmem [shape: f32[32,8], index: 2, kind: input, shape index: {}]
  %s3 = inlined_call_operand.vmem [shape: f32[32,1], index: 3, kind: input, shape index: {}]
  %s4 = inlined_call_operand.vmem [shape: f32[10,290], index: 4, kind: input, shape index: {}]
  %s5 = inlined_call_operand.vmem [shape: f32[8,72], index: 5, kind: input, shape index: {}]
  %s6 = inlined_call_operand.vmem [shape: f32[8,1], index: 6, kind: input, shape index: {}]
  %s7 = inlined_call_operand.vmem [shape: f32[9,256], index: 7, kind: input, shape index: {}]
  %s8 = inlined_call_operand.vmem [shape: f32[16,256], index: 8, kind: output, shape index: {}]
  %s9 = sld [smem:[#allocation0]]
  $region42: #{pp_context_forward.1} parent=0
    _
  %s11 = ssub.s32 1, %s9
  %s12 = scalar_select 0, %s11, %s9
  // Predicated region
  $region2: #{pp_context_forward.1} parent=0 // pred_check
    _
  $region3: #{pp_context_forward.1} parent=0 // pred_check_branch
    %14 = sbr.rel (0) target = $region5
  $region4: #{pp_context_forward.1} parent=0 // pred_region
    _
  $region5: #{pp_context_forward.1} parent=0 // pred_fallthru
    _
  // Predicated region
  $region6: #{pp_context_forward.1} parent=0 // pred_check
    _
  $region7: #{pp_context_forward.1} parent=0 // pred_check_branch
    %16 = sbr.rel (0) target = $region9
  $region8: #{pp_context_forward.1} parent=0 // pred_region
    _
  $region9: #{pp_context_forward.1} parent=0 // pred_fallthru
    _
  // Predicated region
  $region10: #{pp_context_forward.1} parent=0 // pred_check
    _
  $region11: #{pp_context_forward.1} parent=0 // pred_check_branch
    %18 = sbr.rel (0) target = $region13
  $region12: #{pp_context_forward.1} parent=0 // pred_region
    _
  $region13: #{pp_context_forward.1} parent=0 // pred_fallthru
    _
  // Predicated region
  $region14: #{pp_context_forward.1} parent=0 // pred_check
    _
  $region15: #{pp_context_forward.1} parent=0 // pred_check_branch
    %20 = sbr.rel (0) target = $region17
  $region16: #{pp_context_forward.1} parent=0 // pred_region
    _
  $region17: #{pp_context_forward.1} parent=0 // pred_fallthru
    _
  // Predicated region
  $region18: #{pp_context_forward.1} parent=0 // pred_check
    _
  $region19: #{pp_context_forward.1} parent=0 // pred_check_branch
    %22 = sbr.rel (0) target = $region21
  $region20: #{pp_context_forward.1} parent=0 // pred_region
    _
  $region21: #{pp_context_forward.1} parent=0 // pred_fallthru
    _
  // Predicated region
  $region22: #{pp_context_forward.1} parent=0 // pred_check
    _
  $region23: #{pp_context_forward.1} parent=0 // pred_check_branch
    %24 = sbr.rel (0) target = $region25
  $region24: #{pp_context_forward.1} parent=0 // pred_region
    _
  $region25: #{pp_context_forward.1} parent=0 // pred_fallthru
    _
  // Predicated region
  $region26: #{pp_context_forward.1} parent=0 // pred_check
    _
  $region27: #{pp_context_forward.1} parent=0 // pred_check_branch
    %26 = sbr.rel (0) target = $region29
  $region28: #{pp_context_forward.1} parent=0 // pred_region
    _
  $region29: #{pp_context_forward.1} parent=0 // pred_fallthru
    _
  // Predicated region
  $region30: #{pp_context_forward.1} parent=0 // pred_check
    _
  $region31: #{pp_context_forward.1} parent=0 // pred_check_branch
    %28 = sbr.rel (0) target = $region33
  $region32: #{pp_context_forward.1} parent=0 // pred_region
    _
  $region33: #{pp_context_forward.1} parent=0 // pred_fallthru
    _
  %v29 = vld [vmem:[%s0] sm:$0xff]
  %v30 = vld [vmem:[%s0 + $0x8] sm:$0xff]
  %v31 = vld [vmem:[%s1] sm:$0xff]
  %v32 = vld [vmem:[%s1 + $0x8] sm:$0xff]
  %v33 = vld [vmem:[%s1 + $0x10] sm:$0xff]
  %v34 = vld [vmem:[%s1 + $0x18] sm:$0xff]
  %v35 = vld [vmem:[%s1 + $0x20] sm:$0xff]
  %v36 = vld [vmem:[%s1 + $0x28] sm:$0xff]
  %v37 = vld [vmem:[%s1 + $0x30] sm:$0xff]
  %v38 = vld [vmem:[%s1 + $0x38] sm:$0xff]
  %v39 = vld [vmem:[%s1 + $0x40] sm:$0xff]
  %v40 = vld [vmem:[%s1 + $0x48] sm:$0xff]
  %v41 = vld [vmem:[%s1 + $0x50] sm:$0xff]
  %v42 = vld [vmem:[%s1 + $0x58] sm:$0xff]
  %v43 = vld [vmem:[%s1 + $0x60] sm:$0xff]
  %v44 = vld [vmem:[%s1 + $0x68] sm:$0xff]
  %v45 = vld [vmem:[%s1 + $0x70] sm:$0xff]
  %v46 = vld [vmem:[%s1 + $0x78] sm:$0xff]
  %v47 = vld [vmem:[%s1 + $0x80] sm:$0xff]
  %v48 = vld [vmem:[%s1 + $0x88] sm:$0xff]
  %v49 = vld [vmem:[%s1 + $0x90] sm:$0xff]
  %v50 = vld [vmem:[%s1 + $0x98] sm:$0xff]
  %v51 = vld [vmem:[%s1 + $0xa0] sm:$0xff]
  %v52 = vld [vmem:[%s1 + $0xa8] sm:$0xff]
  %v53 = vld [vmem:[%s1 + $0xb0] sm:$0xff]
  %v54 = vld [vmem:[%s1 + $0xb8] sm:$0xff]
  %v55 = vld [vmem:[%s1 + $0xc0] sm:$0xff]
  %v56 = vld [vmem:[%s1 + $0xc8] sm:$0xff]
  %v57 = vld [vmem:[%s1 + $0xd0] sm:$0xff]
  %v58 = vld [vmem:[%s1 + $0xd8] sm:$0xff]
  %v59 = vld [vmem:[%s1 + $0xe0] sm:$0xff]
  %v60 = vld [vmem:[%s1 + $0xe8] sm:$0xff]
  %v61 = vld [vmem:[%s1 + $0xf0] sm:$0xff]
  %v62 = vld [vmem:[%s1 + $0xf8] sm:$0xff]
  %63 = vmatprep.subr.mxu0 0.0
  %v64 = vand.u32 %v46, 4294901760
  %65 = vmatpush1.msra.mxu0 %v64
  %66 = vmatprep.subr.mxu0 0.0
  %v67 = vand.u32 %v45, 4294901760
  %68 = vmatpush1.msra.mxu0 %v67
  %69 = vmatprep.subr.mxu0 0.0
  %v70 = vand.u32 %v44, 4294901760
  %71 = vmatpush1.msra.mxu0 %v70
  %72 = vmatprep.subr.mxu0 0.0
  %v73 = vand.u32 %v43, 4294901760
  %74 = vmatpush1.msra.mxu0 %v73
  %75 = vmatprep.subr.mxu0 0.0
  %v76 = vand.u32 %v42, 4294901760
  %77 = vmatpush1.msra.mxu0 %v76
  %78 = vmatprep.subr.mxu0 0.0
  %v79 = vand.u32 %v41, 4294901760
  %80 = vmatpush1.msra.mxu0 %v79
  %81 = vmatprep.subr.mxu0 0.0
  %v82 = vand.u32 %v40, 4294901760
  %83 = vmatpush1.msra.mxu0 %v82
  %84 = vmatprep.subr.mxu0 0.0
  %v85 = vand.u32 %v39, 4294901760
  %86 = vmatpush1.msra.mxu0 %v85
  %87 = vmatprep.subr.mxu0 0.0
  %v88 = vand.u32 %v38, 4294901760
  %89 = vmatpush1.msra.mxu0 %v88
  %90 = vmatprep.subr.mxu0 0.0
  %v91 = vand.u32 %v37, 4294901760
  %92 = vmatpush1.msra.mxu0 %v91
  %93 = vmatprep.subr.mxu0 0.0
  %v94 = vand.u32 %v36, 4294901760
  %95 = vmatpush1.msra.mxu0 %v94
  %96 = vmatprep.subr.mxu0 0.0
  %v97 = vand.u32 %v35, 4294901760
  %98 = vmatpush1.msra.mxu0 %v97
  %99 = vmatprep.subr.mxu0 0.0
  %v100 = vand.u32 %v34, 4294901760
  %101 = vmatpush1.msra.mxu0 %v100
  %102 = vmatprep.subr.mxu0 0.0
  %v103 = vand.u32 %v33, 4294901760
  %104 = vmatpush1.msra.mxu0 %v103
  %105 = vmatprep.subr.mxu0 0.0
  %v106 = vand.u32 %v32, 4294901760
  %107 = vmatpush1.msra.mxu0 %v106
  %108 = vmatprep.subr.mxu0 0.0
  %v109 = vand.u32 %v31, 4294901760
  %110 = vmatpush1.msra.mxu0 %v109
  %111 = vmatprep.subr.mxu0 0.0
  %v112 = vand.u32 %v62, 4294901760
  %113 = vmatpush2.msra.mxu0 %v112
  %114 = vmatprep.subr.mxu0 0.0
  %v115 = vand.u32 %v61, 4294901760
  %116 = vmatpush2.msra.mxu0 %v115
  %117 = vmatprep.subr.mxu0 0.0
  %v118 = vand.u32 %v60, 4294901760
  %119 = vmatpush2.msra.mxu0 %v118
  %120 = vmatprep.subr.mxu0 0.0
  %v121 = vand.u32 %v59, 4294901760
  %122 = vmatpush2.msra.mxu0 %v121
  %123 = vmatprep.subr.mxu0 0.0
  %v124 = vand.u32 %v58, 4294901760
  %125 = vmatpush2.msra.mxu0 %v124
  %126 = vmatprep.subr.mxu0 0.0
  %v127 = vand.u32 %v57, 4294901760
  %128 = vmatpush2.msra.mxu0 %v127
  %129 = vmatprep.subr.mxu0 0.0
  %v130 = vand.u32 %v56, 4294901760
  %131 = vmatpush2.msra.mxu0 %v130
  %132 = vmatprep.subr.mxu0 0.0
  %v133 = vand.u32 %v55, 4294901760
  %134 = vmatpush2.msra.mxu0 %v133
  %135 = vmatprep.subr.mxu0 0.0
  %v136 = vand.u32 %v54, 4294901760
  %137 = vmatpush2.msra.mxu0 %v136
  %138 = vmatprep.subr.mxu0 0.0
  %v139 = vand.u32 %v53, 4294901760
  %140 = vmatpush2.msra.mxu0 %v139
  %141 = vmatprep.subr.mxu0 0.0
  %v142 = vand.u32 %v52, 4294901760
  %143 = vmatpush2.msra.mxu0 %v142
  %144 = vmatprep.subr.mxu0 0.0
  %v145 = vand.u32 %v51, 4294901760
  %146 = vmatpush2.msra.mxu0 %v145
  %147 = vmatprep.subr.mxu0 0.0
  %v148 = vand.u32 %v50, 4294901760
  %149 = vmatpush2.msra.mxu0 %v148
  %150 = vmatprep.subr.mxu0 0.0
  %v151 = vand.u32 %v49, 4294901760
  %152 = vmatpush2.msra.mxu0 %v151
  %153 = vmatprep.subr.mxu0 0.0
  %v154 = vand.u32 %v48, 4294901760
  %155 = vmatpush2.msra.mxu0 %v154
  %156 = vmatprep.subr.mxu0 0.0
  %v157 = vand.u32 %v47, 4294901760
  %158 = vmatpush2.msra.mxu0 %v157
  %v159 = vand.u32 %v30, 4294901760
  %v160 = vsub.f32 %v30, %v159
  %v161 = vand.u32 %v160, 4294901760
  %v162 = vsub.f32 %v160, %v161
  %v163 = vand.u32 %v162, 4294901760
  %164 = vmatprep.mubr.f32.mxu0 %v163
  %v165 = vand.u32 %v29, 4294901760
  %v166 = vsub.f32 %v29, %v165
  %v167 = vand.u32 %v166, 4294901760
  %v168 = vsub.f32 %v166, %v167
  %v169 = vand.u32 %v168, 4294901760
  %170 = vmatmul.mubr.f32.gmra.mxu0 %v169
  %v171 = vpop.f32.mrf.mxu0
  %v172 = vadd.f32 0.0, %v171
  %v173 = vpop.f32.mrf.mxu0
  %174 = vdwg.mxu0
  %175 = vmatprep.subr.mxu0 0.0
  %v176 = vand.u32 %v46, 4294901760
  %v177 = vsub.f32 %v46, %v176
  %v178 = vand.u32 %v177, 4294901760
  %v179 = vsub.f32 %v177, %v178
  %v180 = vand.u32 %v179, 4294901760
  %181 = vmatpush1.msra.mxu0 %v180
  %182 = vmatprep.subr.mxu0 0.0
  %v183 = vand.u32 %v45, 4294901760
  %v184 = vsub.f32 %v45, %v183
  %v185 = vand.u32 %v184, 4294901760
  %v186 = vsub.f32 %v184, %v185
  %v187 = vand.u32 %v186, 4294901760
  %188 = vmatpush1.msra.mxu0 %v187
  %189 = vmatprep.subr.mxu0 0.0
  %v190 = vand.u32 %v44, 4294901760
  %v191 = vsub.f32 %v44, %v190
  %v192 = vand.u32 %v191, 4294901760
  %v193 = vsub.f32 %v191, %v192
  %v194 = vand.u32 %v193, 4294901760
  %195 = vmatpush1.msra.mxu0 %v194
  %196 = vmatprep.subr.mxu0 0.0
  %v197 = vand.u32 %v43, 4294901760
  %v198 = vsub.f32 %v43, %v197
  %v199 = vand.u32 %v198, 4294901760
  %v200 = vsub.f32 %v198, %v199
  %v201 = vand.u32 %v200, 4294901760
  %202 = vmatpush1.msra.mxu0 %v201
  %203 = vmatprep.subr.mxu0 0.0
  %v204 = vand.u32 %v42, 4294901760
  %v205 = vsub.f32 %v42, %v204
  %v206 = vand.u32 %v205, 4294901760
  %v207 = vsub.f32 %v205, %v206
  %v208 = vand.u32 %v207, 4294901760
  %209 = vmatpush1.msra.mxu0 %v208
  %210 = vmatprep.subr.mxu0 0.0
  %v211 = vand.u32 %v41, 4294901760
  %v212 = vsub.f32 %v41, %v211
  %v213 = vand.u32 %v212, 4294901760
  %v214 = vsub.f32 %v212, %v213
  %v215 = vand.u32 %v214, 4294901760
  %216 = vmatpush1.msra.mxu0 %v215
  %217 = vmatprep.subr.mxu0 0.0
  %v218 = vand.u32 %v40, 4294901760
  %v219 = vsub.f32 %v40, %v218
  %v220 = vand.u32 %v219, 4294901760
  %v221 = vsub.f32 %v219, %v220
  %v222 = vand.u32 %v221, 4294901760
  %223 = vmatpush1.msra.mxu0 %v222
  %224 = vmatprep.subr.mxu0 0.0
  %v225 = vand.u32 %v39, 4294901760
  %v226 = vsub.f32 %v39, %v225
  %v227 = vand.u32 %v226, 4294901760
  %v228 = vsub.f32 %v226, %v227
  %v229 = vand.u32 %v228, 4294901760
  %230 = vmatpush1.msra.mxu0 %v229
  %231 = vmatprep.subr.mxu0 0.0
  %v232 = vand.u32 %v38, 4294901760
  %v233 = vsub.f32 %v38, %v232
  %v234 = vand.u32 %v233, 4294901760
  %v235 = vsub.f32 %v233, %v234
  %v236 = vand.u32 %v235, 4294901760
  %237 = vmatpush1.msra.mxu0 %v236
  %238 = vmatprep.subr.mxu0 0.0
  %v239 = vand.u32 %v37, 4294901760
  %v240 = vsub.f32 %v37, %v239
  %v241 = vand.u32 %v240, 4294901760
  %v242 = vsub.f32 %v240, %v241
  %v243 = vand.u32 %v242, 4294901760
  %244 = vmatpush1.msra.mxu0 %v243
  %245 = vmatprep.subr.mxu0 0.0
  %v246 = vand.u32 %v36, 4294901760
  %v247 = vsub.f32 %v36, %v246
  %v248 = vand.u32 %v247, 4294901760
  %v249 = vsub.f32 %v247, %v248
  %v250 = vand.u32 %v249, 4294901760
  %251 = vmatpush1.msra.mxu0 %v250
  %252 = vmatprep.subr.mxu0 0.0
  %v253 = vand.u32 %v35, 4294901760
  %v254 = vsub.f32 %v35, %v253
  %v255 = vand.u32 %v254, 4294901760
  %v256 = vsub.f32 %v254, %v255
  %v257 = vand.u32 %v256, 4294901760
  %258 = vmatpush1.msra.mxu0 %v257
  %259 = vmatprep.subr.mxu0 0.0
  %v260 = vand.u32 %v34, 4294901760
  %v261 = vsub.f32 %v34, %v260
  %v262 = vand.u32 %v261, 4294901760
  %v263 = vsub.f32 %v261, %v262
  %v264 = vand.u32 %v263, 4294901760
  %265 = vmatpush1.msra.mxu0 %v264
  %266 = vmatprep.subr.mxu0 0.0
  %v267 = vand.u32 %v33, 4294901760
  %v268 = vsub.f32 %v33, %v267
  %v269 = vand.u32 %v268, 4294901760
  %v270 = vsub.f32 %v268, %v269
  %v271 = vand.u32 %v270, 4294901760
  %272 = vmatpush1.msra.mxu0 %v271
  %273 = vmatprep.subr.mxu0 0.0
  %v274 = vand.u32 %v32, 4294901760
  %v275 = vsub.f32 %v32, %v274
  %v276 = vand.u32 %v275, 4294901760
  %v277 = vsub.f32 %v275, %v276
  %v278 = vand.u32 %v277, 4294901760
  %279 = vmatpush1.msra.mxu0 %v278
  %280 = vmatprep.subr.mxu0 0.0
  %v281 = vand.u32 %v31, 4294901760
  %v282 = vsub.f32 %v31, %v281
  %v283 = vand.u32 %v282, 4294901760
  %v284 = vsub.f32 %v282, %v283
  %v285 = vand.u32 %v284, 4294901760
  %286 = vmatpush1.msra.mxu0 %v285
  %287 = vmatprep.subr.mxu0 0.0
  %v288 = vand.u32 %v62, 4294901760
  %v289 = vsub.f32 %v62, %v288
  %v290 = vand.u32 %v289, 4294901760
  %v291 = vsub.f32 %v289, %v290
  %v292 = vand.u32 %v291, 4294901760
  %293 = vmatpush2.msra.mxu0 %v292
  %294 = vmatprep.subr.mxu0 0.0
  %v295 = vand.u32 %v61, 4294901760
  %v296 = vsub.f32 %v61, %v295
  %v297 = vand.u32 %v296, 4294901760
  %v298 = vsub.f32 %v296, %v297
  %v299 = vand.u32 %v298, 4294901760
  %300 = vmatpush2.msra.mxu0 %v299
  %301 = vmatprep.subr.mxu0 0.0
  %v302 = vand.u32 %v60, 4294901760
  %v303 = vsub.f32 %v60, %v302
  %v304 = vand.u32 %v303, 4294901760
  %v305 = vsub.f32 %v303, %v304
  %v306 = vand.u32 %v305, 4294901760
  %307 = vmatpush2.msra.mxu0 %v306
  %308 = vmatprep.subr.mxu0 0.0
  %v309 = vand.u32 %v59, 4294901760
  %v310 = vsub.f32 %v59, %v309
  %v311 = vand.u32 %v310, 4294901760
  %v312 = vsub.f32 %v310, %v311
  %v313 = vand.u32 %v312, 4294901760
  %314 = vmatpush2.msra.mxu0 %v313
  %315 = vmatprep.subr.mxu0 0.0
  %v316 = vand.u32 %v58, 4294901760
  %v317 = vsub.f32 %v58, %v316
  %v318 = vand.u32 %v317, 4294901760
  %v319 = vsub.f32 %v317, %v318
  %v320 = vand.u32 %v319, 4294901760
  %321 = vmatpush2.msra.mxu0 %v320
  %322 = vmatprep.subr.mxu0 0.0
  %v323 = vand.u32 %v57, 4294901760
  %v324 = vsub.f32 %v57, %v323
  %v325 = vand.u32 %v324, 4294901760
  %v326 = vsub.f32 %v324, %v325
  %v327 = vand.u32 %v326, 4294901760
  %328 = vmatpush2.msra.mxu0 %v327
  %329 = vmatprep.subr.mxu0 0.0
  %v330 = vand.u32 %v56, 4294901760
  %v331 = vsub.f32 %v56, %v330
  %v332 = vand.u32 %v331, 4294901760
  %v333 = vsub.f32 %v331, %v332
  %v334 = vand.u32 %v333, 4294901760
  %335 = vmatpush2.msra.mxu0 %v334
  %336 = vmatprep.subr.mxu0 0.0
  %v337 = vand.u32 %v55, 4294901760
  %v338 = vsub.f32 %v55, %v337
  %v339 = vand.u32 %v338, 4294901760
  %v340 = vsub.f32 %v338, %v339
  %v341 = vand.u32 %v340, 4294901760
  %342 = vmatpush2.msra.mxu0 %v341
  %343 = vmatprep.subr.mxu0 0.0
  %v344 = vand.u32 %v54, 4294901760
  %v345 = vsub.f32 %v54, %v344
  %v346 = vand.u32 %v345, 4294901760
  %v347 = vsub.f32 %v345, %v346
  %v348 = vand.u32 %v347, 4294901760
  %349 = vmatpush2.msra.mxu0 %v348
  %350 = vmatprep.subr.mxu0 0.0
  %v351 = vand.u32 %v53, 4294901760
  %v352 = vsub.f32 %v53, %v351
  %v353 = vand.u32 %v352, 4294901760
  %v354 = vsub.f32 %v352, %v353
  %v355 = vand.u32 %v354, 4294901760
  %356 = vmatpush2.msra.mxu0 %v355
  %357 = vmatprep.subr.mxu0 0.0
  %v358 = vand.u32 %v52, 4294901760
  %v359 = vsub.f32 %v52, %v358
  %v360 = vand.u32 %v359, 4294901760
  %v361 = vsub.f32 %v359, %v360
  %v362 = vand.u32 %v361, 4294901760
  %363 = vmatpush2.msra.mxu0 %v362
  %364 = vmatprep.subr.mxu0 0.0
  %v365 = vand.u32 %v51, 4294901760
  %v366 = vsub.f32 %v51, %v365
  %v367 = vand.u32 %v366, 4294901760
  %v368 = vsub.f32 %v366, %v367
  %v369 = vand.u32 %v368, 4294901760
  %370 = vmatpush2.msra.mxu0 %v369
  %371 = vmatprep.subr.mxu0 0.0
  %v372 = vand.u32 %v50, 4294901760
  %v373 = vsub.f32 %v50, %v372
  %v374 = vand.u32 %v373, 4294901760
  %v375 = vsub.f32 %v373, %v374
  %v376 = vand.u32 %v375, 4294901760
  %377 = vmatpush2.msra.mxu0 %v376
  %378 = vmatprep.subr.mxu0 0.0
  %v379 = vand.u32 %v49, 4294901760
  %v380 = vsub.f32 %v49, %v379
  %v381 = vand.u32 %v380, 4294901760
  %v382 = vsub.f32 %v380, %v381
  %v383 = vand.u32 %v382, 4294901760
  %384 = vmatpush2.msra.mxu0 %v383
  %385 = vmatprep.subr.mxu0 0.0
  %v386 = vand.u32 %v48, 4294901760
  %v387 = vsub.f32 %v48, %v386
  %v388 = vand.u32 %v387, 4294901760
  %v389 = vsub.f32 %v387, %v388
  %v390 = vand.u32 %v389, 4294901760
  %391 = vmatpush2.msra.mxu0 %v390
  %392 = vmatprep.subr.mxu0 0.0
  %v393 = vand.u32 %v47, 4294901760
  %v394 = vsub.f32 %v47, %v393
  %v395 = vand.u32 %v394, 4294901760
  %v396 = vsub.f32 %v394, %v395
  %v397 = vand.u32 %v396, 4294901760
  %398 = vmatpush2.msra.mxu0 %v397
  %v399 = vand.u32 %v30, 4294901760
  %400 = vmatprep.mubr.f32.mxu0 %v399
  %v401 = vand.u32 %v29, 4294901760
  %402 = vmatmul.mubr.f32.gmra.mxu0 %v401
  %v403 = vpop.f32.mrf.mxu0
  %v404 = vadd.f32 %v172, %v403
  %v405 = vpop.f32.mrf.mxu0
  %406 = vdwg.mxu0
  %407 = vmatprep.subr.mxu0 0.0
  %v408 = vand.u32 %v46, 4294901760
  %v409 = vsub.f32 %v46, %v408
  %410 = vmatpush1.msra.mxu0 %v409
  %411 = vmatprep.subr.mxu0 0.0
  %v412 = vand.u32 %v45, 4294901760
  %v413 = vsub.f32 %v45, %v412
  %414 = vmatpush1.msra.mxu0 %v413
  %415 = vmatprep.subr.mxu0 0.0
  %v416 = vand.u32 %v44, 4294901760
  %v417 = vsub.f32 %v44, %v416
  %418 = vmatpush1.msra.mxu0 %v417
  %419 = vmatprep.subr.mxu0 0.0
  %v420 = vand.u32 %v43, 4294901760
  %v421 = vsub.f32 %v43, %v420
  %422 = vmatpush1.msra.mxu0 %v421
  %423 = vmatprep.subr.mxu0 0.0
  %v424 = vand.u32 %v42, 4294901760
  %v425 = vsub.f32 %v42, %v424
  %426 = vmatpush1.msra.mxu0 %v425
  %427 = vmatprep.subr.mxu0 0.0
  %v428 = vand.u32 %v41, 4294901760
  %v429 = vsub.f32 %v41, %v428
  %430 = vmatpush1.msra.mxu0 %v429
  %431 = vmatprep.subr.mxu0 0.0
  %v432 = vand.u32 %v40, 4294901760
  %v433 = vsub.f32 %v40, %v432
  %434 = vmatpush1.msra.mxu0 %v433
  %435 = vmatprep.subr.mxu0 0.0
  %v436 = vand.u32 %v39, 4294901760
  %v437 = vsub.f32 %v39, %v436
  %438 = vmatpush1.msra.mxu0 %v437
  %439 = vmatprep.subr.mxu0 0.0
  %v440 = vand.u32 %v38, 4294901760
  %v441 = vsub.f32 %v38, %v440
  %442 = vmatpush1.msra.mxu0 %v441
  %443 = vmatprep.subr.mxu0 0.0
  %v444 = vand.u32 %v37, 4294901760
  %v445 = vsub.f32 %v37, %v444
  %446 = vmatpush1.msra.mxu0 %v445
  %447 = vmatprep.subr.mxu0 0.0
  %v448 = vand.u32 %v36, 4294901760
  %v449 = vsub.f32 %v36, %v448
  %450 = vmatpush1.msra.mxu0 %v449
  %451 = vmatprep.subr.mxu0 0.0
  %v452 = vand.u32 %v35, 4294901760
  %v453 = vsub.f32 %v35, %v452
  %454 = vmatpush1.msra.mxu0 %v453
  %455 = vmatprep.subr.mxu0 0.0
  %v456 = vand.u32 %v34, 4294901760
  %v457 = vsub.f32 %v34, %v456
  %458 = vmatpush1.msra.mxu0 %v457
  %459 = vmatprep.subr.mxu0 0.0
  %v460 = vand.u32 %v33, 4294901760
  %v461 = vsub.f32 %v33, %v460
  %462 = vmatpush1.msra.mxu0 %v461
  %463 = vmatprep.subr.mxu0 0.0
  %v464 = vand.u32 %v32, 4294901760
  %v465 = vsub.f32 %v32, %v464
  %466 = vmatpush1.msra.mxu0 %v465
  %467 = vmatprep.subr.mxu0 0.0
  %v468 = vand.u32 %v31, 4294901760
  %v469 = vsub.f32 %v31, %v468
  %470 = vmatpush1.msra.mxu0 %v469
  %471 = vmatprep.subr.mxu0 0.0
  %v472 = vand.u32 %v62, 4294901760
  %v473 = vsub.f32 %v62, %v472
  %474 = vmatpush2.msra.mxu0 %v473
  %475 = vmatprep.subr.mxu0 0.0
  %v476 = vand.u32 %v61, 4294901760
  %v477 = vsub.f32 %v61, %v476
  %478 = vmatpush2.msra.mxu0 %v477
  %479 = vmatprep.subr.mxu0 0.0
  %v480 = vand.u32 %v60, 4294901760
  %v481 = vsub.f32 %v60, %v480
  %482 = vmatpush2.msra.mxu0 %v481
  %483 = vmatprep.subr.mxu0 0.0
  %v484 = vand.u32 %v59, 4294901760
  %v485 = vsub.f32 %v59, %v484
  %486 = vmatpush2.msra.mxu0 %v485
  %487 = vmatprep.subr.mxu0 0.0
  %v488 = vand.u32 %v58, 4294901760
  %v489 = vsub.f32 %v58, %v488
  %490 = vmatpush2.msra.mxu0 %v489
  %491 = vmatprep.subr.mxu0 0.0
  %v492 = vand.u32 %v57, 4294901760
  %v493 = vsub.f32 %v57, %v492
  %494 = vmatpush2.msra.mxu0 %v493
  %495 = vmatprep.subr.mxu0 0.0
  %v496 = vand.u32 %v56, 4294901760
  %v497 = vsub.f32 %v56, %v496
  %498 = vmatpush2.msra.mxu0 %v497
  %499 = vmatprep.subr.mxu0 0.0
  %v500 = vand.u32 %v55, 4294901760
  %v501 = vsub.f32 %v55, %v500
  %502 = vmatpush2.msra.mxu0 %v501
  %503 = vmatprep.subr.mxu0 0.0
  %v504 = vand.u32 %v54, 4294901760
  %v505 = vsub.f32 %v54, %v504
  %506 = vmatpush2.msra.mxu0 %v505
  %507 = vmatprep.subr.mxu0 0.0
  %v508 = vand.u32 %v53, 4294901760
  %v509 = vsub.f32 %v53, %v508
  %510 = vmatpush2.msra.mxu0 %v509
  %511 = vmatprep.subr.mxu0 0.0
  %v512 = vand.u32 %v52, 4294901760
  %v513 = vsub.f32 %v52, %v512
  %514 = vmatpush2.msra.mxu0 %v513
  %515 = vmatprep.subr.mxu0 0.0
  %v516 = vand.u32 %v51, 4294901760
  %v517 = vsub.f32 %v51, %v516
  %518 = vmatpush2.msra.mxu0 %v517
  %519 = vmatprep.subr.mxu0 0.0
  %v520 = vand.u32 %v50, 4294901760
  %v521 = vsub.f32 %v50, %v520
  %522 = vmatpush2.msra.mxu0 %v521
  %523 = vmatprep.subr.mxu0 0.0
  %v524 = vand.u32 %v49, 4294901760
  %v525 = vsub.f32 %v49, %v524
  %526 = vmatpush2.msra.mxu0 %v525
  %527 = vmatprep.subr.mxu0 0.0
  %v528 = vand.u32 %v48, 4294901760
  %v529 = vsub.f32 %v48, %v528
  %530 = vmatpush2.msra.mxu0 %v529
  %531 = vmatprep.subr.mxu0 0.0
  %v532 = vand.u32 %v47, 4294901760
  %v533 = vsub.f32 %v47, %v532
  %534 = vmatpush2.msra.mxu0 %v533
  %v535 = vand.u32 %v30, 4294901760
  %v536 = vsub.f32 %v30, %v535
  %537 = vmatprep.mubr.f32.mxu0 %v536
  %v538 = vand.u32 %v29, 4294901760
  %v539 = vsub.f32 %v29, %v538
  %540 = vmatmul.mubr.f32.gmra.mxu0 %v539
  %v541 = vpop.f32.mrf.mxu0
  %v542 = vadd.f32 %v404, %v541
  %v543 = vpop.f32.mrf.mxu0
  %544 = vdwg.mxu0
  %545 = vmatprep.subr.mxu0 0.0
  %v546 = vand.u32 %v46, 4294901760
  %547 = vmatpush1.msra.mxu0 %v546
  %548 = vmatprep.subr.mxu0 0.0
  %v549 = vand.u32 %v45, 4294901760
  %550 = vmatpush1.msra.mxu0 %v549
  %551 = vmatprep.subr.mxu0 0.0
  %v552 = vand.u32 %v44, 4294901760
  %553 = vmatpush1.msra.mxu0 %v552
  %554 = vmatprep.subr.mxu0 0.0
  %v555 = vand.u32 %v43, 4294901760
  %556 = vmatpush1.msra.mxu0 %v555
  %557 = vmatprep.subr.mxu0 0.0
  %v558 = vand.u32 %v42, 4294901760
  %559 = vmatpush1.msra.mxu0 %v558
  %560 = vmatprep.subr.mxu0 0.0
  %v561 = vand.u32 %v41, 4294901760
  %562 = vmatpush1.msra.mxu0 %v561
  %563 = vmatprep.subr.mxu0 0.0
  %v564 = vand.u32 %v40, 4294901760
  %565 = vmatpush1.msra.mxu0 %v564
  %566 = vmatprep.subr.mxu0 0.0
  %v567 = vand.u32 %v39, 4294901760
  %568 = vmatpush1.msra.mxu0 %v567
  %569 = vmatprep.subr.mxu0 0.0
  %v570 = vand.u32 %v38, 4294901760
  %571 = vmatpush1.msra.mxu0 %v570
  %572 = vmatprep.subr.mxu0 0.0
  %v573 = vand.u32 %v37, 4294901760
  %574 = vmatpush1.msra.mxu0 %v573
  %575 = vmatprep.subr.mxu0 0.0
  %v576 = vand.u32 %v36, 4294901760
  %577 = vmatpush1.msra.mxu0 %v576
  %578 = vmatprep.subr.mxu0 0.0
  %v579 = vand.u32 %v35, 4294901760
  %580 = vmatpush1.msra.mxu0 %v579
  %581 = vmatprep.subr.mxu0 0.0
  %v582 = vand.u32 %v34, 4294901760
  %583 = vmatpush1.msra.mxu0 %v582
  %584 = vmatprep.subr.mxu0 0.0
  %v585 = vand.u32 %v33, 4294901760
  %586 = vmatpush1.msra.mxu0 %v585
  %587 = vmatprep.subr.mxu0 0.0
  %v588 = vand.u32 %v32, 4294901760
  %589 = vmatpush1.msra.mxu0 %v588
  %590 = vmatprep.subr.mxu0 0.0
  %v591 = vand.u32 %v31, 4294901760
  %592 = vmatpush1.msra.mxu0 %v591
  %593 = vmatprep.subr.mxu0 0.0
  %v594 = vand.u32 %v62, 4294901760
  %595 = vmatpush2.msra.mxu0 %v594
  %596 = vmatprep.subr.mxu0 0.0
  %v597 = vand.u32 %v61, 4294901760
  %598 = vmatpush2.msra.mxu0 %v597
  %599 = vmatprep.subr.mxu0 0.0
  %v600 = vand.u32 %v60, 4294901760
  %601 = vmatpush2.msra.mxu0 %v600
  %602 = vmatprep.subr.mxu0 0.0
  %v603 = vand.u32 %v59, 4294901760
  %604 = vmatpush2.msra.mxu0 %v603
  %605 = vmatprep.subr.mxu0 0.0
  %v606 = vand.u32 %v58, 4294901760
  %607 = vmatpush2.msra.mxu0 %v606
  %608 = vmatprep.subr.mxu0 0.0
  %v609 = vand.u32 %v57, 4294901760
  %610 = vmatpush2.msra.mxu0 %v609
  %611 = vmatprep.subr.mxu0 0.0
  %v612 = vand.u32 %v56, 4294901760
  %613 = vmatpush2.msra.mxu0 %v612
  %614 = vmatprep.subr.mxu0 0.0
  %v615 = vand.u32 %v55, 4294901760
  %616 = vmatpush2.msra.mxu0 %v615
  %617 = vmatprep.subr.mxu0 0.0
  %v618 = vand.u32 %v54, 4294901760
  %619 = vmatpush2.msra.mxu0 %v618
  %620 = vmatprep.subr.mxu0 0.0
  %v621 = vand.u32 %v53, 4294901760
  %622 = vmatpush2.msra.mxu0 %v621
  %623 = vmatprep.subr.mxu0 0.0
  %v624 = vand.u32 %v52, 4294901760
  %625 = vmatpush2.msra.mxu0 %v624
  %626 = vmatprep.subr.mxu0 0.0
  %v627 = vand.u32 %v51, 4294901760
  %628 = vmatpush2.msra.mxu0 %v627
  %629 = vmatprep.subr.mxu0 0.0
  %v630 = vand.u32 %v50, 4294901760
  %631 = vmatpush2.msra.mxu0 %v630
  %632 = vmatprep.subr.mxu0 0.0
  %v633 = vand.u32 %v49, 4294901760
  %634 = vmatpush2.msra.mxu0 %v633
  %635 = vmatprep.subr.mxu0 0.0
  %v636 = vand.u32 %v48, 4294901760
  %637 = vmatpush2.msra.mxu0 %v636
  %638 = vmatprep.subr.mxu0 0.0
  %v639 = vand.u32 %v47, 4294901760
  %640 = vmatpush2.msra.mxu0 %v639
  %v641 = vand.u32 %v30, 4294901760
  %v642 = vsub.f32 %v30, %v641
  %v643 = vand.u32 %v642, 4294901760
  %644 = vmatprep.mubr.f32.mxu0 %v643
  %v645 = vand.u32 %v29, 4294901760
  %v646 = vsub.f32 %v29, %v645
  %v647 = vand.u32 %v646, 4294901760
  %648 = vmatmul.mubr.f32.gmra.mxu0 %v647
  %v649 = vpop.f32.mrf.mxu0
  %v650 = vadd.f32 %v542, %v649
  %v651 = vpop.f32.mrf.mxu0
  %652 = vdwg.mxu0
  %653 = vmatprep.subr.mxu0 0.0
  %v654 = vand.u32 %v46, 4294901760
  %v655 = vsub.f32 %v46, %v654
  %v656 = vand.u32 %v655, 4294901760
  %657 = vmatpush1.msra.mxu0 %v656
  %658 = vmatprep.subr.mxu0 0.0
  %v659 = vand.u32 %v45, 4294901760
  %v660 = vsub.f32 %v45, %v659
  %v661 = vand.u32 %v660, 4294901760
  %662 = vmatpush1.msra.mxu0 %v661
  %663 = vmatprep.subr.mxu0 0.0
  %v664 = vand.u32 %v44, 4294901760
  %v665 = vsub.f32 %v44, %v664
  %v666 = vand.u32 %v665, 4294901760
  %667 = vmatpush1.msra.mxu0 %v666
  %668 = vmatprep.subr.mxu0 0.0
  %v669 = vand.u32 %v43, 4294901760
  %v670 = vsub.f32 %v43, %v669
  %v671 = vand.u32 %v670, 4294901760
  %672 = vmatpush1.msra.mxu0 %v671
  %673 = vmatprep.subr.mxu0 0.0
  %v674 = vand.u32 %v42, 4294901760
  %v675 = vsub.f32 %v42, %v674
  %v676 = vand.u32 %v675, 4294901760
  %677 = vmatpush1.msra.mxu0 %v676
  %678 = vmatprep.subr.mxu0 0.0
  %v679 = vand.u32 %v41, 4294901760
  %v680 = vsub.f32 %v41, %v679
  %v681 = vand.u32 %v680, 4294901760
  %682 = vmatpush1.msra.mxu0 %v681
  %683 = vmatprep.subr.mxu0 0.0
  %v684 = vand.u32 %v40, 4294901760
  %v685 = vsub.f32 %v40, %v684
  %v686 = vand.u32 %v685, 4294901760
  %687 = vmatpush1.msra.mxu0 %v686
  %688 = vmatprep.subr.mxu0 0.0
  %v689 = vand.u32 %v39, 4294901760
  %v690 = vsub.f32 %v39, %v689
  %v691 = vand.u32 %v690, 4294901760
  %692 = vmatpush1.msra.mxu0 %v691
  %693 = vmatprep.subr.mxu0 0.0
  %v694 = vand.u32 %v38, 4294901760
  %v695 = vsub.f32 %v38, %v694
  %v696 = vand.u32 %v695, 4294901760
  %697 = vmatpush1.msra.mxu0 %v696
  %698 = vmatprep.subr.mxu0 0.0
  %v699 = vand.u32 %v37, 4294901760
  %v700 = vsub.f32 %v37, %v699
  %v701 = vand.u32 %v700, 4294901760
  %702 = vmatpush1.msra.mxu0 %v701
  %703 = vmatprep.subr.mxu0 0.0
  %v704 = vand.u32 %v36, 4294901760
  %v705 = vsub.f32 %v36, %v704
  %v706 = vand.u32 %v705, 4294901760
  %707 = vmatpush1.msra.mxu0 %v706
  %708 = vmatprep.subr.mxu0 0.0
  %v709 = vand.u32 %v35, 4294901760
  %v710 = vsub.f32 %v35, %v709
  %v711 = vand.u32 %v710, 4294901760
  %712 = vmatpush1.msra.mxu0 %v711
  %713 = vmatprep.subr.mxu0 0.0
  %v714 = vand.u32 %v34, 4294901760
  %v715 = vsub.f32 %v34, %v714
  %v716 = vand.u32 %v715, 4294901760
  %717 = vmatpush1.msra.mxu0 %v716
  %718 = vmatprep.subr.mxu0 0.0
  %v719 = vand.u32 %v33, 4294901760
  %v720 = vsub.f32 %v33, %v719
  %v721 = vand.u32 %v720, 4294901760
  %722 = vmatpush1.msra.mxu0 %v721
  %723 = vmatprep.subr.mxu0 0.0
  %v724 = vand.u32 %v32, 4294901760
  %v725 = vsub.f32 %v32, %v724
  %v726 = vand.u32 %v725, 4294901760
  %727 = vmatpush1.msra.mxu0 %v726
  %728 = vmatprep.subr.mxu0 0.0
  %v729 = vand.u32 %v31, 4294901760
  %v730 = vsub.f32 %v31, %v729
  %v731 = vand.u32 %v730, 4294901760
  %732 = vmatpush1.msra.mxu0 %v731
  %733 = vmatprep.subr.mxu0 0.0
  %v734 = vand.u32 %v62, 4294901760
  %v735 = vsub.f32 %v62, %v734
  %v736 = vand.u32 %v735, 4294901760
  %737 = vmatpush2.msra.mxu0 %v736
  %738 = vmatprep.subr.mxu0 0.0
  %v739 = vand.u32 %v61, 4294901760
  %v740 = vsub.f32 %v61, %v739
  %v741 = vand.u32 %v740, 4294901760
  %742 = vmatpush2.msra.mxu0 %v741
  %743 = vmatprep.subr.mxu0 0.0
  %v744 = vand.u32 %v60, 4294901760
  %v745 = vsub.f32 %v60, %v744
  %v746 = vand.u32 %v745, 4294901760
  %747 = vmatpush2.msra.mxu0 %v746
  %748 = vmatprep.subr.mxu0 0.0
  %v749 = vand.u32 %v59, 4294901760
  %v750 = vsub.f32 %v59, %v749
  %v751 = vand.u32 %v750, 4294901760
  %752 = vmatpush2.msra.mxu0 %v751
  %753 = vmatprep.subr.mxu0 0.0
  %v754 = vand.u32 %v58, 4294901760
  %v755 = vsub.f32 %v58, %v754
  %v756 = vand.u32 %v755, 4294901760
  %757 = vmatpush2.msra.mxu0 %v756
  %758 = vmatprep.subr.mxu0 0.0
  %v759 = vand.u32 %v57, 4294901760
  %v760 = vsub.f32 %v57, %v759
  %v761 = vand.u32 %v760, 4294901760
  %762 = vmatpush2.msra.mxu0 %v761
  %763 = vmatprep.subr.mxu0 0.0
  %v764 = vand.u32 %v56, 4294901760
  %v765 = vsub.f32 %v56, %v764
  %v766 = vand.u32 %v765, 4294901760
  %767 = vmatpush2.msra.mxu0 %v766
  %768 = vmatprep.subr.mxu0 0.0
  %v769 = vand.u32 %v55, 4294901760
  %v770 = vsub.f32 %v55, %v769
  %v771 = vand.u32 %v770, 4294901760
  %772 = vmatpush2.msra.mxu0 %v771
  %773 = vmatprep.subr.mxu0 0.0
  %v774 = vand.u32 %v54, 4294901760
  %v775 = vsub.f32 %v54, %v774
  %v776 = vand.u32 %v775, 4294901760
  %777 = vmatpush2.msra.mxu0 %v776
  %778 = vmatprep.subr.mxu0 0.0
  %v779 = vand.u32 %v53, 4294901760
  %v780 = vsub.f32 %v53, %v779
  %v781 = vand.u32 %v780, 4294901760
  %782 = vmatpush2.msra.mxu0 %v781
  %783 = vmatprep.subr.mxu0 0.0
  %v784 = vand.u32 %v52, 4294901760
  %v785 = vsub.f32 %v52, %v784
  %v786 = vand.u32 %v785, 4294901760
  %787 = vmatpush2.msra.mxu0 %v786
  %788 = vmatprep.subr.mxu0 0.0
  %v789 = vand.u32 %v51, 4294901760
  %v790 = vsub.f32 %v51, %v789
  %v791 = vand.u32 %v790, 4294901760
  %792 = vmatpush2.msra.mxu0 %v791
  %793 = vmatprep.subr.mxu0 0.0
  %v794 = vand.u32 %v50, 4294901760
  %v795 = vsub.f32 %v50, %v794
  %v796 = vand.u32 %v795, 4294901760
  %797 = vmatpush2.msra.mxu0 %v796
  %798 = vmatprep.subr.mxu0 0.0
  %v799 = vand.u32 %v49, 4294901760
  %v800 = vsub.f32 %v49, %v799
  %v801 = vand.u32 %v800, 4294901760
  %802 = vmatpush2.msra.mxu0 %v801
  %803 = vmatprep.subr.mxu0 0.0
  %v804 = vand.u32 %v48, 4294901760
  %v805 = vsub.f32 %v48, %v804
  %v806 = vand.u32 %v805, 4294901760
  %807 = vmatpush2.msra.mxu0 %v806
  %808 = vmatprep.subr.mxu0 0.0
  %v809 = vand.u32 %v47, 4294901760
  %v810 = vsub.f32 %v47, %v809
  %v811 = vand.u32 %v810, 4294901760
  %812 = vmatpush2.msra.mxu0 %v811
  %v813 = vand.u32 %v30, 4294901760
  %814 = vmatprep.mubr.f32.mxu0 %v813
  %v815 = vand.u32 %v29, 4294901760
  %816 = vmatmul.mubr.f32.gmra.mxu0 %v815
  %v817 = vpop.f32.mrf.mxu0
  %v818 = vadd.f32 %v650, %v817
  %v819 = vpop.f32.mrf.mxu0
  %820 = vdwg.mxu0
  %821 = vmatprep.subr.mxu0 0.0
  %v822 = vand.u32 %v46, 4294901760
  %823 = vmatpush1.msra.mxu0 %v822
  %824 = vmatprep.subr.mxu0 0.0
  %v825 = vand.u32 %v45, 4294901760
  %826 = vmatpush1.msra.mxu0 %v825
  %827 = vmatprep.subr.mxu0 0.0
  %v828 = vand.u32 %v44, 4294901760
  %829 = vmatpush1.msra.mxu0 %v828
  %830 = vmatprep.subr.mxu0 0.0
  %v831 = vand.u32 %v43, 4294901760
  %832 = vmatpush1.msra.mxu0 %v831
  %833 = vmatprep.subr.mxu0 0.0
  %v834 = vand.u32 %v42, 4294901760
  %835 = vmatpush1.msra.mxu0 %v834
  %836 = vmatprep.subr.mxu0 0.0
  %v837 = vand.u32 %v41, 4294901760
  %838 = vmatpush1.msra.mxu0 %v837
  %839 = vmatprep.subr.mxu0 0.0
  %v840 = vand.u32 %v40, 4294901760
  %841 = vmatpush1.msra.mxu0 %v840
  %842 = vmatprep.subr.mxu0 0.0
  %v843 = vand.u32 %v39, 4294901760
  %844 = vmatpush1.msra.mxu0 %v843
  %845 = vmatprep.subr.mxu0 0.0
  %v846 = vand.u32 %v38, 4294901760
  %847 = vmatpush1.msra.mxu0 %v846
  %848 = vmatprep.subr.mxu0 0.0
  %v849 = vand.u32 %v37, 4294901760
  %850 = vmatpush1.msra.mxu0 %v849
  %851 = vmatprep.subr.mxu0 0.0
  %v852 = vand.u32 %v36, 4294901760
  %853 = vmatpush1.msra.mxu0 %v852
  %854 = vmatprep.subr.mxu0 0.0
  %v855 = vand.u32 %v35, 4294901760
  %856 = vmatpush1.msra.mxu0 %v855
  %857 = vmatprep.subr.mxu0 0.0
  %v858 = vand.u32 %v34, 4294901760
  %859 = vmatpush1.msra.mxu0 %v858
  %860 = vmatprep.subr.mxu0 0.0
  %v861 = vand.u32 %v33, 4294901760
  %862 = vmatpush1.msra.mxu0 %v861
  %863 = vmatprep.subr.mxu0 0.0
  %v864 = vand.u32 %v32, 4294901760
  %865 = vmatpush1.msra.mxu0 %v864
  %866 = vmatprep.subr.mxu0 0.0
  %v867 = vand.u32 %v31, 4294901760
  %868 = vmatpush1.msra.mxu0 %v867
  %869 = vmatprep.subr.mxu0 0.0
  %v870 = vand.u32 %v62, 4294901760
  %871 = vmatpush2.msra.mxu0 %v870
  %872 = vmatprep.subr.mxu0 0.0
  %v873 = vand.u32 %v61, 4294901760
  %874 = vmatpush2.msra.mxu0 %v873
  %875 = vmatprep.subr.mxu0 0.0
  %v876 = vand.u32 %v60, 4294901760
  %877 = vmatpush2.msra.mxu0 %v876
  %878 = vmatprep.subr.mxu0 0.0
  %v879 = vand.u32 %v59, 4294901760
  %880 = vmatpush2.msra.mxu0 %v879
  %881 = vmatprep.subr.mxu0 0.0
  %v882 = vand.u32 %v58, 4294901760
  %883 = vmatpush2.msra.mxu0 %v882
  %884 = vmatprep.subr.mxu0 0.0
  %v885 = vand.u32 %v57, 4294901760
  %886 = vmatpush2.msra.mxu0 %v885
  %887 = vmatprep.subr.mxu0 0.0
  %v888 = vand.u32 %v56, 4294901760
  %889 = vmatpush2.msra.mxu0 %v888
  %890 = vmatprep.subr.mxu0 0.0
  %v891 = vand.u32 %v55, 4294901760
  %892 = vmatpush2.msra.mxu0 %v891
  %893 = vmatprep.subr.mxu0 0.0
  %v894 = vand.u32 %v54, 4294901760
  %895 = vmatpush2.msra.mxu0 %v894
  %896 = vmatprep.subr.mxu0 0.0
  %v897 = vand.u32 %v53, 4294901760
  %898 = vmatpush2.msra.mxu0 %v897
  %899 = vmatprep.subr.mxu0 0.0
  %v900 = vand.u32 %v52, 4294901760
  %901 = vmatpush2.msra.mxu0 %v900
  %902 = vmatprep.subr.mxu0 0.0
  %v903 = vand.u32 %v51, 4294901760
  %904 = vmatpush2.msra.mxu0 %v903
  %905 = vmatprep.subr.mxu0 0.0
  %v906 = vand.u32 %v50, 4294901760
  %907 = vmatpush2.msra.mxu0 %v906
  %908 = vmatprep.subr.mxu0 0.0
  %v909 = vand.u32 %v49, 4294901760
  %910 = vmatpush2.msra.mxu0 %v909
  %911 = vmatprep.subr.mxu0 0.0
  %v912 = vand.u32 %v48, 4294901760
  %913 = vmatpush2.msra.mxu0 %v912
  %914 = vmatprep.subr.mxu0 0.0
  %v915 = vand.u32 %v47, 4294901760
  %916 = vmatpush2.msra.mxu0 %v915
  %v917 = vand.u32 %v30, 4294901760
  %918 = vmatprep.mubr.f32.mxu0 %v917
  %v919 = vand.u32 %v29, 4294901760
  %920 = vmatmul.mubr.f32.gmra.mxu0 %v919
  %v921 = vpop.f32.mrf.mxu0
  %v922 = vadd.f32 %v818, %v921
  %v923 = vpop.f32.mrf.mxu0
  %924 = vdwg.mxu0
  %v925 = vld [vmem:[%s2] sm:$0xff]
  %v926 = vld [vmem:[%s2 + $0x8] sm:$0xff]
  %v927 = vld [vmem:[%s2 + $0x10] sm:$0xff]
  %v928 = vld [vmem:[%s2 + $0x18] sm:$0xff]
  %v929 = vld [vmem:[%s3] sm:$0xff]
  %v930 = vld [vmem:[%s3 + $0x8] sm:$0xff]
  %v931 = vld [vmem:[%s3 + $0x10] sm:$0xff]
  %v932 = vld [vmem:[%s3 + $0x18] sm:$0xff]
  %v933 = vld [vmem:[%s4] sm:$0xff]
  %v934 = vld [vmem:[%s4 + $0x8] sm:$0xff]
  %v935 = vld [vmem:[%s4 + $0x10] sm:$0xff]
  %v936 = vld [vmem:[%s4 + $0x18] sm:$0x3]
  %v937 = vld [vmem:[%s4 + $0x20] sm:$0x3]
  %v938 = vld [vmem:[%s4 + $0x28] sm:$0x3]
  %vm939 = vcmask 64512
  %v941 = vsel %vm939, %v925, 0
  %v944 = vsel %vm939, %v926, 0
  %946 = vmatprep.subr.mxu0 0.0
  %947 = vmatpush1.msra.mxu0 0.0
  %948 = vmatprep.subr.mxu0 0.0
  %949 = vmatpush1.msra.mxu0 0.0
  %950 = vmatprep.subr.mxu0 0.0
  %951 = vmatpush1.msra.mxu0 0.0
  %952 = vmatprep.subr.mxu0 0.0
  %953 = vmatpush1.msra.mxu0 0.0
  %954 = vmatprep.subr.mxu0 0.0
  %955 = vmatpush1.msra.mxu0 0.0
  %956 = vmatprep.subr.mxu0 0.0
  %957 = vmatpush1.msra.mxu0 0.0
  %958 = vmatprep.subr.mxu0 0.0
  %959 = vmatpush1.msra.mxu0 0.0
  %960 = vmatprep.subr.mxu0 0.0
  %961 = vmatpush1.msra.mxu0 0.0
  %962 = vmatprep.subr.mxu0 0.0
  %963 = vmatpush1.msra.mxu0 0.0
  %964 = vmatprep.subr.mxu0 0.0
  %965 = vmatpush1.msra.mxu0 0.0
  %966 = vmatprep.subr.mxu0 0.0
  %967 = vmatpush1.msra.mxu0 0.0
  %968 = vmatprep.subr.mxu0 0.0
  %969 = vmatpush1.msra.mxu0 0.0
  %970 = vmatprep.subr.mxu0 0.0
  %971 = vmatpush1.msra.mxu0 0.0
  %972 = vmatprep.subr.mxu0 0.0
  %973 = vmatpush1.msra.mxu0 0.0
  %974 = vmatprep.subr.mxu0 0.0
  %975 = vmatpush1.msra.mxu0 0.0
  %976 = vmatprep.subr.mxu0 0.0
  %v977 = vand.u32 %v922, 4294901760
  %978 = vmatpush1.msra.mxu0 %v977
  %979 = vmatprep.subr.mxu0 0.0
  %980 = vmatpush2.msra.mxu0 0.0
  %981 = vmatprep.subr.mxu0 0.0
  %982 = vmatpush2.msra.mxu0 0.0
  %983 = vmatprep.subr.mxu0 0.0
  %984 = vmatpush2.msra.mxu0 0.0
  %985 = vmatprep.subr.mxu0 0.0
  %986 = vmatpush2.msra.mxu0 0.0
  %987 = vmatprep.subr.mxu0 0.0
  %988 = vmatpush2.msra.mxu0 0.0
  %989 = vmatprep.subr.mxu0 0.0
  %990 = vmatpush2.msra.mxu0 0.0
  %991 = vmatprep.subr.mxu0 0.0
  %992 = vmatpush2.msra.mxu0 0.0
  %993 = vmatprep.subr.mxu0 0.0
  %994 = vmatpush2.msra.mxu0 0.0
  %995 = vmatprep.subr.mxu0 0.0
  %996 = vmatpush2.msra.mxu0 0.0
  %997 = vmatprep.subr.mxu0 0.0
  %998 = vmatpush2.msra.mxu0 0.0
  %999 = vmatprep.subr.mxu0 0.0
  %1000 = vmatpush2.msra.mxu0 0.0
  %1001 = vmatprep.subr.mxu0 0.0
  %1002 = vmatpush2.msra.mxu0 0.0
  %1003 = vmatprep.subr.mxu0 0.0
  %1004 = vmatpush2.msra.mxu0 0.0
  %1005 = vmatprep.subr.mxu0 0.0
  %1006 = vmatpush2.msra.mxu0 0.0
  %1007 = vmatprep.subr.mxu0 0.0
  %1008 = vmatpush2.msra.mxu0 0.0
  %1009 = vmatprep.subr.mxu0 0.0
  %1010 = vmatpush2.msra.mxu0 0.0
  %1011 = vmatprep.mubr.f32.mxu0 0.0
  %v1012 = vand.u32 %v941, 4294901760
  %v1013 = vsub.f32 %v941, %v1012
  %v1014 = vand.u32 %v1013, 4294901760
  %v1015 = vsub.f32 %v1013, %v1014
  %v1016 = vand.u32 %v1015, 4294901760
  %1017 = vmatmul.mubr.f32.gmra.mxu0 %v1016
  %v1018 = vpop.f32.mrf.mxu0
  %v1019 = vadd.f32 %v929, %v1018
  %v1020 = vpop.f32.mrf.mxu0
  %1021 = vmatprep.mubr.f32.mxu0 0.0
  %v1022 = vand.u32 %v944, 4294901760
  %v1023 = vsub.f32 %v944, %v1022
  %v1024 = vand.u32 %v1023, 4294901760
  %v1025 = vsub.f32 %v1023, %v1024
  %v1026 = vand.u32 %v1025, 4294901760
  %1027 = vmatmul.mubr.f32.gmra.mxu0 %v1026
  %v1028 = vpop.f32.mrf.mxu0
  %v1029 = vadd.f32 %v930, %v1028
  %v1030 = vpop.f32.mrf.mxu0
  %1031 = vdwg.mxu0
  %1032 = vmatprep.subr.mxu0 0.0
  %1033 = vmatpush1.msra.mxu0 0.0
  %1034 = vmatprep.subr.mxu0 0.0
  %1035 = vmatpush1.msra.mxu0 0.0
  %1036 = vmatprep.subr.mxu0 0.0
  %1037 = vmatpush1.msra.mxu0 0.0
  %1038 = vmatprep.subr.mxu0 0.0
  %1039 = vmatpush1.msra.mxu0 0.0
  %1040 = vmatprep.subr.mxu0 0.0
  %1041 = vmatpush1.msra.mxu0 0.0
  %1042 = vmatprep.subr.mxu0 0.0
  %1043 = vmatpush1.msra.mxu0 0.0
  %1044 = vmatprep.subr.mxu0 0.0
  %1045 = vmatpush1.msra.mxu0 0.0
  %1046 = vmatprep.subr.mxu0 0.0
  %1047 = vmatpush1.msra.mxu0 0.0
  %1048 = vmatprep.subr.mxu0 0.0
  %1049 = vmatpush1.msra.mxu0 0.0
  %1050 = vmatprep.subr.mxu0 0.0
  %1051 = vmatpush1.msra.mxu0 0.0
  %1052 = vmatprep.subr.mxu0 0.0
  %1053 = vmatpush1.msra.mxu0 0.0
  %1054 = vmatprep.subr.mxu0 0.0
  %1055 = vmatpush1.msra.mxu0 0.0
  %1056 = vmatprep.subr.mxu0 0.0
  %1057 = vmatpush1.msra.mxu0 0.0
  %1058 = vmatprep.subr.mxu0 0.0
  %1059 = vmatpush1.msra.mxu0 0.0
  %1060 = vmatprep.subr.mxu0 0.0
  %1061 = vmatpush1.msra.mxu0 0.0
  %1062 = vmatprep.subr.mxu0 0.0
  %v1063 = vand.u32 %v922, 4294901760
  %v1064 = vsub.f32 %v922, %v1063
  %v1065 = vand.u32 %v1064, 4294901760
  %v1066 = vsub.f32 %v1064, %v1065
  %v1067 = vand.u32 %v1066, 4294901760
  %1068 = vmatpush1.msra.mxu0 %v1067
  %1069 = vmatprep.subr.mxu0 0.0
  %1070 = vmatpush2.msra.mxu0 0.0
  %1071 = vmatprep.subr.mxu0 0.0
  %1072 = vmatpush2.msra.mxu0 0.0
  %1073 = vmatprep.subr.mxu0 0.0
  %1074 = vmatpush2.msra.mxu0 0.0
  %1075 = vmatprep.subr.mxu0 0.0
  %1076 = vmatpush2.msra.mxu0 0.0
  %1077 = vmatprep.subr.mxu0 0.0
  %1078 = vmatpush2.msra.mxu0 0.0
  %1079 = vmatprep.subr.mxu0 0.0
  %1080 = vmatpush2.msra.mxu0 0.0
  %1081 = vmatprep.subr.mxu0 0.0
  %1082 = vmatpush2.msra.mxu0 0.0
  %1083 = vmatprep.subr.mxu0 0.0
  %1084 = vmatpush2.msra.mxu0 0.0
  %1085 = vmatprep.subr.mxu0 0.0
  %1086 = vmatpush2.msra.mxu0 0.0
  %1087 = vmatprep.subr.mxu0 0.0
  %1088 = vmatpush2.msra.mxu0 0.0
  %1089 = vmatprep.subr.mxu0 0.0
  %1090 = vmatpush2.msra.mxu0 0.0
  %1091 = vmatprep.subr.mxu0 0.0
  %1092 = vmatpush2.msra.mxu0 0.0
  %1093 = vmatprep.subr.mxu0 0.0
  %1094 = vmatpush2.msra.mxu0 0.0
  %1095 = vmatprep.subr.mxu0 0.0
  %1096 = vmatpush2.msra.mxu0 0.0
  %1097 = vmatprep.subr.mxu0 0.0
  %1098 = vmatpush2.msra.mxu0 0.0
  %1099 = vmatprep.subr.mxu0 0.0
  %1100 = vmatpush2.msra.mxu0 0.0
  %1101 = vmatprep.mubr.f32.mxu0 0.0
  %v1102 = vand.u32 %v941, 4294901760
  %1103 = vmatmul.mubr.f32.gmra.mxu0 %v1102
  %v1104 = vpop.f32.mrf.mxu0
  %v1105 = vadd.f32 %v1019, %v1104
  %v1106 = vpop.f32.mrf.mxu0
  %1107 = vmatprep.mubr.f32.mxu0 0.0
  %v1108 = vand.u32 %v944, 4294901760
  %1109 = vmatmul.mubr.f32.gmra.mxu0 %v1108
  %v1110 = vpop.f32.mrf.mxu0
  %v1111 = vadd.f32 %v1029, %v1110
  %v1112 = vpop.f32.mrf.mxu0
  %1113 = vdwg.mxu0
  %1114 = vmatprep.subr.mxu0 0.0
  %1115 = vmatpush1.msra.mxu0 0.0
  %1116 = vmatprep.subr.mxu0 0.0
  %1117 = vmatpush1.msra.mxu0 0.0
  %1118 = vmatprep.subr.mxu0 0.0
  %1119 = vmatpush1.msra.mxu0 0.0
  %1120 = vmatprep.subr.mxu0 0.0
  %1121 = vmatpush1.msra.mxu0 0.0
  %1122 = vmatprep.subr.mxu0 0.0
  %1123 = vmatpush1.msra.mxu0 0.0
  %1124 = vmatprep.subr.mxu0 0.0
  %1125 = vmatpush1.msra.mxu0 0.0
  %1126 = vmatprep.subr.mxu0 0.0
  %1127 = vmatpush1.msra.mxu0 0.0
  %1128 = vmatprep.subr.mxu0 0.0
  %1129 = vmatpush1.msra.mxu0 0.0
  %1130 = vmatprep.subr.mxu0 0.0
  %1131 = vmatpush1.msra.mxu0 0.0
  %1132 = vmatprep.subr.mxu0 0.0
  %1133 = vmatpush1.msra.mxu0 0.0
  %1134 = vmatprep.subr.mxu0 0.0
  %1135 = vmatpush1.msra.mxu0 0.0
  %1136 = vmatprep.subr.mxu0 0.0
  %1137 = vmatpush1.msra.mxu0 0.0
  %1138 = vmatprep.subr.mxu0 0.0
  %1139 = vmatpush1.msra.mxu0 0.0
  %1140 = vmatprep.subr.mxu0 0.0
  %1141 = vmatpush1.msra.mxu0 0.0
  %1142 = vmatprep.subr.mxu0 0.0
  %1143 = vmatpush1.msra.mxu0 0.0
  %1144 = vmatprep.subr.mxu0 0.0
  %v1145 = vand.u32 %v922, 4294901760
  %v1146 = vsub.f32 %v922, %v1145
  %1147 = vmatpush1.msra.mxu0 %v1146
  %1148 = vmatprep.subr.mxu0 0.0
  %1149 = vmatpush2.msra.mxu0 0.0
  %1150 = vmatprep.subr.mxu0 0.0
  %1151 = vmatpush2.msra.mxu0 0.0
  %1152 = vmatprep.subr.mxu0 0.0
  %1153 = vmatpush2.msra.mxu0 0.0
  %1154 = vmatprep.subr.mxu0 0.0
  %1155 = vmatpush2.msra.mxu0 0.0
  %1156 = vmatprep.subr.mxu0 0.0
  %1157 = vmatpush2.msra.mxu0 0.0
  %1158 = vmatprep.subr.mxu0 0.0
  %1159 = vmatpush2.msra.mxu0 0.0
  %1160 = vmatprep.subr.mxu0 0.0
  %1161 = vmatpush2.msra.mxu0 0.0
  %1162 = vmatprep.subr.mxu0 0.0
  %1163 = vmatpush2.msra.mxu0 0.0
  %1164 = vmatprep.subr.mxu0 0.0
  %1165 = vmatpush2.msra.mxu0 0.0
  %1166 = vmatprep.subr.mxu0 0.0
  %1167 = vmatpush2.msra.mxu0 0.0
  %1168 = vmatprep.subr.mxu0 0.0
  %1169 = vmatpush2.msra.mxu0 0.0
  %1170 = vmatprep.subr.mxu0 0.0
  %1171 = vmatpush2.msra.mxu0 0.0
  %1172 = vmatprep.subr.mxu0 0.0
  %1173 = vmatpush2.msra.mxu0 0.0
  %1174 = vmatprep.subr.mxu0 0.0
  %1175 = vmatpush2.msra.mxu0 0.0
  %1176 = vmatprep.subr.mxu0 0.0
  %1177 = vmatpush2.msra.mxu0 0.0
  %1178 = vmatprep.subr.mxu0 0.0
  %1179 = vmatpush2.msra.mxu0 0.0
  %1180 = vmatprep.mubr.f32.mxu0 0.0
  %v1181 = vand.u32 %v941, 4294901760
  %v1182 = vsub.f32 %v941, %v1181
  %1183 = vmatmul.mubr.f32.gmra.mxu0 %v1182
  %v1184 = vpop.f32.mrf.mxu0
  %v1185 = vadd.f32 %v1105, %v1184
  %v1186 = vpop.f32.mrf.mxu0
  %1187 = vmatprep.mubr.f32.mxu0 0.0
  %v1188 = vand.u32 %v944, 4294901760
  %v1189 = vsub.f32 %v944, %v1188
  %1190 = vmatmul.mubr.f32.gmra.mxu0 %v1189
  %v1191 = vpop.f32.mrf.mxu0
  %v1192 = vadd.f32 %v1111, %v1191
  %v1193 = vpop.f32.mrf.mxu0
  %1194 = vdwg.mxu0
  %1195 = vmatprep.subr.mxu0 0.0
  %1196 = vmatpush1.msra.mxu0 0.0
  %1197 = vmatprep.subr.mxu0 0.0
  %1198 = vmatpush1.msra.mxu0 0.0
  %1199 = vmatprep.subr.mxu0 0.0
  %1200 = vmatpush1.msra.mxu0 0.0
  %1201 = vmatprep.subr.mxu0 0.0
  %1202 = vmatpush1.msra.mxu0 0.0
  %1203 = vmatprep.subr.mxu0 0.0
  %1204 = vmatpush1.msra.mxu0 0.0
  %1205 = vmatprep.subr.mxu0 0.0
  %1206 = vmatpush1.msra.mxu0 0.0
  %1207 = vmatprep.subr.mxu0 0.0
  %1208 = vmatpush1.msra.mxu0 0.0
  %1209 = vmatprep.subr.mxu0 0.0
  %1210 = vmatpush1.msra.mxu0 0.0
  %1211 = vmatprep.subr.mxu0 0.0
  %1212 = vmatpush1.msra.mxu0 0.0
  %1213 = vmatprep.subr.mxu0 0.0
  %1214 = vmatpush1.msra.mxu0 0.0
  %1215 = vmatprep.subr.mxu0 0.0
  %1216 = vmatpush1.msra.mxu0 0.0
  %1217 = vmatprep.subr.mxu0 0.0
  %1218 = vmatpush1.msra.mxu0 0.0
  %1219 = vmatprep.subr.mxu0 0.0
  %1220 = vmatpush1.msra.mxu0 0.0
  %1221 = vmatprep.subr.mxu0 0.0
  %1222 = vmatpush1.msra.mxu0 0.0
  %1223 = vmatprep.subr.mxu0 0.0
  %1224 = vmatpush1.msra.mxu0 0.0
  %1225 = vmatprep.subr.mxu0 0.0
  %v1226 = vand.u32 %v922, 4294901760
  %1227 = vmatpush1.msra.mxu0 %v1226
  %1228 = vmatprep.subr.mxu0 0.0
  %1229 = vmatpush2.msra.mxu0 0.0
  %1230 = vmatprep.subr.mxu0 0.0
  %1231 = vmatpush2.msra.mxu0 0.0
  %1232 = vmatprep.subr.mxu0 0.0
  %1233 = vmatpush2.msra.mxu0 0.0
  %1234 = vmatprep.subr.mxu0 0.0
  %1235 = vmatpush2.msra.mxu0 0.0
  %1236 = vmatprep.subr.mxu0 0.0
  %1237 = vmatpush2.msra.mxu0 0.0
  %1238 = vmatprep.subr.mxu0 0.0
  %1239 = vmatpush2.msra.mxu0 0.0
  %1240 = vmatprep.subr.mxu0 0.0
  %1241 = vmatpush2.msra.mxu0 0.0
  %1242 = vmatprep.subr.mxu0 0.0
  %1243 = vmatpush2.msra.mxu0 0.0
  %1244 = vmatprep.subr.mxu0 0.0
  %1245 = vmatpush2.msra.mxu0 0.0
  %1246 = vmatprep.subr.mxu0 0.0
  %1247 = vmatpush2.msra.mxu0 0.0
  %1248 = vmatprep.subr.mxu0 0.0
  %1249 = vmatpush2.msra.mxu0 0.0
  %1250 = vmatprep.subr.mxu0 0.0
  %1251 = vmatpush2.msra.mxu0 0.0
  %1252 = vmatprep.subr.mxu0 0.0
  %1253 = vmatpush2.msra.mxu0 0.0
  %1254 = vmatprep.subr.mxu0 0.0
  %1255 = vmatpush2.msra.mxu0 0.0
  %1256 = vmatprep.subr.mxu0 0.0
  %1257 = vmatpush2.msra.mxu0 0.0
  %1258 = vmatprep.subr.mxu0 0.0
  %1259 = vmatpush2.msra.mxu0 0.0
  %1260 = vmatprep.mubr.f32.mxu0 0.0
  %v1261 = vand.u32 %v941, 4294901760
  %v1262 = vsub.f32 %v941, %v1261
  %v1263 = vand.u32 %v1262, 4294901760
  %1264 = vmatmul.mubr.f32.gmra.mxu0 %v1263
  %v1265 = vpop.f32.mrf.mxu0
  %v1266 = vadd.f32 %v1185, %v1265
  %v1267 = vpop.f32.mrf.mxu0
  %1268 = vmatprep.mubr.f32.mxu0 0.0
  %v1269 = vand.u32 %v944, 4294901760
  %v1270 = vsub.f32 %v944, %v1269
  %v1271 = vand.u32 %v1270, 4294901760
  %1272 = vmatmul.mubr.f32.gmra.mxu0 %v1271
  %v1273 = vpop.f32.mrf.mxu0
  %v1274 = vadd.f32 %v1192, %v1273
  %v1275 = vpop.f32.mrf.mxu0
  %1276 = vdwg.mxu0
  %1277 = vmatprep.subr.mxu0 0.0
  %1278 = vmatpush1.msra.mxu0 0.0
  %1279 = vmatprep.subr.mxu0 0.0
  %1280 = vmatpush1.msra.mxu0 0.0
  %1281 = vmatprep.subr.mxu0 0.0
  %1282 = vmatpush1.msra.mxu0 0.0
  %1283 = vmatprep.subr.mxu0 0.0
  %1284 = vmatpush1.msra.mxu0 0.0
  %1285 = vmatprep.subr.mxu0 0.0
  %1286 = vmatpush1.msra.mxu0 0.0
  %1287 = vmatprep.subr.mxu0 0.0
  %1288 = vmatpush1.msra.mxu0 0.0
  %1289 = vmatprep.subr.mxu0 0.0
  %1290 = vmatpush1.msra.mxu0 0.0
  %1291 = vmatprep.subr.mxu0 0.0
  %1292 = vmatpush1.msra.mxu0 0.0
  %1293 = vmatprep.subr.mxu0 0.0
  %1294 = vmatpush1.msra.mxu0 0.0
  %1295 = vmatprep.subr.mxu0 0.0
  %1296 = vmatpush1.msra.mxu0 0.0
  %1297 = vmatprep.subr.mxu0 0.0
  %1298 = vmatpush1.msra.mxu0 0.0
  %1299 = vmatprep.subr.mxu0 0.0
  %1300 = vmatpush1.msra.mxu0 0.0
  %1301 = vmatprep.subr.mxu0 0.0
  %1302 = vmatpush1.msra.mxu0 0.0
  %1303 = vmatprep.subr.mxu0 0.0
  %1304 = vmatpush1.msra.mxu0 0.0
  %1305 = vmatprep.subr.mxu0 0.0
  %1306 = vmatpush1.msra.mxu0 0.0
  %1307 = vmatprep.subr.mxu0 0.0
  %v1308 = vand.u32 %v922, 4294901760
  %v1309 = vsub.f32 %v922, %v1308
  %v1310 = vand.u32 %v1309, 4294901760
  %1311 = vmatpush1.msra.mxu0 %v1310
  %1312 = vmatprep.subr.mxu0 0.0
  %1313 = vmatpush2.msra.mxu0 0.0
  %1314 = vmatprep.subr.mxu0 0.0
  %1315 = vmatpush2.msra.mxu0 0.0
  %1316 = vmatprep.subr.mxu0 0.0
  %1317 = vmatpush2.msra.mxu0 0.0
  %1318 = vmatprep.subr.mxu0 0.0
  %1319 = vmatpush2.msra.mxu0 0.0
  %1320 = vmatprep.subr.mxu0 0.0
  %1321 = vmatpush2.msra.mxu0 0.0
  %1322 = vmatprep.subr.mxu0 0.0
  %1323 = vmatpush2.msra.mxu0 0.0
  %1324 = vmatprep.subr.mxu0 0.0
  %1325 = vmatpush2.msra.mxu0 0.0
  %1326 = vmatprep.subr.mxu0 0.0
  %1327 = vmatpush2.msra.mxu0 0.0
  %1328 = vmatprep.subr.mxu0 0.0
  %1329 = vmatpush2.msra.mxu0 0.0
  %1330 = vmatprep.subr.mxu0 0.0
  %1331 = vmatpush2.msra.mxu0 0.0
  %1332 = vmatprep.subr.mxu0 0.0
  %1333 = vmatpush2.msra.mxu0 0.0
  %1334 = vmatprep.subr.mxu0 0.0
  %1335 = vmatpush2.msra.mxu0 0.0
  %1336 = vmatprep.subr.mxu0 0.0
  %1337 = vmatpush2.msra.mxu0 0.0
  %1338 = vmatprep.subr.mxu0 0.0
  %1339 = vmatpush2.msra.mxu0 0.0
  %1340 = vmatprep.subr.mxu0 0.0
  %1341 = vmatpush2.msra.mxu0 0.0
  %1342 = vmatprep.subr.mxu0 0.0
  %1343 = vmatpush2.msra.mxu0 0.0
  %1344 = vmatprep.mubr.f32.mxu0 0.0
  %v1345 = vand.u32 %v941, 4294901760
  %1346 = vmatmul.mubr.f32.gmra.mxu0 %v1345
  %v1347 = vpop.f32.mrf.mxu0
  %v1348 = vadd.f32 %v1266, %v1347
  %v1349 = vpop.f32.mrf.mxu0
  %1350 = vmatprep.mubr.f32.mxu0 0.0
  %v1351 = vand.u32 %v944, 4294901760
  %1352 = vmatmul.mubr.f32.gmra.mxu0 %v1351
  %v1353 = vpop.f32.mrf.mxu0
  %v1354 = vadd.f32 %v1274, %v1353
  %v1355 = vpop.f32.mrf.mxu0
  %1356 = vdwg.mxu0
  %1357 = vmatprep.subr.mxu0 0.0
  %1358 = vmatpush1.msra.mxu0 0.0
  %1359 = vmatprep.subr.mxu0 0.0
  %1360 = vmatpush1.msra.mxu0 0.0
  %1361 = vmatprep.subr.mxu0 0.0
  %1362 = vmatpush1.msra.mxu0 0.0
  %1363 = vmatprep.subr.mxu0 0.0
  %1364 = vmatpush1.msra.mxu0 0.0
  %1365 = vmatprep.subr.mxu0 0.0
  %1366 = vmatpush1.msra.mxu0 0.0
  %1367 = vmatprep.subr.mxu0 0.0
  %1368 = vmatpush1.msra.mxu0 0.0
  %1369 = vmatprep.subr.mxu0 0.0
  %1370 = vmatpush1.msra.mxu0 0.0
  %1371 = vmatprep.subr.mxu0 0.0
  %1372 = vmatpush1.msra.mxu0 0.0
  %1373 = vmatprep.subr.mxu0 0.0
  %1374 = vmatpush1.msra.mxu0 0.0
  %1375 = vmatprep.subr.mxu0 0.0
  %1376 = vmatpush1.msra.mxu0 0.0
  %1377 = vmatprep.subr.mxu0 0.0
  %1378 = vmatpush1.msra.mxu0 0.0
  %1379 = vmatprep.subr.mxu0 0.0
  %1380 = vmatpush1.msra.mxu0 0.0
  %1381 = vmatprep.subr.mxu0 0.0
  %1382 = vmatpush1.msra.mxu0 0.0
  %1383 = vmatprep.subr.mxu0 0.0
  %1384 = vmatpush1.msra.mxu0 0.0
  %1385 = vmatprep.subr.mxu0 0.0
  %1386 = vmatpush1.msra.mxu0 0.0
  %1387 = vmatprep.subr.mxu0 0.0
  %v1388 = vand.u32 %v922, 4294901760
  %1389 = vmatpush1.msra.mxu0 %v1388
  %1390 = vmatprep.subr.mxu0 0.0
  %1391 = vmatpush2.msra.mxu0 0.0
  %1392 = vmatprep.subr.mxu0 0.0
  %1393 = vmatpush2.msra.mxu0 0.0
  %1394 = vmatprep.subr.mxu0 0.0
  %1395 = vmatpush2.msra.mxu0 0.0
  %1396 = vmatprep.subr.mxu0 0.0
  %1397 = vmatpush2.msra.mxu0 0.0
  %1398 = vmatprep.subr.mxu0 0.0
  %1399 = vmatpush2.msra.mxu0 0.0
  %1400 = vmatprep.subr.mxu0 0.0
  %1401 = vmatpush2.msra.mxu0 0.0
  %1402 = vmatprep.subr.mxu0 0.0
  %1403 = vmatpush2.msra.mxu0 0.0
  %1404 = vmatprep.subr.mxu0 0.0
  %1405 = vmatpush2.msra.mxu0 0.0
  %1406 = vmatprep.subr.mxu0 0.0
  %1407 = vmatpush2.msra.mxu0 0.0
  %1408 = vmatprep.subr.mxu0 0.0
  %1409 = vmatpush2.msra.mxu0 0.0
  %1410 = vmatprep.subr.mxu0 0.0
  %1411 = vmatpush2.msra.mxu0 0.0
  %1412 = vmatprep.subr.mxu0 0.0
  %1413 = vmatpush2.msra.mxu0 0.0
  %1414 = vmatprep.subr.mxu0 0.0
  %1415 = vmatpush2.msra.mxu0 0.0
  %1416 = vmatprep.subr.mxu0 0.0
  %1417 = vmatpush2.msra.mxu0 0.0
  %1418 = vmatprep.subr.mxu0 0.0
  %1419 = vmatpush2.msra.mxu0 0.0
  %1420 = vmatprep.subr.mxu0 0.0
  %1421 = vmatpush2.msra.mxu0 0.0
  %1422 = vmatprep.mubr.f32.mxu0 0.0
  %v1423 = vand.u32 %v941, 4294901760
  %1424 = vmatmul.mubr.f32.gmra.mxu0 %v1423
  %v1425 = vpop.f32.mrf.mxu0
  %v1426 = vadd.f32 %v1348, %v1425
  %v1427 = vpop.f32.mrf.mxu0
  %1428 = vmatprep.mubr.f32.mxu0 0.0
  %v1429 = vand.u32 %v944, 4294901760
  %1430 = vmatmul.mubr.f32.gmra.mxu0 %v1429
  %v1431 = vpop.f32.mrf.mxu0
  %v1432 = vadd.f32 %v1354, %v1431
  %v1433 = vpop.f32.mrf.mxu0
  %1434 = vdwg.mxu0
  %v1435 = vmax.f32 %v1426, 0.0
  %v1436 = vmax.f32 %v1432, 0.0
  %1438 = vset.pattern.permute.xlu0 0
  %1439 = vperm.xlu0 %1438, %v931
  %v1440 = vpop.permute.xlu0 %1439
  %1443 = vset.pattern.permute.xlu0 0
  %1444 = vperm.xlu0 %1443, %v932
  %v1445 = vpop.permute.xlu0 %1444
  %1448 = vrot.lane.b32.xlu0 %v922, 127
  %v1449 = vpop.permute.xlu0 %1448
  %v1452 = vsel %vm939, %v927, 0
  %v1455 = vsel %vm939, %v928, 0
  %1457 = vmatprep.subr.mxu0 0.0
  %1458 = vmatpush1.msra.mxu0 0.0
  %1459 = vmatprep.subr.mxu0 0.0
  %1460 = vmatpush1.msra.mxu0 0.0
  %1461 = vmatprep.subr.mxu0 0.0
  %1462 = vmatpush1.msra.mxu0 0.0
  %1463 = vmatprep.subr.mxu0 0.0
  %1464 = vmatpush1.msra.mxu0 0.0
  %1465 = vmatprep.subr.mxu0 0.0
  %1466 = vmatpush1.msra.mxu0 0.0
  %1467 = vmatprep.subr.mxu0 0.0
  %1468 = vmatpush1.msra.mxu0 0.0
  %1469 = vmatprep.subr.mxu0 0.0
  %1470 = vmatpush1.msra.mxu0 0.0
  %1471 = vmatprep.subr.mxu0 0.0
  %1472 = vmatpush1.msra.mxu0 0.0
  %1473 = vmatprep.subr.mxu0 0.0
  %1474 = vmatpush1.msra.mxu0 0.0
  %1475 = vmatprep.subr.mxu0 0.0
  %1476 = vmatpush1.msra.mxu0 0.0
  %1477 = vmatprep.subr.mxu0 0.0
  %1478 = vmatpush1.msra.mxu0 0.0
  %1479 = vmatprep.subr.mxu0 0.0
  %1480 = vmatpush1.msra.mxu0 0.0
  %1481 = vmatprep.subr.mxu0 0.0
  %1482 = vmatpush1.msra.mxu0 0.0
  %1483 = vmatprep.subr.mxu0 0.0
  %1484 = vmatpush1.msra.mxu0 0.0
  %1485 = vmatprep.subr.mxu0 0.0
  %1486 = vmatpush1.msra.mxu0 0.0
  %1487 = vmatprep.subr.mxu0 0.0
  %v1488 = vand.u32 %v1449, 4294901760
  %1489 = vmatpush1.msra.mxu0 %v1488
  %1490 = vmatprep.subr.mxu0 0.0
  %1491 = vmatpush2.msra.mxu0 0.0
  %1492 = vmatprep.subr.mxu0 0.0
  %1493 = vmatpush2.msra.mxu0 0.0
  %1494 = vmatprep.subr.mxu0 0.0
  %1495 = vmatpush2.msra.mxu0 0.0
  %1496 = vmatprep.subr.mxu0 0.0
  %1497 = vmatpush2.msra.mxu0 0.0
  %1498 = vmatprep.subr.mxu0 0.0
  %1499 = vmatpush2.msra.mxu0 0.0
  %1500 = vmatprep.subr.mxu0 0.0
  %1501 = vmatpush2.msra.mxu0 0.0
  %1502 = vmatprep.subr.mxu0 0.0
  %1503 = vmatpush2.msra.mxu0 0.0
  %1504 = vmatprep.subr.mxu0 0.0
  %1505 = vmatpush2.msra.mxu0 0.0
  %1506 = vmatprep.subr.mxu0 0.0
  %1507 = vmatpush2.msra.mxu0 0.0
  %1508 = vmatprep.subr.mxu0 0.0
  %1509 = vmatpush2.msra.mxu0 0.0
  %1510 = vmatprep.subr.mxu0 0.0
  %1511 = vmatpush2.msra.mxu0 0.0
  %1512 = vmatprep.subr.mxu0 0.0
  %1513 = vmatpush2.msra.mxu0 0.0
  %1514 = vmatprep.subr.mxu0 0.0
  %1515 = vmatpush2.msra.mxu0 0.0
  %1516 = vmatprep.subr.mxu0 0.0
  %1517 = vmatpush2.msra.mxu0 0.0
  %1518 = vmatprep.subr.mxu0 0.0
  %1519 = vmatpush2.msra.mxu0 0.0
  %1520 = vmatprep.subr.mxu0 0.0
  %1521 = vmatpush2.msra.mxu0 0.0
  %1522 = vmatprep.mubr.f32.mxu0 0.0
  %v1523 = vand.u32 %v1452, 4294901760
  %v1524 = vsub.f32 %v1452, %v1523
  %v1525 = vand.u32 %v1524, 4294901760
  %v1526 = vsub.f32 %v1524, %v1525
  %v1527 = vand.u32 %v1526, 4294901760
  %1528 = vmatmul.mubr.f32.gmra.mxu0 %v1527
  %v1529 = vpop.f32.mrf.mxu0
  %v1530 = vadd.f32 %v1440, %v1529
  %v1531 = vpop.f32.mrf.mxu0
  %1532 = vmatprep.mubr.f32.mxu0 0.0
  %v1533 = vand.u32 %v1455, 4294901760
  %v1534 = vsub.f32 %v1455, %v1533
  %v1535 = vand.u32 %v1534, 4294901760
  %v1536 = vsub.f32 %v1534, %v1535
  %v1537 = vand.u32 %v1536, 4294901760
  %1538 = vmatmul.mubr.f32.gmra.mxu0 %v1537
  %v1539 = vpop.f32.mrf.mxu0
  %v1540 = vadd.f32 %v1445, %v1539
  %v1541 = vpop.f32.mrf.mxu0
  %1542 = vdwg.mxu0
  %1543 = vmatprep.subr.mxu0 0.0
  %1544 = vmatpush1.msra.mxu0 0.0
  %1545 = vmatprep.subr.mxu0 0.0
  %1546 = vmatpush1.msra.mxu0 0.0
  %1547 = vmatprep.subr.mxu0 0.0
  %1548 = vmatpush1.msra.mxu0 0.0
  %1549 = vmatprep.subr.mxu0 0.0
  %1550 = vmatpush1.msra.mxu0 0.0
  %1551 = vmatprep.subr.mxu0 0.0
  %1552 = vmatpush1.msra.mxu0 0.0
  %1553 = vmatprep.subr.mxu0 0.0
  %1554 = vmatpush1.msra.mxu0 0.0
  %1555 = vmatprep.subr.mxu0 0.0
  %1556 = vmatpush1.msra.mxu0 0.0
  %1557 = vmatprep.subr.mxu0 0.0
  %1558 = vmatpush1.msra.mxu0 0.0
  %1559 = vmatprep.subr.mxu0 0.0
  %1560 = vmatpush1.msra.mxu0 0.0
  %1561 = vmatprep.subr.mxu0 0.0
  %1562 = vmatpush1.msra.mxu0 0.0
  %1563 = vmatprep.subr.mxu0 0.0
  %1564 = vmatpush1.msra.mxu0 0.0
  %1565 = vmatprep.subr.mxu0 0.0
  %1566 = vmatpush1.msra.mxu0 0.0
  %1567 = vmatprep.subr.mxu0 0.0
  %1568 = vmatpush1.msra.mxu0 0.0
  %1569 = vmatprep.subr.mxu0 0.0
  %1570 = vmatpush1.msra.mxu0 0.0
  %1571 = vmatprep.subr.mxu0 0.0
  %1572 = vmatpush1.msra.mxu0 0.0
  %1573 = vmatprep.subr.mxu0 0.0
  %v1574 = vand.u32 %v1449, 4294901760
  %v1575 = vsub.f32 %v1449, %v1574
  %v1576 = vand.u32 %v1575, 4294901760
  %v1577 = vsub.f32 %v1575, %v1576
  %v1578 = vand.u32 %v1577, 4294901760
  %1579 = vmatpush1.msra.mxu0 %v1578
  %1580 = vmatprep.subr.mxu0 0.0
  %1581 = vmatpush2.msra.mxu0 0.0
  %1582 = vmatprep.subr.mxu0 0.0
  %1583 = vmatpush2.msra.mxu0 0.0
  %1584 = vmatprep.subr.mxu0 0.0
  %1585 = vmatpush2.msra.mxu0 0.0
  %1586 = vmatprep.subr.mxu0 0.0
  %1587 = vmatpush2.msra.mxu0 0.0
  %1588 = vmatprep.subr.mxu0 0.0
  %1589 = vmatpush2.msra.mxu0 0.0
  %1590 = vmatprep.subr.mxu0 0.0
  %1591 = vmatpush2.msra.mxu0 0.0
  %1592 = vmatprep.subr.mxu0 0.0
  %1593 = vmatpush2.msra.mxu0 0.0
  %1594 = vmatprep.subr.mxu0 0.0
  %1595 = vmatpush2.msra.mxu0 0.0
  %1596 = vmatprep.subr.mxu0 0.0
  %1597 = vmatpush2.msra.mxu0 0.0
  %1598 = vmatprep.subr.mxu0 0.0
  %1599 = vmatpush2.msra.mxu0 0.0
  %1600 = vmatprep.subr.mxu0 0.0
  %1601 = vmatpush2.msra.mxu0 0.0
  %1602 = vmatprep.subr.mxu0 0.0
  %1603 = vmatpush2.msra.mxu0 0.0
  %1604 = vmatprep.subr.mxu0 0.0
  %1605 = vmatpush2.msra.mxu0 0.0
  %1606 = vmatprep.subr.mxu0 0.0
  %1607 = vmatpush2.msra.mxu0 0.0
  %1608 = vmatprep.subr.mxu0 0.0
  %1609 = vmatpush2.msra.mxu0 0.0
  %1610 = vmatprep.subr.mxu0 0.0
  %1611 = vmatpush2.msra.mxu0 0.0
  %1612 = vmatprep.mubr.f32.mxu0 0.0
  %v1613 = vand.u32 %v1452, 4294901760
  %1614 = vmatmul.mubr.f32.gmra.mxu0 %v1613
  %v1615 = vpop.f32.mrf.mxu0
  %v1616 = vadd.f32 %v1530, %v1615
  %v1617 = vpop.f32.mrf.mxu0
  %1618 = vmatprep.mubr.f32.mxu0 0.0
  %v1619 = vand.u32 %v1455, 4294901760
  %1620 = vmatmul.mubr.f32.gmra.mxu0 %v1619
  %v1621 = vpop.f32.mrf.mxu0
  %v1622 = vadd.f32 %v1540, %v1621
  %v1623 = vpop.f32.mrf.mxu0
  %1624 = vdwg.mxu0
  %1625 = vmatprep.subr.mxu0 0.0
  %1626 = vmatpush1.msra.mxu0 0.0
  %1627 = vmatprep.subr.mxu0 0.0
  %1628 = vmatpush1.msra.mxu0 0.0
  %1629 = vmatprep.subr.mxu0 0.0
  %1630 = vmatpush1.msra.mxu0 0.0
  %1631 = vmatprep.subr.mxu0 0.0
  %1632 = vmatpush1.msra.mxu0 0.0
  %1633 = vmatprep.subr.mxu0 0.0
  %1634 = vmatpush1.msra.mxu0 0.0
  %1635 = vmatprep.subr.mxu0 0.0
  %1636 = vmatpush1.msra.mxu0 0.0
  %1637 = vmatprep.subr.mxu0 0.0
  %1638 = vmatpush1.msra.mxu0 0.0
  %1639 = vmatprep.subr.mxu0 0.0
  %1640 = vmatpush1.msra.mxu0 0.0
  %1641 = vmatprep.subr.mxu0 0.0
  %1642 = vmatpush1.msra.mxu0 0.0
  %1643 = vmatprep.subr.mxu0 0.0
  %1644 = vmatpush1.msra.mxu0 0.0
  %1645 = vmatprep.subr.mxu0 0.0
  %1646 = vmatpush1.msra.mxu0 0.0
  %1647 = vmatprep.subr.mxu0 0.0
  %1648 = vmatpush1.msra.mxu0 0.0
  %1649 = vmatprep.subr.mxu0 0.0
  %1650 = vmatpush1.msra.mxu0 0.0
  %1651 = vmatprep.subr.mxu0 0.0
  %1652 = vmatpush1.msra.mxu0 0.0
  %1653 = vmatprep.subr.mxu0 0.0
  %1654 = vmatpush1.msra.mxu0 0.0
  %1655 = vmatprep.subr.mxu0 0.0
  %v1656 = vand.u32 %v1449, 4294901760
  %v1657 = vsub.f32 %v1449, %v1656
  %1658 = vmatpush1.msra.mxu0 %v1657
  %1659 = vmatprep.subr.mxu0 0.0
  %1660 = vmatpush2.msra.mxu0 0.0
  %1661 = vmatprep.subr.mxu0 0.0
  %1662 = vmatpush2.msra.mxu0 0.0
  %1663 = vmatprep.subr.mxu0 0.0
  %1664 = vmatpush2.msra.mxu0 0.0
  %1665 = vmatprep.subr.mxu0 0.0
  %1666 = vmatpush2.msra.mxu0 0.0
  %1667 = vmatprep.subr.mxu0 0.0
  %1668 = vmatpush2.msra.mxu0 0.0
  %1669 = vmatprep.subr.mxu0 0.0
  %1670 = vmatpush2.msra.mxu0 0.0
  %1671 = vmatprep.subr.mxu0 0.0
  %1672 = vmatpush2.msra.mxu0 0.0
  %1673 = vmatprep.subr.mxu0 0.0
  %1674 = vmatpush2.msra.mxu0 0.0
  %1675 = vmatprep.subr.mxu0 0.0
  %1676 = vmatpush2.msra.mxu0 0.0
  %1677 = vmatprep.subr.mxu0 0.0
  %1678 = vmatpush2.msra.mxu0 0.0
  %1679 = vmatprep.subr.mxu0 0.0
  %1680 = vmatpush2.msra.mxu0 0.0
  %1681 = vmatprep.subr.mxu0 0.0
  %1682 = vmatpush2.msra.mxu0 0.0
  %1683 = vmatprep.subr.mxu0 0.0
  %1684 = vmatpush2.msra.mxu0 0.0
  %1685 = vmatprep.subr.mxu0 0.0
  %1686 = vmatpush2.msra.mxu0 0.0
  %1687 = vmatprep.subr.mxu0 0.0
  %1688 = vmatpush2.msra.mxu0 0.0
  %1689 = vmatprep.subr.mxu0 0.0
  %1690 = vmatpush2.msra.mxu0 0.0
  %1691 = vmatprep.mubr.f32.mxu0 0.0
  %v1692 = vand.u32 %v1452, 4294901760
  %v1693 = vsub.f32 %v1452, %v1692
  %1694 = vmatmul.mubr.f32.gmra.mxu0 %v1693
  %v1695 = vpop.f32.mrf.mxu0
  %v1696 = vadd.f32 %v1616, %v1695
  %v1697 = vpop.f32.mrf.mxu0
  %1698 = vmatprep.mubr.f32.mxu0 0.0
  %v1699 = vand.u32 %v1455, 4294901760
  %v1700 = vsub.f32 %v1455, %v1699
  %1701 = vmatmul.mubr.f32.gmra.mxu0 %v1700
  %v1702 = vpop.f32.mrf.mxu0
  %v1703 = vadd.f32 %v1622, %v1702
  %v1704 = vpop.f32.mrf.mxu0
  %1705 = vdwg.mxu0
  %1706 = vmatprep.subr.mxu0 0.0
  %1707 = vmatpush1.msra.mxu0 0.0
  %1708 = vmatprep.subr.mxu0 0.0
  %1709 = vmatpush1.msra.mxu0 0.0
  %1710 = vmatprep.subr.mxu0 0.0
  %1711 = vmatpush1.msra.mxu0 0.0
  %1712 = vmatprep.subr.mxu0 0.0
  %1713 = vmatpush1.msra.mxu0 0.0
  %1714 = vmatprep.subr.mxu0 0.0
  %1715 = vmatpush1.msra.mxu0 0.0
  %1716 = vmatprep.subr.mxu0 0.0
  %1717 = vmatpush1.msra.mxu0 0.0
  %1718 = vmatprep.subr.mxu0 0.0
  %1719 = vmatpush1.msra.mxu0 0.0
  %1720 = vmatprep.subr.mxu0 0.0
  %1721 = vmatpush1.msra.mxu0 0.0
  %1722 = vmatprep.subr.mxu0 0.0
  %1723 = vmatpush1.msra.mxu0 0.0
  %1724 = vmatprep.subr.mxu0 0.0
  %1725 = vmatpush1.msra.mxu0 0.0
  %1726 = vmatprep.subr.mxu0 0.0
  %1727 = vmatpush1.msra.mxu0 0.0
  %1728 = vmatprep.subr.mxu0 0.0
  %1729 = vmatpush1.msra.mxu0 0.0
  %1730 = vmatprep.subr.mxu0 0.0
  %1731 = vmatpush1.msra.mxu0 0.0
  %1732 = vmatprep.subr.mxu0 0.0
  %1733 = vmatpush1.msra.mxu0 0.0
  %1734 = vmatprep.subr.mxu0 0.0
  %1735 = vmatpush1.msra.mxu0 0.0
  %1736 = vmatprep.subr.mxu0 0.0
  %v1737 = vand.u32 %v1449, 4294901760
  %1738 = vmatpush1.msra.mxu0 %v1737
  %1739 = vmatprep.subr.mxu0 0.0
  %1740 = vmatpush2.msra.mxu0 0.0
  %1741 = vmatprep.subr.mxu0 0.0
  %1742 = vmatpush2.msra.mxu0 0.0
  %1743 = vmatprep.subr.mxu0 0.0
  %1744 = vmatpush2.msra.mxu0 0.0
  %1745 = vmatprep.subr.mxu0 0.0
  %1746 = vmatpush2.msra.mxu0 0.0
  %1747 = vmatprep.subr.mxu0 0.0
  %1748 = vmatpush2.msra.mxu0 0.0
  %1749 = vmatprep.subr.mxu0 0.0
  %1750 = vmatpush2.msra.mxu0 0.0
  %1751 = vmatprep.subr.mxu0 0.0
  %1752 = vmatpush2.msra.mxu0 0.0
  %1753 = vmatprep.subr.mxu0 0.0
  %1754 = vmatpush2.msra.mxu0 0.0
  %1755 = vmatprep.subr.mxu0 0.0
  %1756 = vmatpush2.msra.mxu0 0.0
  %1757 = vmatprep.subr.mxu0 0.0
  %1758 = vmatpush2.msra.mxu0 0.0
  %1759 = vmatprep.subr.mxu0 0.0
  %1760 = vmatpush2.msra.mxu0 0.0
  %1761 = vmatprep.subr.mxu0 0.0
  %1762 = vmatpush2.msra.mxu0 0.0
  %1763 = vmatprep.subr.mxu0 0.0
  %1764 = vmatpush2.msra.mxu0 0.0
  %1765 = vmatprep.subr.mxu0 0.0
  %1766 = vmatpush2.msra.mxu0 0.0
  %1767 = vmatprep.subr.mxu0 0.0
  %1768 = vmatpush2.msra.mxu0 0.0
  %1769 = vmatprep.subr.mxu0 0.0
  %1770 = vmatpush2.msra.mxu0 0.0
  %1771 = vmatprep.mubr.f32.mxu0 0.0
  %v1772 = vand.u32 %v1452, 4294901760
  %v1773 = vsub.f32 %v1452, %v1772
  %v1774 = vand.u32 %v1773, 4294901760
  %1775 = vmatmul.mubr.f32.gmra.mxu0 %v1774
  %v1776 = vpop.f32.mrf.mxu0
  %v1777 = vadd.f32 %v1696, %v1776
  %v1778 = vpop.f32.mrf.mxu0
  %1779 = vmatprep.mubr.f32.mxu0 0.0
  %v1780 = vand.u32 %v1455, 4294901760
  %v1781 = vsub.f32 %v1455, %v1780
  %v1782 = vand.u32 %v1781, 4294901760
  %1783 = vmatmul.mubr.f32.gmra.mxu0 %v1782
  %v1784 = vpop.f32.mrf.mxu0
  %v1785 = vadd.f32 %v1703, %v1784
  %v1786 = vpop.f32.mrf.mxu0
  %1787 = vdwg.mxu0
  %1788 = vmatprep.subr.mxu0 0.0
  %1789 = vmatpush1.msra.mxu0 0.0
  %1790 = vmatprep.subr.mxu0 0.0
  %1791 = vmatpush1.msra.mxu0 0.0
  %1792 = vmatprep.subr.mxu0 0.0
  %1793 = vmatpush1.msra.mxu0 0.0
  %1794 = vmatprep.subr.mxu0 0.0
  %1795 = vmatpush1.msra.mxu0 0.0
  %1796 = vmatprep.subr.mxu0 0.0
  %1797 = vmatpush1.msra.mxu0 0.0
  %1798 = vmatprep.subr.mxu0 0.0
  %1799 = vmatpush1.msra.mxu0 0.0
  %1800 = vmatprep.subr.mxu0 0.0
  %1801 = vmatpush1.msra.mxu0 0.0
  %1802 = vmatprep.subr.mxu0 0.0
  %1803 = vmatpush1.msra.mxu0 0.0
  %1804 = vmatprep.subr.mxu0 0.0
  %1805 = vmatpush1.msra.mxu0 0.0
  %1806 = vmatprep.subr.mxu0 0.0
  %1807 = vmatpush1.msra.mxu0 0.0
  %1808 = vmatprep.subr.mxu0 0.0
  %1809 = vmatpush1.msra.mxu0 0.0
  %1810 = vmatprep.subr.mxu0 0.0
  %1811 = vmatpush1.msra.mxu0 0.0
  %1812 = vmatprep.subr.mxu0 0.0
  %1813 = vmatpush1.msra.mxu0 0.0
  %1814 = vmatprep.subr.mxu0 0.0
  %1815 = vmatpush1.msra.mxu0 0.0
  %1816 = vmatprep.subr.mxu0 0.0
  %1817 = vmatpush1.msra.mxu0 0.0
  %1818 = vmatprep.subr.mxu0 0.0
  %v1819 = vand.u32 %v1449, 4294901760
  %v1820 = vsub.f32 %v1449, %v1819
  %v1821 = vand.u32 %v1820, 4294901760
  %1822 = vmatpush1.msra.mxu0 %v1821
  %1823 = vmatprep.subr.mxu0 0.0
  %1824 = vmatpush2.msra.mxu0 0.0
  %1825 = vmatprep.subr.mxu0 0.0
  %1826 = vmatpush2.msra.mxu0 0.0
  %1827 = vmatprep.subr.mxu0 0.0
  %1828 = vmatpush2.msra.mxu0 0.0
  %1829 = vmatprep.subr.mxu0 0.0
  %1830 = vmatpush2.msra.mxu0 0.0
  %1831 = vmatprep.subr.mxu0 0.0
  %1832 = vmatpush2.msra.mxu0 0.0
  %1833 = vmatprep.subr.mxu0 0.0
  %1834 = vmatpush2.msra.mxu0 0.0
  %1835 = vmatprep.subr.mxu0 0.0
  %1836 = vmatpush2.msra.mxu0 0.0
  %1837 = vmatprep.subr.mxu0 0.0
  %1838 = vmatpush2.msra.mxu0 0.0
  %1839 = vmatprep.subr.mxu0 0.0
  %1840 = vmatpush2.msra.mxu0 0.0
  %1841 = vmatprep.subr.mxu0 0.0
  %1842 = vmatpush2.msra.mxu0 0.0
  %1843 = vmatprep.subr.mxu0 0.0
  %1844 = vmatpush2.msra.mxu0 0.0
  %1845 = vmatprep.subr.mxu0 0.0
  %1846 = vmatpush2.msra.mxu0 0.0
  %1847 = vmatprep.subr.mxu0 0.0
  %1848 = vmatpush2.msra.mxu0 0.0
  %1849 = vmatprep.subr.mxu0 0.0
  %1850 = vmatpush2.msra.mxu0 0.0
  %1851 = vmatprep.subr.mxu0 0.0
  %1852 = vmatpush2.msra.mxu0 0.0
  %1853 = vmatprep.subr.mxu0 0.0
  %1854 = vmatpush2.msra.mxu0 0.0
  %1855 = vmatprep.mubr.f32.mxu0 0.0
  %v1856 = vand.u32 %v1452, 4294901760
  %1857 = vmatmul.mubr.f32.gmra.mxu0 %v1856
  %v1858 = vpop.f32.mrf.mxu0
  %v1859 = vadd.f32 %v1777, %v1858
  %v1860 = vpop.f32.mrf.mxu0
  %1861 = vmatprep.mubr.f32.mxu0 0.0
  %v1862 = vand.u32 %v1455, 4294901760
  %1863 = vmatmul.mubr.f32.gmra.mxu0 %v1862
  %v1864 = vpop.f32.mrf.mxu0
  %v1865 = vadd.f32 %v1785, %v1864
  %v1866 = vpop.f32.mrf.mxu0
  %1867 = vdwg.mxu0
  %1868 = vmatprep.subr.mxu0 0.0
  %1869 = vmatpush1.msra.mxu0 0.0
  %1870 = vmatprep.subr.mxu0 0.0
  %1871 = vmatpush1.msra.mxu0 0.0
  %1872 = vmatprep.subr.mxu0 0.0
  %1873 = vmatpush1.msra.mxu0 0.0
  %1874 = vmatprep.subr.mxu0 0.0
  %1875 = vmatpush1.msra.mxu0 0.0
  %1876 = vmatprep.subr.mxu0 0.0
  %1877 = vmatpush1.msra.mxu0 0.0
  %1878 = vmatprep.subr.mxu0 0.0
  %1879 = vmatpush1.msra.mxu0 0.0
  %1880 = vmatprep.subr.mxu0 0.0
  %1881 = vmatpush1.msra.mxu0 0.0
  %1882 = vmatprep.subr.mxu0 0.0
  %1883 = vmatpush1.msra.mxu0 0.0
  %1884 = vmatprep.subr.mxu0 0.0
  %1885 = vmatpush1.msra.mxu0 0.0
  %1886 = vmatprep.subr.mxu0 0.0
  %1887 = vmatpush1.msra.mxu0 0.0
  %1888 = vmatprep.subr.mxu0 0.0
  %1889 = vmatpush1.msra.mxu0 0.0
  %1890 = vmatprep.subr.mxu0 0.0
  %1891 = vmatpush1.msra.mxu0 0.0
  %1892 = vmatprep.subr.mxu0 0.0
  %1893 = vmatpush1.msra.mxu0 0.0
  %1894 = vmatprep.subr.mxu0 0.0
  %1895 = vmatpush1.msra.mxu0 0.0
  %1896 = vmatprep.subr.mxu0 0.0
  %1897 = vmatpush1.msra.mxu0 0.0
  %1898 = vmatprep.subr.mxu0 0.0
  %v1899 = vand.u32 %v1449, 4294901760
  %1900 = vmatpush1.msra.mxu0 %v1899
  %1901 = vmatprep.subr.mxu0 0.0
  %1902 = vmatpush2.msra.mxu0 0.0
  %1903 = vmatprep.subr.mxu0 0.0
  %1904 = vmatpush2.msra.mxu0 0.0
  %1905 = vmatprep.subr.mxu0 0.0
  %1906 = vmatpush2.msra.mxu0 0.0
  %1907 = vmatprep.subr.mxu0 0.0
  %1908 = vmatpush2.msra.mxu0 0.0
  %1909 = vmatprep.subr.mxu0 0.0
  %1910 = vmatpush2.msra.mxu0 0.0
  %1911 = vmatprep.subr.mxu0 0.0
  %1912 = vmatpush2.msra.mxu0 0.0
  %1913 = vmatprep.subr.mxu0 0.0
  %1914 = vmatpush2.msra.mxu0 0.0
  %1915 = vmatprep.subr.mxu0 0.0
  %1916 = vmatpush2.msra.mxu0 0.0
  %1917 = vmatprep.subr.mxu0 0.0
  %1918 = vmatpush2.msra.mxu0 0.0
  %1919 = vmatprep.subr.mxu0 0.0
  %1920 = vmatpush2.msra.mxu0 0.0
  %1921 = vmatprep.subr.mxu0 0.0
  %1922 = vmatpush2.msra.mxu0 0.0
  %1923 = vmatprep.subr.mxu0 0.0
  %1924 = vmatpush2.msra.mxu0 0.0
  %1925 = vmatprep.subr.mxu0 0.0
  %1926 = vmatpush2.msra.mxu0 0.0
  %1927 = vmatprep.subr.mxu0 0.0
  %1928 = vmatpush2.msra.mxu0 0.0
  %1929 = vmatprep.subr.mxu0 0.0
  %1930 = vmatpush2.msra.mxu0 0.0
  %1931 = vmatprep.subr.mxu0 0.0
  %1932 = vmatpush2.msra.mxu0 0.0
  %1933 = vmatprep.mubr.f32.mxu0 0.0
  %v1934 = vand.u32 %v1452, 4294901760
  %1935 = vmatmul.mubr.f32.gmra.mxu0 %v1934
  %v1936 = vpop.f32.mrf.mxu0
  %v1937 = vadd.f32 %v1859, %v1936
  %v1938 = vpop.f32.mrf.mxu0
  %1939 = vmatprep.mubr.f32.mxu0 0.0
  %v1940 = vand.u32 %v1455, 4294901760
  %1941 = vmatmul.mubr.f32.gmra.mxu0 %v1940
  %v1942 = vpop.f32.mrf.mxu0
  %v1943 = vadd.f32 %v1865, %v1942
  %v1944 = vpop.f32.mrf.mxu0
  %1945 = vdwg.mxu0
  %v1946 = vmax.f32 %v1937, 0.0
  %v1947 = vmax.f32 %v1943, 0.0
  %vm1954 = vcmask 1046528
  %v1955 = vrot.slane %v933, 1
  %v1956 = vrot.slane %v936, 1
  %v1957 = vsel %vm1954, %v1955, %v1956
  %v1958 = vrot.slane %v934, 1
  %v1959 = vrot.slane %v937, 1
  %v1960 = vsel %vm1954, %v1958, %v1959
  %v1961 = vrot.slane %v935, 1
  %v1962 = vrot.slane %v938, 1
  %v1963 = vsel %vm1954, %v1961, %v1962
  %vm1967 = vcmask 72704
  %v1969 = vsel %vm1967, %v1946, 0
  %v1972 = vsel %vm1967, %v1947, 0
  %vm1974 = vcmask 1040384
  %v1975 = vsel %vm1974, %v1956, 0
  %v1977 = vsel %vm1974, %v1959, 0
  %v1979 = vsel %vm1974, %v1962, 0
  %1981 = vmatprep.subr.mxu0 0.0
  %1982 = vmatpush1.msra.mxu0 0.0
  %1983 = vmatprep.subr.mxu0 0.0
  %1984 = vmatpush1.msra.mxu0 0.0
  %1985 = vmatprep.subr.mxu0 0.0
  %1986 = vmatpush1.msra.mxu0 0.0
  %1987 = vmatprep.subr.mxu0 0.0
  %1988 = vmatpush1.msra.mxu0 0.0
  %1989 = vmatprep.subr.mxu0 0.0
  %1990 = vmatpush1.msra.mxu0 0.0
  %1991 = vmatprep.subr.mxu0 0.0
  %1992 = vmatpush1.msra.mxu0 0.0
  %1993 = vmatprep.subr.mxu0 0.0
  %1994 = vmatpush1.msra.mxu0 0.0
  %1995 = vmatprep.subr.mxu0 0.0
  %1996 = vmatpush1.msra.mxu0 0.0
  %1997 = vmatprep.subr.mxu0 0.0
  %1998 = vmatpush1.msra.mxu0 0.0
  %1999 = vmatprep.subr.mxu0 0.0
  %2000 = vmatpush1.msra.mxu0 0.0
  %2001 = vmatprep.subr.mxu0 0.0
  %2002 = vmatpush1.msra.mxu0 0.0
  %2003 = vmatprep.subr.mxu0 0.0
  %2004 = vmatpush1.msra.mxu0 0.0
  %2005 = vmatprep.subr.mxu0 0.0
  %2006 = vmatpush1.msra.mxu0 0.0
  %2007 = vmatprep.subr.mxu0 0.0
  %2008 = vmatpush1.msra.mxu0 0.0
  %v2009 = vand.u32 %v1977, 4294901760
  %2010 = vmatprep.subr.mxu0 %v2009
  %v2011 = vand.u32 %v1975, 4294901760
  %2012 = vmatpush1.msra.mxu0 %v2011
  %v2013 = vand.u32 %v1960, 4294901760
  %2014 = vmatprep.subr.mxu0 %v2013
  %v2015 = vand.u32 %v1957, 4294901760
  %2016 = vmatpush1.msra.mxu0 %v2015
  %2017 = vmatprep.subr.mxu0 0.0
  %2018 = vmatpush2.msra.mxu0 0.0
  %2019 = vmatprep.subr.mxu0 0.0
  %2020 = vmatpush2.msra.mxu0 0.0
  %2021 = vmatprep.subr.mxu0 0.0
  %2022 = vmatpush2.msra.mxu0 0.0
  %2023 = vmatprep.subr.mxu0 0.0
  %2024 = vmatpush2.msra.mxu0 0.0
  %2025 = vmatprep.subr.mxu0 0.0
  %2026 = vmatpush2.msra.mxu0 0.0
  %2027 = vmatprep.subr.mxu0 0.0
  %2028 = vmatpush2.msra.mxu0 0.0
  %2029 = vmatprep.subr.mxu0 0.0
  %2030 = vmatpush2.msra.mxu0 0.0
  %2031 = vmatprep.subr.mxu0 0.0
  %2032 = vmatpush2.msra.mxu0 0.0
  %2033 = vmatprep.subr.mxu0 0.0
  %2034 = vmatpush2.msra.mxu0 0.0
  %2035 = vmatprep.subr.mxu0 0.0
  %2036 = vmatpush2.msra.mxu0 0.0
  %2037 = vmatprep.subr.mxu0 0.0
  %2038 = vmatpush2.msra.mxu0 0.0
  %2039 = vmatprep.subr.mxu0 0.0
  %2040 = vmatpush2.msra.mxu0 0.0
  %2041 = vmatprep.subr.mxu0 0.0
  %2042 = vmatpush2.msra.mxu0 0.0
  %2043 = vmatprep.subr.mxu0 0.0
  %2044 = vmatpush2.msra.mxu0 0.0
  %2045 = vmatprep.subr.mxu0 0.0
  %2046 = vmatpush2.msra.mxu0 0.0
  %2047 = vmatprep.subr.mxu0 0.0
  %2048 = vmatpush2.msra.mxu0 0.0
  %2049 = vmatprep.mubr.f32.mxu0 0.0
  %v2050 = vand.u32 %v1969, 4294901760
  %v2051 = vsub.f32 %v1969, %v2050
  %v2052 = vand.u32 %v2051, 4294901760
  %v2053 = vsub.f32 %v2051, %v2052
  %v2054 = vand.u32 %v2053, 4294901760
  %2055 = vmatmul.mubr.f32.gmra.mxu0 %v2054
  %v2056 = vpop.f32.mrf.mxu0
  %v2057 = vadd.f32 0.0, %v2056
  %v2058 = vpop.f32.mrf.mxu0
  %v2059 = vadd.f32 0.0, %v2058
  %2060 = vmatprep.mubr.f32.mxu0 0.0
  %v2061 = vand.u32 %v1972, 4294901760
  %v2062 = vsub.f32 %v1972, %v2061
  %v2063 = vand.u32 %v2062, 4294901760
  %v2064 = vsub.f32 %v2062, %v2063
  %v2065 = vand.u32 %v2064, 4294901760
  %2066 = vmatmul.mubr.f32.gmra.mxu0 %v2065
  %v2067 = vpop.f32.mrf.mxu0
  %v2068 = vadd.f32 0.0, %v2067
  %v2069 = vpop.f32.mrf.mxu0
  %v2070 = vadd.f32 0.0, %v2069
  %2071 = vdwg.mxu0
  %2072 = vmatprep.subr.mxu0 0.0
  %2073 = vmatpush1.msra.mxu0 0.0
  %2074 = vmatprep.subr.mxu0 0.0
  %2075 = vmatpush1.msra.mxu0 0.0
  %2076 = vmatprep.subr.mxu0 0.0
  %2077 = vmatpush1.msra.mxu0 0.0
  %2078 = vmatprep.subr.mxu0 0.0
  %2079 = vmatpush1.msra.mxu0 0.0
  %2080 = vmatprep.subr.mxu0 0.0
  %2081 = vmatpush1.msra.mxu0 0.0
  %2082 = vmatprep.subr.mxu0 0.0
  %2083 = vmatpush1.msra.mxu0 0.0
  %2084 = vmatprep.subr.mxu0 0.0
  %2085 = vmatpush1.msra.mxu0 0.0
  %2086 = vmatprep.subr.mxu0 0.0
  %2087 = vmatpush1.msra.mxu0 0.0
  %2088 = vmatprep.subr.mxu0 0.0
  %2089 = vmatpush1.msra.mxu0 0.0
  %2090 = vmatprep.subr.mxu0 0.0
  %2091 = vmatpush1.msra.mxu0 0.0
  %2092 = vmatprep.subr.mxu0 0.0
  %2093 = vmatpush1.msra.mxu0 0.0
  %2094 = vmatprep.subr.mxu0 0.0
  %2095 = vmatpush1.msra.mxu0 0.0
  %2096 = vmatprep.subr.mxu0 0.0
  %2097 = vmatpush1.msra.mxu0 0.0
  %2098 = vmatprep.subr.mxu0 0.0
  %2099 = vmatpush1.msra.mxu0 0.0
  %v2100 = vand.u32 %v1977, 4294901760
  %v2101 = vsub.f32 %v1977, %v2100
  %v2102 = vand.u32 %v2101, 4294901760
  %v2103 = vsub.f32 %v2101, %v2102
  %v2104 = vand.u32 %v2103, 4294901760
  %2105 = vmatprep.subr.mxu0 %v2104
  %v2106 = vand.u32 %v1975, 4294901760
  %v2107 = vsub.f32 %v1975, %v2106
  %v2108 = vand.u32 %v2107, 4294901760
  %v2109 = vsub.f32 %v2107, %v2108
  %v2110 = vand.u32 %v2109, 4294901760
  %2111 = vmatpush1.msra.mxu0 %v2110
  %v2112 = vand.u32 %v1960, 4294901760
  %v2113 = vsub.f32 %v1960, %v2112
  %v2114 = vand.u32 %v2113, 4294901760
  %v2115 = vsub.f32 %v2113, %v2114
  %v2116 = vand.u32 %v2115, 4294901760
  %2117 = vmatprep.subr.mxu0 %v2116
  %v2118 = vand.u32 %v1957, 4294901760
  %v2119 = vsub.f32 %v1957, %v2118
  %v2120 = vand.u32 %v2119, 4294901760
  %v2121 = vsub.f32 %v2119, %v2120
  %v2122 = vand.u32 %v2121, 4294901760
  %2123 = vmatpush1.msra.mxu0 %v2122
  %2124 = vmatprep.subr.mxu0 0.0
  %2125 = vmatpush2.msra.mxu0 0.0
  %2126 = vmatprep.subr.mxu0 0.0
  %2127 = vmatpush2.msra.mxu0 0.0
  %2128 = vmatprep.subr.mxu0 0.0
  %2129 = vmatpush2.msra.mxu0 0.0
  %2130 = vmatprep.subr.mxu0 0.0
  %2131 = vmatpush2.msra.mxu0 0.0
  %2132 = vmatprep.subr.mxu0 0.0
  %2133 = vmatpush2.msra.mxu0 0.0
  %2134 = vmatprep.subr.mxu0 0.0
  %2135 = vmatpush2.msra.mxu0 0.0
  %2136 = vmatprep.subr.mxu0 0.0
  %2137 = vmatpush2.msra.mxu0 0.0
  %2138 = vmatprep.subr.mxu0 0.0
  %2139 = vmatpush2.msra.mxu0 0.0
  %2140 = vmatprep.subr.mxu0 0.0
  %2141 = vmatpush2.msra.mxu0 0.0
  %2142 = vmatprep.subr.mxu0 0.0
  %2143 = vmatpush2.msra.mxu0 0.0
  %2144 = vmatprep.subr.mxu0 0.0
  %2145 = vmatpush2.msra.mxu0 0.0
  %2146 = vmatprep.subr.mxu0 0.0
  %2147 = vmatpush2.msra.mxu0 0.0
  %2148 = vmatprep.subr.mxu0 0.0
  %2149 = vmatpush2.msra.mxu0 0.0
  %2150 = vmatprep.subr.mxu0 0.0
  %2151 = vmatpush2.msra.mxu0 0.0
  %2152 = vmatprep.subr.mxu0 0.0
  %2153 = vmatpush2.msra.mxu0 0.0
  %2154 = vmatprep.subr.mxu0 0.0
  %2155 = vmatpush2.msra.mxu0 0.0
  %2156 = vmatprep.mubr.f32.mxu0 0.0
  %v2157 = vand.u32 %v1969, 4294901760
  %2158 = vmatmul.mubr.f32.gmra.mxu0 %v2157
  %v2159 = vpop.f32.mrf.mxu0
  %v2160 = vadd.f32 %v2057, %v2159
  %v2161 = vpop.f32.mrf.mxu0
  %v2162 = vadd.f32 %v2059, %v2161
  %2163 = vmatprep.mubr.f32.mxu0 0.0
  %v2164 = vand.u32 %v1972, 4294901760
  %2165 = vmatmul.mubr.f32.gmra.mxu0 %v2164
  %v2166 = vpop.f32.mrf.mxu0
  %v2167 = vadd.f32 %v2068, %v2166
  %v2168 = vpop.f32.mrf.mxu0
  %v2169 = vadd.f32 %v2070, %v2168
  %2170 = vdwg.mxu0
  %2171 = vmatprep.subr.mxu0 0.0
  %2172 = vmatpush1.msra.mxu0 0.0
  %2173 = vmatprep.subr.mxu0 0.0
  %2174 = vmatpush1.msra.mxu0 0.0
  %2175 = vmatprep.subr.mxu0 0.0
  %2176 = vmatpush1.msra.mxu0 0.0
  %2177 = vmatprep.subr.mxu0 0.0
  %2178 = vmatpush1.msra.mxu0 0.0
  %2179 = vmatprep.subr.mxu0 0.0
  %2180 = vmatpush1.msra.mxu0 0.0
  %2181 = vmatprep.subr.mxu0 0.0
  %2182 = vmatpush1.msra.mxu0 0.0
  %2183 = vmatprep.subr.mxu0 0.0
  %2184 = vmatpush1.msra.mxu0 0.0
  %2185 = vmatprep.subr.mxu0 0.0
  %2186 = vmatpush1.msra.mxu0 0.0
  %2187 = vmatprep.subr.mxu0 0.0
  %2188 = vmatpush1.msra.mxu0 0.0
  %2189 = vmatprep.subr.mxu0 0.0
  %2190 = vmatpush1.msra.mxu0 0.0
  %2191 = vmatprep.subr.mxu0 0.0
  %2192 = vmatpush1.msra.mxu0 0.0
  %2193 = vmatprep.subr.mxu0 0.0
  %2194 = vmatpush1.msra.mxu0 0.0
  %2195 = vmatprep.subr.mxu0 0.0
  %2196 = vmatpush1.msra.mxu0 0.0
  %2197 = vmatprep.subr.mxu0 0.0
  %2198 = vmatpush1.msra.mxu0 0.0
  %v2199 = vand.u32 %v1977, 4294901760
  %v2200 = vsub.f32 %v1977, %v2199
  %2201 = vmatprep.subr.mxu0 %v2200
  %v2202 = vand.u32 %v1975, 4294901760
  %v2203 = vsub.f32 %v1975, %v2202
  %2204 = vmatpush1.msra.mxu0 %v2203
  %v2205 = vand.u32 %v1960, 4294901760
  %v2206 = vsub.f32 %v1960, %v2205
  %2207 = vmatprep.subr.mxu0 %v2206
  %v2208 = vand.u32 %v1957, 4294901760
  %v2209 = vsub.f32 %v1957, %v2208
  %2210 = vmatpush1.msra.mxu0 %v2209
  %2211 = vmatprep.subr.mxu0 0.0
  %2212 = vmatpush2.msra.mxu0 0.0
  %2213 = vmatprep.subr.mxu0 0.0
  %2214 = vmatpush2.msra.mxu0 0.0
  %2215 = vmatprep.subr.mxu0 0.0
  %2216 = vmatpush2.msra.mxu0 0.0
  %2217 = vmatprep.subr.mxu0 0.0
  %2218 = vmatpush2.msra.mxu0 0.0
  %2219 = vmatprep.subr.mxu0 0.0
  %2220 = vmatpush2.msra.mxu0 0.0
  %2221 = vmatprep.subr.mxu0 0.0
  %2222 = vmatpush2.msra.mxu0 0.0
  %2223 = vmatprep.subr.mxu0 0.0
  %2224 = vmatpush2.msra.mxu0 0.0
  %2225 = vmatprep.subr.mxu0 0.0
  %2226 = vmatpush2.msra.mxu0 0.0
  %2227 = vmatprep.subr.mxu0 0.0
  %2228 = vmatpush2.msra.mxu0 0.0
  %2229 = vmatprep.subr.mxu0 0.0
  %2230 = vmatpush2.msra.mxu0 0.0
  %2231 = vmatprep.subr.mxu0 0.0
  %2232 = vmatpush2.msra.mxu0 0.0
  %2233 = vmatprep.subr.mxu0 0.0
  %2234 = vmatpush2.msra.mxu0 0.0
  %2235 = vmatprep.subr.mxu0 0.0
  %2236 = vmatpush2.msra.mxu0 0.0
  %2237 = vmatprep.subr.mxu0 0.0
  %2238 = vmatpush2.msra.mxu0 0.0
  %2239 = vmatprep.subr.mxu0 0.0
  %2240 = vmatpush2.msra.mxu0 0.0
  %2241 = vmatprep.subr.mxu0 0.0
  %2242 = vmatpush2.msra.mxu0 0.0
  %2243 = vmatprep.mubr.f32.mxu0 0.0
  %v2244 = vand.u32 %v1969, 4294901760
  %v2245 = vsub.f32 %v1969, %v2244
  %2246 = vmatmul.mubr.f32.gmra.mxu0 %v2245
  %v2247 = vpop.f32.mrf.mxu0
  %v2248 = vadd.f32 %v2160, %v2247
  %v2249 = vpop.f32.mrf.mxu0
  %v2250 = vadd.f32 %v2162, %v2249
  %2251 = vmatprep.mubr.f32.mxu0 0.0
  %v2252 = vand.u32 %v1972, 4294901760
  %v2253 = vsub.f32 %v1972, %v2252
  %2254 = vmatmul.mubr.f32.gmra.mxu0 %v2253
  %v2255 = vpop.f32.mrf.mxu0
  %v2256 = vadd.f32 %v2167, %v2255
  %v2257 = vpop.f32.mrf.mxu0
  %v2258 = vadd.f32 %v2169, %v2257
  %2259 = vdwg.mxu0
  %2260 = vmatprep.subr.mxu0 0.0
  %2261 = vmatpush1.msra.mxu0 0.0
  %2262 = vmatprep.subr.mxu0 0.0
  %2263 = vmatpush1.msra.mxu0 0.0
  %2264 = vmatprep.subr.mxu0 0.0
  %2265 = vmatpush1.msra.mxu0 0.0
  %2266 = vmatprep.subr.mxu0 0.0
  %2267 = vmatpush1.msra.mxu0 0.0
  %2268 = vmatprep.subr.mxu0 0.0
  %2269 = vmatpush1.msra.mxu0 0.0
  %2270 = vmatprep.subr.mxu0 0.0
  %2271 = vmatpush1.msra.mxu0 0.0
  %2272 = vmatprep.subr.mxu0 0.0
  %2273 = vmatpush1.msra.mxu0 0.0
  %2274 = vmatprep.subr.mxu0 0.0
  %2275 = vmatpush1.msra.mxu0 0.0
  %2276 = vmatprep.subr.mxu0 0.0
  %2277 = vmatpush1.msra.mxu0 0.0
  %2278 = vmatprep.subr.mxu0 0.0
  %2279 = vmatpush1.msra.mxu0 0.0
  %2280 = vmatprep.subr.mxu0 0.0
  %2281 = vmatpush1.msra.mxu0 0.0
  %2282 = vmatprep.subr.mxu0 0.0
  %2283 = vmatpush1.msra.mxu0 0.0
  %2284 = vmatprep.subr.mxu0 0.0
  %2285 = vmatpush1.msra.mxu0 0.0
  %2286 = vmatprep.subr.mxu0 0.0
  %2287 = vmatpush1.msra.mxu0 0.0
  %v2288 = vand.u32 %v1977, 4294901760
  %2289 = vmatprep.subr.mxu0 %v2288
  %v2290 = vand.u32 %v1975, 4294901760
  %2291 = vmatpush1.msra.mxu0 %v2290
  %v2292 = vand.u32 %v1960, 4294901760
  %2293 = vmatprep.subr.mxu0 %v2292
  %v2294 = vand.u32 %v1957, 4294901760
  %2295 = vmatpush1.msra.mxu0 %v2294
  %2296 = vmatprep.subr.mxu0 0.0
  %2297 = vmatpush2.msra.mxu0 0.0
  %2298 = vmatprep.subr.mxu0 0.0
  %2299 = vmatpush2.msra.mxu0 0.0
  %2300 = vmatprep.subr.mxu0 0.0
  %2301 = vmatpush2.msra.mxu0 0.0
  %2302 = vmatprep.subr.mxu0 0.0
  %2303 = vmatpush2.msra.mxu0 0.0
  %2304 = vmatprep.subr.mxu0 0.0
  %2305 = vmatpush2.msra.mxu0 0.0
  %2306 = vmatprep.subr.mxu0 0.0
  %2307 = vmatpush2.msra.mxu0 0.0
  %2308 = vmatprep.subr.mxu0 0.0
  %2309 = vmatpush2.msra.mxu0 0.0
  %2310 = vmatprep.subr.mxu0 0.0
  %2311 = vmatpush2.msra.mxu0 0.0
  %2312 = vmatprep.subr.mxu0 0.0
  %2313 = vmatpush2.msra.mxu0 0.0
  %2314 = vmatprep.subr.mxu0 0.0
  %2315 = vmatpush2.msra.mxu0 0.0
  %2316 = vmatprep.subr.mxu0 0.0
  %2317 = vmatpush2.msra.mxu0 0.0
  %2318 = vmatprep.subr.mxu0 0.0
  %2319 = vmatpush2.msra.mxu0 0.0
  %2320 = vmatprep.subr.mxu0 0.0
  %2321 = vmatpush2.msra.mxu0 0.0
  %2322 = vmatprep.subr.mxu0 0.0
  %2323 = vmatpush2.msra.mxu0 0.0
  %2324 = vmatprep.subr.mxu0 0.0
  %2325 = vmatpush2.msra.mxu0 0.0
  %2326 = vmatprep.subr.mxu0 0.0
  %2327 = vmatpush2.msra.mxu0 0.0
  %2328 = vmatprep.mubr.f32.mxu0 0.0
  %v2329 = vand.u32 %v1969, 4294901760
  %v2330 = vsub.f32 %v1969, %v2329
  %v2331 = vand.u32 %v2330, 4294901760
  %2332 = vmatmul.mubr.f32.gmra.mxu0 %v2331
  %v2333 = vpop.f32.mrf.mxu0
  %v2334 = vadd.f32 %v2248, %v2333
  %v2335 = vpop.f32.mrf.mxu0
  %v2336 = vadd.f32 %v2250, %v2335
  %2337 = vmatprep.mubr.f32.mxu0 0.0
  %v2338 = vand.u32 %v1972, 4294901760
  %v2339 = vsub.f32 %v1972, %v2338
  %v2340 = vand.u32 %v2339, 4294901760
  %2341 = vmatmul.mubr.f32.gmra.mxu0 %v2340
  %v2342 = vpop.f32.mrf.mxu0
  %v2343 = vadd.f32 %v2256, %v2342
  %v2344 = vpop.f32.mrf.mxu0
  %v2345 = vadd.f32 %v2258, %v2344
  %2346 = vdwg.mxu0
  %2347 = vmatprep.subr.mxu0 0.0
  %2348 = vmatpush1.msra.mxu0 0.0
  %2349 = vmatprep.subr.mxu0 0.0
  %2350 = vmatpush1.msra.mxu0 0.0
  %2351 = vmatprep.subr.mxu0 0.0
  %2352 = vmatpush1.msra.mxu0 0.0
  %2353 = vmatprep.subr.mxu0 0.0
  %2354 = vmatpush1.msra.mxu0 0.0
  %2355 = vmatprep.subr.mxu0 0.0
  %2356 = vmatpush1.msra.mxu0 0.0
  %2357 = vmatprep.subr.mxu0 0.0
  %2358 = vmatpush1.msra.mxu0 0.0
  %2359 = vmatprep.subr.mxu0 0.0
  %2360 = vmatpush1.msra.mxu0 0.0
  %2361 = vmatprep.subr.mxu0 0.0
  %2362 = vmatpush1.msra.mxu0 0.0
  %2363 = vmatprep.subr.mxu0 0.0
  %2364 = vmatpush1.msra.mxu0 0.0
  %2365 = vmatprep.subr.mxu0 0.0
  %2366 = vmatpush1.msra.mxu0 0.0
  %2367 = vmatprep.subr.mxu0 0.0
  %2368 = vmatpush1.msra.mxu0 0.0
  %2369 = vmatprep.subr.mxu0 0.0
  %2370 = vmatpush1.msra.mxu0 0.0
  %2371 = vmatprep.subr.mxu0 0.0
  %2372 = vmatpush1.msra.mxu0 0.0
  %2373 = vmatprep.subr.mxu0 0.0
  %2374 = vmatpush1.msra.mxu0 0.0
  %v2375 = vand.u32 %v1977, 4294901760
  %v2376 = vsub.f32 %v1977, %v2375
  %v2377 = vand.u32 %v2376, 4294901760
  %2378 = vmatprep.subr.mxu0 %v2377
  %v2379 = vand.u32 %v1975, 4294901760
  %v2380 = vsub.f32 %v1975, %v2379
  %v2381 = vand.u32 %v2380, 4294901760
  %2382 = vmatpush1.msra.mxu0 %v2381
  %v2383 = vand.u32 %v1960, 4294901760
  %v2384 = vsub.f32 %v1960, %v2383
  %v2385 = vand.u32 %v2384, 4294901760
  %2386 = vmatprep.subr.mxu0 %v2385
  %v2387 = vand.u32 %v1957, 4294901760
  %v2388 = vsub.f32 %v1957, %v2387
  %v2389 = vand.u32 %v2388, 4294901760
  %2390 = vmatpush1.msra.mxu0 %v2389
  %2391 = vmatprep.subr.mxu0 0.0
  %2392 = vmatpush2.msra.mxu0 0.0
  %2393 = vmatprep.subr.mxu0 0.0
  %2394 = vmatpush2.msra.mxu0 0.0
  %2395 = vmatprep.subr.mxu0 0.0
  %2396 = vmatpush2.msra.mxu0 0.0
  %2397 = vmatprep.subr.mxu0 0.0
  %2398 = vmatpush2.msra.mxu0 0.0
  %2399 = vmatprep.subr.mxu0 0.0
  %2400 = vmatpush2.msra.mxu0 0.0
  %2401 = vmatprep.subr.mxu0 0.0
  %2402 = vmatpush2.msra.mxu0 0.0
  %2403 = vmatprep.subr.mxu0 0.0
  %2404 = vmatpush2.msra.mxu0 0.0
  %2405 = vmatprep.subr.mxu0 0.0
  %2406 = vmatpush2.msra.mxu0 0.0
  %2407 = vmatprep.subr.mxu0 0.0
  %2408 = vmatpush2.msra.mxu0 0.0
  %2409 = vmatprep.subr.mxu0 0.0
  %2410 = vmatpush2.msra.mxu0 0.0
  %2411 = vmatprep.subr.mxu0 0.0
  %2412 = vmatpush2.msra.mxu0 0.0
  %2413 = vmatprep.subr.mxu0 0.0
  %2414 = vmatpush2.msra.mxu0 0.0
  %2415 = vmatprep.subr.mxu0 0.0
  %2416 = vmatpush2.msra.mxu0 0.0
  %2417 = vmatprep.subr.mxu0 0.0
  %2418 = vmatpush2.msra.mxu0 0.0
  %2419 = vmatprep.subr.mxu0 0.0
  %2420 = vmatpush2.msra.mxu0 0.0
  %2421 = vmatprep.subr.mxu0 0.0
  %2422 = vmatpush2.msra.mxu0 0.0
  %2423 = vmatprep.mubr.f32.mxu0 0.0
  %v2424 = vand.u32 %v1969, 4294901760
  %2425 = vmatmul.mubr.f32.gmra.mxu0 %v2424
  %v2426 = vpop.f32.mrf.mxu0
  %v2427 = vadd.f32 %v2334, %v2426
  %v2428 = vpop.f32.mrf.mxu0
  %v2429 = vadd.f32 %v2336, %v2428
  %2430 = vmatprep.mubr.f32.mxu0 0.0
  %v2431 = vand.u32 %v1972, 4294901760
  %2432 = vmatmul.mubr.f32.gmra.mxu0 %v2431
  %v2433 = vpop.f32.mrf.mxu0
  %v2434 = vadd.f32 %v2343, %v2433
  %v2435 = vpop.f32.mrf.mxu0
  %v2436 = vadd.f32 %v2345, %v2435
  %2437 = vdwg.mxu0
  %2438 = vmatprep.subr.mxu0 0.0
  %2439 = vmatpush1.msra.mxu0 0.0
  %2440 = vmatprep.subr.mxu0 0.0
  %2441 = vmatpush1.msra.mxu0 0.0
  %2442 = vmatprep.subr.mxu0 0.0
  %2443 = vmatpush1.msra.mxu0 0.0
  %2444 = vmatprep.subr.mxu0 0.0
  %2445 = vmatpush1.msra.mxu0 0.0
  %2446 = vmatprep.subr.mxu0 0.0
  %2447 = vmatpush1.msra.mxu0 0.0
  %2448 = vmatprep.subr.mxu0 0.0
  %2449 = vmatpush1.msra.mxu0 0.0
  %2450 = vmatprep.subr.mxu0 0.0
  %2451 = vmatpush1.msra.mxu0 0.0
  %2452 = vmatprep.subr.mxu0 0.0
  %2453 = vmatpush1.msra.mxu0 0.0
  %2454 = vmatprep.subr.mxu0 0.0
  %2455 = vmatpush1.msra.mxu0 0.0
  %2456 = vmatprep.subr.mxu0 0.0
  %2457 = vmatpush1.msra.mxu0 0.0
  %2458 = vmatprep.subr.mxu0 0.0
  %2459 = vmatpush1.msra.mxu0 0.0
  %2460 = vmatprep.subr.mxu0 0.0
  %2461 = vmatpush1.msra.mxu0 0.0
  %2462 = vmatprep.subr.mxu0 0.0
  %2463 = vmatpush1.msra.mxu0 0.0
  %2464 = vmatprep.subr.mxu0 0.0
  %2465 = vmatpush1.msra.mxu0 0.0
  %v2466 = vand.u32 %v1977, 4294901760
  %2467 = vmatprep.subr.mxu0 %v2466
  %v2468 = vand.u32 %v1975, 4294901760
  %2469 = vmatpush1.msra.mxu0 %v2468
  %v2470 = vand.u32 %v1960, 4294901760
  %2471 = vmatprep.subr.mxu0 %v2470
  %v2472 = vand.u32 %v1957, 4294901760
  %2473 = vmatpush1.msra.mxu0 %v2472
  %2474 = vmatprep.subr.mxu0 0.0
  %2475 = vmatpush2.msra.mxu0 0.0
  %2476 = vmatprep.subr.mxu0 0.0
  %2477 = vmatpush2.msra.mxu0 0.0
  %2478 = vmatprep.subr.mxu0 0.0
  %2479 = vmatpush2.msra.mxu0 0.0
  %2480 = vmatprep.subr.mxu0 0.0
  %2481 = vmatpush2.msra.mxu0 0.0
  %2482 = vmatprep.subr.mxu0 0.0
  %2483 = vmatpush2.msra.mxu0 0.0
  %2484 = vmatprep.subr.mxu0 0.0
  %2485 = vmatpush2.msra.mxu0 0.0
  %2486 = vmatprep.subr.mxu0 0.0
  %2487 = vmatpush2.msra.mxu0 0.0
  %2488 = vmatprep.subr.mxu0 0.0
  %2489 = vmatpush2.msra.mxu0 0.0
  %2490 = vmatprep.subr.mxu0 0.0
  %2491 = vmatpush2.msra.mxu0 0.0
  %2492 = vmatprep.subr.mxu0 0.0
  %2493 = vmatpush2.msra.mxu0 0.0
  %2494 = vmatprep.subr.mxu0 0.0
  %2495 = vmatpush2.msra.mxu0 0.0
  %2496 = vmatprep.subr.mxu0 0.0
  %2497 = vmatpush2.msra.mxu0 0.0
  %2498 = vmatprep.subr.mxu0 0.0
  %2499 = vmatpush2.msra.mxu0 0.0
  %2500 = vmatprep.subr.mxu0 0.0
  %2501 = vmatpush2.msra.mxu0 0.0
  %2502 = vmatprep.subr.mxu0 0.0
  %2503 = vmatpush2.msra.mxu0 0.0
  %2504 = vmatprep.subr.mxu0 0.0
  %2505 = vmatpush2.msra.mxu0 0.0
  %2506 = vmatprep.mubr.f32.mxu0 0.0
  %v2507 = vand.u32 %v1969, 4294901760
  %2508 = vmatmul.mubr.f32.gmra.mxu0 %v2507
  %v2509 = vpop.f32.mrf.mxu0
  %v2510 = vadd.f32 %v2427, %v2509
  %v2511 = vpop.f32.mrf.mxu0
  %v2512 = vadd.f32 %v2429, %v2511
  %2513 = vmatprep.mubr.f32.mxu0 0.0
  %v2514 = vand.u32 %v1972, 4294901760
  %2515 = vmatmul.mubr.f32.gmra.mxu0 %v2514
  %v2516 = vpop.f32.mrf.mxu0
  %v2517 = vadd.f32 %v2434, %v2516
  %v2518 = vpop.f32.mrf.mxu0
  %v2519 = vadd.f32 %v2436, %v2518
  %2520 = vdwg.mxu0
  %2521 = vmatprep.subr.mxu0 0.0
  %2522 = vmatpush1.msra.mxu0 0.0
  %2523 = vmatprep.subr.mxu0 0.0
  %2524 = vmatpush1.msra.mxu0 0.0
  %2525 = vmatprep.subr.mxu0 0.0
  %2526 = vmatpush1.msra.mxu0 0.0
  %2527 = vmatprep.subr.mxu0 0.0
  %2528 = vmatpush1.msra.mxu0 0.0
  %2529 = vmatprep.subr.mxu0 0.0
  %2530 = vmatpush1.msra.mxu0 0.0
  %2531 = vmatprep.subr.mxu0 0.0
  %2532 = vmatpush1.msra.mxu0 0.0
  %2533 = vmatprep.subr.mxu0 0.0
  %2534 = vmatpush1.msra.mxu0 0.0
  %2535 = vmatprep.subr.mxu0 0.0
  %2536 = vmatpush1.msra.mxu0 0.0
  %2537 = vmatprep.subr.mxu0 0.0
  %2538 = vmatpush1.msra.mxu0 0.0
  %2539 = vmatprep.subr.mxu0 0.0
  %2540 = vmatpush1.msra.mxu0 0.0
  %2541 = vmatprep.subr.mxu0 0.0
  %2542 = vmatpush1.msra.mxu0 0.0
  %2543 = vmatprep.subr.mxu0 0.0
  %2544 = vmatpush1.msra.mxu0 0.0
  %2545 = vmatprep.subr.mxu0 0.0
  %2546 = vmatpush1.msra.mxu0 0.0
  %2547 = vmatprep.subr.mxu0 0.0
  %2548 = vmatpush1.msra.mxu0 0.0
  %2549 = vmatprep.subr.mxu0 0.0
  %v2550 = vand.u32 %v1979, 4294901760
  %2551 = vmatpush1.msra.mxu0 %v2550
  %2552 = vmatprep.subr.mxu0 0.0
  %v2553 = vand.u32 %v1963, 4294901760
  %2554 = vmatpush1.msra.mxu0 %v2553
  %2555 = vmatprep.subr.mxu0 0.0
  %2556 = vmatpush2.msra.mxu0 0.0
  %2557 = vmatprep.subr.mxu0 0.0
  %2558 = vmatpush2.msra.mxu0 0.0
  %2559 = vmatprep.subr.mxu0 0.0
  %2560 = vmatpush2.msra.mxu0 0.0
  %2561 = vmatprep.subr.mxu0 0.0
  %2562 = vmatpush2.msra.mxu0 0.0
  %2563 = vmatprep.subr.mxu0 0.0
  %2564 = vmatpush2.msra.mxu0 0.0
  %2565 = vmatprep.subr.mxu0 0.0
  %2566 = vmatpush2.msra.mxu0 0.0
  %2567 = vmatprep.subr.mxu0 0.0
  %2568 = vmatpush2.msra.mxu0 0.0
  %2569 = vmatprep.subr.mxu0 0.0
  %2570 = vmatpush2.msra.mxu0 0.0
  %2571 = vmatprep.subr.mxu0 0.0
  %2572 = vmatpush2.msra.mxu0 0.0
  %2573 = vmatprep.subr.mxu0 0.0
  %2574 = vmatpush2.msra.mxu0 0.0
  %2575 = vmatprep.subr.mxu0 0.0
  %2576 = vmatpush2.msra.mxu0 0.0
  %2577 = vmatprep.subr.mxu0 0.0
  %2578 = vmatpush2.msra.mxu0 0.0
  %2579 = vmatprep.subr.mxu0 0.0
  %2580 = vmatpush2.msra.mxu0 0.0
  %2581 = vmatprep.subr.mxu0 0.0
  %2582 = vmatpush2.msra.mxu0 0.0
  %2583 = vmatprep.subr.mxu0 0.0
  %2584 = vmatpush2.msra.mxu0 0.0
  %2585 = vmatprep.subr.mxu0 0.0
  %2586 = vmatpush2.msra.mxu0 0.0
  %2587 = vmatprep.mubr.f32.mxu0 0.0
  %v2588 = vand.u32 %v1969, 4294901760
  %v2589 = vsub.f32 %v1969, %v2588
  %v2590 = vand.u32 %v2589, 4294901760
  %v2591 = vsub.f32 %v2589, %v2590
  %v2592 = vand.u32 %v2591, 4294901760
  %2593 = vmatmul.mubr.f32.gmra.mxu0 %v2592
  %v2594 = vpop.f32.mrf.mxu0
  %v2595 = vadd.f32 0.0, %v2594
  %v2596 = vpop.f32.mrf.mxu0
  %2597 = vmatprep.mubr.f32.mxu0 0.0
  %v2598 = vand.u32 %v1972, 4294901760
  %v2599 = vsub.f32 %v1972, %v2598
  %v2600 = vand.u32 %v2599, 4294901760
  %v2601 = vsub.f32 %v2599, %v2600
  %v2602 = vand.u32 %v2601, 4294901760
  %2603 = vmatmul.mubr.f32.gmra.mxu0 %v2602
  %v2604 = vpop.f32.mrf.mxu0
  %v2605 = vadd.f32 0.0, %v2604
  %v2606 = vpop.f32.mrf.mxu0
  %2607 = vdwg.mxu0
  %2608 = vmatprep.subr.mxu0 0.0
  %2609 = vmatpush1.msra.mxu0 0.0
  %2610 = vmatprep.subr.mxu0 0.0
  %2611 = vmatpush1.msra.mxu0 0.0
  %2612 = vmatprep.subr.mxu0 0.0
  %2613 = vmatpush1.msra.mxu0 0.0
  %2614 = vmatprep.subr.mxu0 0.0
  %2615 = vmatpush1.msra.mxu0 0.0
  %2616 = vmatprep.subr.mxu0 0.0
  %2617 = vmatpush1.msra.mxu0 0.0
  %2618 = vmatprep.subr.mxu0 0.0
  %2619 = vmatpush1.msra.mxu0 0.0
  %2620 = vmatprep.subr.mxu0 0.0
  %2621 = vmatpush1.msra.mxu0 0.0
  %2622 = vmatprep.subr.mxu0 0.0
  %2623 = vmatpush1.msra.mxu0 0.0
  %2624 = vmatprep.subr.mxu0 0.0
  %2625 = vmatpush1.msra.mxu0 0.0
  %2626 = vmatprep.subr.mxu0 0.0
  %2627 = vmatpush1.msra.mxu0 0.0
  %2628 = vmatprep.subr.mxu0 0.0
  %2629 = vmatpush1.msra.mxu0 0.0
  %2630 = vmatprep.subr.mxu0 0.0
  %2631 = vmatpush1.msra.mxu0 0.0
  %2632 = vmatprep.subr.mxu0 0.0
  %2633 = vmatpush1.msra.mxu0 0.0
  %2634 = vmatprep.subr.mxu0 0.0
  %2635 = vmatpush1.msra.mxu0 0.0
  %2636 = vmatprep.subr.mxu0 0.0
  %v2637 = vand.u32 %v1979, 4294901760
  %v2638 = vsub.f32 %v1979, %v2637
  %v2639 = vand.u32 %v2638, 4294901760
  %v2640 = vsub.f32 %v2638, %v2639
  %v2641 = vand.u32 %v2640, 4294901760
  %2642 = vmatpush1.msra.mxu0 %v2641
  %2643 = vmatprep.subr.mxu0 0.0
  %v2644 = vand.u32 %v1963, 4294901760
  %v2645 = vsub.f32 %v1963, %v2644
  %v2646 = vand.u32 %v2645, 4294901760
  %v2647 = vsub.f32 %v2645, %v2646
  %v2648 = vand.u32 %v2647, 4294901760
  %2649 = vmatpush1.msra.mxu0 %v2648
  %2650 = vmatprep.subr.mxu0 0.0
  %2651 = vmatpush2.msra.mxu0 0.0
  %2652 = vmatprep.subr.mxu0 0.0
  %2653 = vmatpush2.msra.mxu0 0.0
  %2654 = vmatprep.subr.mxu0 0.0
  %2655 = vmatpush2.msra.mxu0 0.0
  %2656 = vmatprep.subr.mxu0 0.0
  %2657 = vmatpush2.msra.mxu0 0.0
  %2658 = vmatprep.subr.mxu0 0.0
  %2659 = vmatpush2.msra.mxu0 0.0
  %2660 = vmatprep.subr.mxu0 0.0
  %2661 = vmatpush2.msra.mxu0 0.0
  %2662 = vmatprep.subr.mxu0 0.0
  %2663 = vmatpush2.msra.mxu0 0.0
  %2664 = vmatprep.subr.mxu0 0.0
  %2665 = vmatpush2.msra.mxu0 0.0
  %2666 = vmatprep.subr.mxu0 0.0
  %2667 = vmatpush2.msra.mxu0 0.0
  %2668 = vmatprep.subr.mxu0 0.0
  %2669 = vmatpush2.msra.mxu0 0.0
  %2670 = vmatprep.subr.mxu0 0.0
  %2671 = vmatpush2.msra.mxu0 0.0
  %2672 = vmatprep.subr.mxu0 0.0
  %2673 = vmatpush2.msra.mxu0 0.0
  %2674 = vmatprep.subr.mxu0 0.0
  %2675 = vmatpush2.msra.mxu0 0.0
  %2676 = vmatprep.subr.mxu0 0.0
  %2677 = vmatpush2.msra.mxu0 0.0
  %2678 = vmatprep.subr.mxu0 0.0
  %2679 = vmatpush2.msra.mxu0 0.0
  %2680 = vmatprep.subr.mxu0 0.0
  %2681 = vmatpush2.msra.mxu0 0.0
  %2682 = vmatprep.mubr.f32.mxu0 0.0
  %v2683 = vand.u32 %v1969, 4294901760
  %2684 = vmatmul.mubr.f32.gmra.mxu0 %v2683
  %v2685 = vpop.f32.mrf.mxu0
  %v2686 = vadd.f32 %v2595, %v2685
  %v2687 = vpop.f32.mrf.mxu0
  %2688 = vmatprep.mubr.f32.mxu0 0.0
  %v2689 = vand.u32 %v1972, 4294901760
  %2690 = vmatmul.mubr.f32.gmra.mxu0 %v2689
  %v2691 = vpop.f32.mrf.mxu0
  %v2692 = vadd.f32 %v2605, %v2691
  %v2693 = vpop.f32.mrf.mxu0
  %2694 = vdwg.mxu0
  %2695 = vmatprep.subr.mxu0 0.0
  %2696 = vmatpush1.msra.mxu0 0.0
  %2697 = vmatprep.subr.mxu0 0.0
  %2698 = vmatpush1.msra.mxu0 0.0
  %2699 = vmatprep.subr.mxu0 0.0
  %2700 = vmatpush1.msra.mxu0 0.0
  %2701 = vmatprep.subr.mxu0 0.0
  %2702 = vmatpush1.msra.mxu0 0.0
  %2703 = vmatprep.subr.mxu0 0.0
  %2704 = vmatpush1.msra.mxu0 0.0
  %2705 = vmatprep.subr.mxu0 0.0
  %2706 = vmatpush1.msra.mxu0 0.0
  %2707 = vmatprep.subr.mxu0 0.0
  %2708 = vmatpush1.msra.mxu0 0.0
  %2709 = vmatprep.subr.mxu0 0.0
  %2710 = vmatpush1.msra.mxu0 0.0
  %2711 = vmatprep.subr.mxu0 0.0
  %2712 = vmatpush1.msra.mxu0 0.0
  %2713 = vmatprep.subr.mxu0 0.0
  %2714 = vmatpush1.msra.mxu0 0.0
  %2715 = vmatprep.subr.mxu0 0.0
  %2716 = vmatpush1.msra.mxu0 0.0
  %2717 = vmatprep.subr.mxu0 0.0
  %2718 = vmatpush1.msra.mxu0 0.0
  %2719 = vmatprep.subr.mxu0 0.0
  %2720 = vmatpush1.msra.mxu0 0.0
  %2721 = vmatprep.subr.mxu0 0.0
  %2722 = vmatpush1.msra.mxu0 0.0
  %2723 = vmatprep.subr.mxu0 0.0
  %v2724 = vand.u32 %v1979, 4294901760
  %v2725 = vsub.f32 %v1979, %v2724
  %2726 = vmatpush1.msra.mxu0 %v2725
  %2727 = vmatprep.subr.mxu0 0.0
  %v2728 = vand.u32 %v1963, 4294901760
  %v2729 = vsub.f32 %v1963, %v2728
  %2730 = vmatpush1.msra.mxu0 %v2729
  %2731 = vmatprep.subr.mxu0 0.0
  %2732 = vmatpush2.msra.mxu0 0.0
  %2733 = vmatprep.subr.mxu0 0.0
  %2734 = vmatpush2.msra.mxu0 0.0
  %2735 = vmatprep.subr.mxu0 0.0
  %2736 = vmatpush2.msra.mxu0 0.0
  %2737 = vmatprep.subr.mxu0 0.0
  %2738 = vmatpush2.msra.mxu0 0.0
  %2739 = vmatprep.subr.mxu0 0.0
  %2740 = vmatpush2.msra.mxu0 0.0
  %2741 = vmatprep.subr.mxu0 0.0
  %2742 = vmatpush2.msra.mxu0 0.0
  %2743 = vmatprep.subr.mxu0 0.0
  %2744 = vmatpush2.msra.mxu0 0.0
  %2745 = vmatprep.subr.mxu0 0.0
  %2746 = vmatpush2.msra.mxu0 0.0
  %2747 = vmatprep.subr.mxu0 0.0
  %2748 = vmatpush2.msra.mxu0 0.0
  %2749 = vmatprep.subr.mxu0 0.0
  %2750 = vmatpush2.msra.mxu0 0.0
  %2751 = vmatprep.subr.mxu0 0.0
  %2752 = vmatpush2.msra.mxu0 0.0
  %2753 = vmatprep.subr.mxu0 0.0
  %2754 = vmatpush2.msra.mxu0 0.0
  %2755 = vmatprep.subr.mxu0 0.0
  %2756 = vmatpush2.msra.mxu0 0.0
  %2757 = vmatprep.subr.mxu0 0.0
  %2758 = vmatpush2.msra.mxu0 0.0
  %2759 = vmatprep.subr.mxu0 0.0
  %2760 = vmatpush2.msra.mxu0 0.0
  %2761 = vmatprep.subr.mxu0 0.0
  %2762 = vmatpush2.msra.mxu0 0.0
  %2763 = vmatprep.mubr.f32.mxu0 0.0
  %v2764 = vand.u32 %v1969, 4294901760
  %v2765 = vsub.f32 %v1969, %v2764
  %2766 = vmatmul.mubr.f32.gmra.mxu0 %v2765
  %v2767 = vpop.f32.mrf.mxu0
  %v2768 = vadd.f32 %v2686, %v2767
  %v2769 = vpop.f32.mrf.mxu0
  %2770 = vmatprep.mubr.f32.mxu0 0.0
  %v2771 = vand.u32 %v1972, 4294901760
  %v2772 = vsub.f32 %v1972, %v2771
  %2773 = vmatmul.mubr.f32.gmra.mxu0 %v2772
  %v2774 = vpop.f32.mrf.mxu0
  %v2775 = vadd.f32 %v2692, %v2774
  %v2776 = vpop.f32.mrf.mxu0
  %2777 = vdwg.mxu0
  %2778 = vmatprep.subr.mxu0 0.0
  %2779 = vmatpush1.msra.mxu0 0.0
  %2780 = vmatprep.subr.mxu0 0.0
  %2781 = vmatpush1.msra.mxu0 0.0
  %2782 = vmatprep.subr.mxu0 0.0
  %2783 = vmatpush1.msra.mxu0 0.0
  %2784 = vmatprep.subr.mxu0 0.0
  %2785 = vmatpush1.msra.mxu0 0.0
  %2786 = vmatprep.subr.mxu0 0.0
  %2787 = vmatpush1.msra.mxu0 0.0
  %2788 = vmatprep.subr.mxu0 0.0
  %2789 = vmatpush1.msra.mxu0 0.0
  %2790 = vmatprep.subr.mxu0 0.0
  %2791 = vmatpush1.msra.mxu0 0.0
  %2792 = vmatprep.subr.mxu0 0.0
  %2793 = vmatpush1.msra.mxu0 0.0
  %2794 = vmatprep.subr.mxu0 0.0
  %2795 = vmatpush1.msra.mxu0 0.0
  %2796 = vmatprep.subr.mxu0 0.0
  %2797 = vmatpush1.msra.mxu0 0.0
  %2798 = vmatprep.subr.mxu0 0.0
  %2799 = vmatpush1.msra.mxu0 0.0
  %2800 = vmatprep.subr.mxu0 0.0
  %2801 = vmatpush1.msra.mxu0 0.0
  %2802 = vmatprep.subr.mxu0 0.0
  %2803 = vmatpush1.msra.mxu0 0.0
  %2804 = vmatprep.subr.mxu0 0.0
  %2805 = vmatpush1.msra.mxu0 0.0
  %2806 = vmatprep.subr.mxu0 0.0
  %v2807 = vand.u32 %v1979, 4294901760
  %2808 = vmatpush1.msra.mxu0 %v2807
  %2809 = vmatprep.subr.mxu0 0.0
  %v2810 = vand.u32 %v1963, 4294901760
  %2811 = vmatpush1.msra.mxu0 %v2810
  %2812 = vmatprep.subr.mxu0 0.0
  %2813 = vmatpush2.msra.mxu0 0.0
  %2814 = vmatprep.subr.mxu0 0.0
  %2815 = vmatpush2.msra.mxu0 0.0
  %2816 = vmatprep.subr.mxu0 0.0
  %2817 = vmatpush2.msra.mxu0 0.0
  %2818 = vmatprep.subr.mxu0 0.0
  %2819 = vmatpush2.msra.mxu0 0.0
  %2820 = vmatprep.subr.mxu0 0.0
  %2821 = vmatpush2.msra.mxu0 0.0
  %2822 = vmatprep.subr.mxu0 0.0
  %2823 = vmatpush2.msra.mxu0 0.0
  %2824 = vmatprep.subr.mxu0 0.0
  %2825 = vmatpush2.msra.mxu0 0.0
  %2826 = vmatprep.subr.mxu0 0.0
  %2827 = vmatpush2.msra.mxu0 0.0
  %2828 = vmatprep.subr.mxu0 0.0
  %2829 = vmatpush2.msra.mxu0 0.0
  %2830 = vmatprep.subr.mxu0 0.0
  %2831 = vmatpush2.msra.mxu0 0.0
  %2832 = vmatprep.subr.mxu0 0.0
  %2833 = vmatpush2.msra.mxu0 0.0
  %2834 = vmatprep.subr.mxu0 0.0
  %2835 = vmatpush2.msra.mxu0 0.0
  %2836 = vmatprep.subr.mxu0 0.0
  %2837 = vmatpush2.msra.mxu0 0.0
  %2838 = vmatprep.subr.mxu0 0.0
  %2839 = vmatpush2.msra.mxu0 0.0
  %2840 = vmatprep.subr.mxu0 0.0
  %2841 = vmatpush2.msra.mxu0 0.0
  %2842 = vmatprep.subr.mxu0 0.0
  %2843 = vmatpush2.msra.mxu0 0.0
  %2844 = vmatprep.mubr.f32.mxu0 0.0
  %v2845 = vand.u32 %v1969, 4294901760
  %v2846 = vsub.f32 %v1969, %v2845
  %v2847 = vand.u32 %v2846, 4294901760
  %2848 = vmatmul.mubr.f32.gmra.mxu0 %v2847
  %v2849 = vpop.f32.mrf.mxu0
  %v2850 = vadd.f32 %v2768, %v2849
  %v2851 = vpop.f32.mrf.mxu0
  %2852 = vmatprep.mubr.f32.mxu0 0.0
  %v2853 = vand.u32 %v1972, 4294901760
  %v2854 = vsub.f32 %v1972, %v2853
  %v2855 = vand.u32 %v2854, 4294901760
  %2856 = vmatmul.mubr.f32.gmra.mxu0 %v2855
  %v2857 = vpop.f32.mrf.mxu0
  %v2858 = vadd.f32 %v2775, %v2857
  %v2859 = vpop.f32.mrf.mxu0
  %2860 = vdwg.mxu0
  %2861 = vmatprep.subr.mxu0 0.0
  %2862 = vmatpush1.msra.mxu0 0.0
  %2863 = vmatprep.subr.mxu0 0.0
  %2864 = vmatpush1.msra.mxu0 0.0
  %2865 = vmatprep.subr.mxu0 0.0
  %2866 = vmatpush1.msra.mxu0 0.0
  %2867 = vmatprep.subr.mxu0 0.0
  %2868 = vmatpush1.msra.mxu0 0.0
  %2869 = vmatprep.subr.mxu0 0.0
  %2870 = vmatpush1.msra.mxu0 0.0
  %2871 = vmatprep.subr.mxu0 0.0
  %2872 = vmatpush1.msra.mxu0 0.0
  %2873 = vmatprep.subr.mxu0 0.0
  %2874 = vmatpush1.msra.mxu0 0.0
  %2875 = vmatprep.subr.mxu0 0.0
  %2876 = vmatpush1.msra.mxu0 0.0
  %2877 = vmatprep.subr.mxu0 0.0
  %2878 = vmatpush1.msra.mxu0 0.0
  %2879 = vmatprep.subr.mxu0 0.0
  %2880 = vmatpush1.msra.mxu0 0.0
  %2881 = vmatprep.subr.mxu0 0.0
  %2882 = vmatpush1.msra.mxu0 0.0
  %2883 = vmatprep.subr.mxu0 0.0
  %2884 = vmatpush1.msra.mxu0 0.0
  %2885 = vmatprep.subr.mxu0 0.0
  %2886 = vmatpush1.msra.mxu0 0.0
  %2887 = vmatprep.subr.mxu0 0.0
  %2888 = vmatpush1.msra.mxu0 0.0
  %2889 = vmatprep.subr.mxu0 0.0
  %v2890 = vand.u32 %v1979, 4294901760
  %v2891 = vsub.f32 %v1979, %v2890
  %v2892 = vand.u32 %v2891, 4294901760
  %2893 = vmatpush1.msra.mxu0 %v2892
  %2894 = vmatprep.subr.mxu0 0.0
  %v2895 = vand.u32 %v1963, 4294901760
  %v2896 = vsub.f32 %v1963, %v2895
  %v2897 = vand.u32 %v2896, 4294901760
  %2898 = vmatpush1.msra.mxu0 %v2897
  %2899 = vmatprep.subr.mxu0 0.0
  %2900 = vmatpush2.msra.mxu0 0.0
  %2901 = vmatprep.subr.mxu0 0.0
  %2902 = vmatpush2.msra.mxu0 0.0
  %2903 = vmatprep.subr.mxu0 0.0
  %2904 = vmatpush2.msra.mxu0 0.0
  %2905 = vmatprep.subr.mxu0 0.0
  %2906 = vmatpush2.msra.mxu0 0.0
  %2907 = vmatprep.subr.mxu0 0.0
  %2908 = vmatpush2.msra.mxu0 0.0
  %2909 = vmatprep.subr.mxu0 0.0
  %2910 = vmatpush2.msra.mxu0 0.0
  %2911 = vmatprep.subr.mxu0 0.0
  %2912 = vmatpush2.msra.mxu0 0.0
  %2913 = vmatprep.subr.mxu0 0.0
  %2914 = vmatpush2.msra.mxu0 0.0
  %2915 = vmatprep.subr.mxu0 0.0
  %2916 = vmatpush2.msra.mxu0 0.0
  %2917 = vmatprep.subr.mxu0 0.0
  %2918 = vmatpush2.msra.mxu0 0.0
  %2919 = vmatprep.subr.mxu0 0.0
  %2920 = vmatpush2.msra.mxu0 0.0
  %2921 = vmatprep.subr.mxu0 0.0
  %2922 = vmatpush2.msra.mxu0 0.0
  %2923 = vmatprep.subr.mxu0 0.0
  %2924 = vmatpush2.msra.mxu0 0.0
  %2925 = vmatprep.subr.mxu0 0.0
  %2926 = vmatpush2.msra.mxu0 0.0
  %2927 = vmatprep.subr.mxu0 0.0
  %2928 = vmatpush2.msra.mxu0 0.0
  %2929 = vmatprep.subr.mxu0 0.0
  %2930 = vmatpush2.msra.mxu0 0.0
  %2931 = vmatprep.mubr.f32.mxu0 0.0
  %v2932 = vand.u32 %v1969, 4294901760
  %2933 = vmatmul.mubr.f32.gmra.mxu0 %v2932
  %v2934 = vpop.f32.mrf.mxu0
  %v2935 = vadd.f32 %v2850, %v2934
  %v2936 = vpop.f32.mrf.mxu0
  %2937 = vmatprep.mubr.f32.mxu0 0.0
  %v2938 = vand.u32 %v1972, 4294901760
  %2939 = vmatmul.mubr.f32.gmra.mxu0 %v2938
  %v2940 = vpop.f32.mrf.mxu0
  %v2941 = vadd.f32 %v2858, %v2940
  %v2942 = vpop.f32.mrf.mxu0
  %2943 = vdwg.mxu0
  %2944 = vmatprep.subr.mxu0 0.0
  %2945 = vmatpush1.msra.mxu0 0.0
  %2946 = vmatprep.subr.mxu0 0.0
  %2947 = vmatpush1.msra.mxu0 0.0
  %2948 = vmatprep.subr.mxu0 0.0
  %2949 = vmatpush1.msra.mxu0 0.0
  %2950 = vmatprep.subr.mxu0 0.0
  %2951 = vmatpush1.msra.mxu0 0.0
  %2952 = vmatprep.subr.mxu0 0.0
  %2953 = vmatpush1.msra.mxu0 0.0
  %2954 = vmatprep.subr.mxu0 0.0
  %2955 = vmatpush1.msra.mxu0 0.0
  %2956 = vmatprep.subr.mxu0 0.0
  %2957 = vmatpush1.msra.mxu0 0.0
  %2958 = vmatprep.subr.mxu0 0.0
  %2959 = vmatpush1.msra.mxu0 0.0
  %2960 = vmatprep.subr.mxu0 0.0
  %2961 = vmatpush1.msra.mxu0 0.0
  %2962 = vmatprep.subr.mxu0 0.0
  %2963 = vmatpush1.msra.mxu0 0.0
  %2964 = vmatprep.subr.mxu0 0.0
  %2965 = vmatpush1.msra.mxu0 0.0
  %2966 = vmatprep.subr.mxu0 0.0
  %2967 = vmatpush1.msra.mxu0 0.0
  %2968 = vmatprep.subr.mxu0 0.0
  %2969 = vmatpush1.msra.mxu0 0.0
  %2970 = vmatprep.subr.mxu0 0.0
  %2971 = vmatpush1.msra.mxu0 0.0
  %2972 = vmatprep.subr.mxu0 0.0
  %v2973 = vand.u32 %v1979, 4294901760
  %2974 = vmatpush1.msra.mxu0 %v2973
  %2975 = vmatprep.subr.mxu0 0.0
  %v2976 = vand.u32 %v1963, 4294901760
  %2977 = vmatpush1.msra.mxu0 %v2976
  %2978 = vmatprep.subr.mxu0 0.0
  %2979 = vmatpush2.msra.mxu0 0.0
  %2980 = vmatprep.subr.mxu0 0.0
  %2981 = vmatpush2.msra.mxu0 0.0
  %2982 = vmatprep.subr.mxu0 0.0
  %2983 = vmatpush2.msra.mxu0 0.0
  %2984 = vmatprep.subr.mxu0 0.0
  %2985 = vmatpush2.msra.mxu0 0.0
  %2986 = vmatprep.subr.mxu0 0.0
  %2987 = vmatpush2.msra.mxu0 0.0
  %2988 = vmatprep.subr.mxu0 0.0
  %2989 = vmatpush2.msra.mxu0 0.0
  %2990 = vmatprep.subr.mxu0 0.0
  %2991 = vmatpush2.msra.mxu0 0.0
  %2992 = vmatprep.subr.mxu0 0.0
  %2993 = vmatpush2.msra.mxu0 0.0
  %2994 = vmatprep.subr.mxu0 0.0
  %2995 = vmatpush2.msra.mxu0 0.0
  %2996 = vmatprep.subr.mxu0 0.0
  %2997 = vmatpush2.msra.mxu0 0.0
  %2998 = vmatprep.subr.mxu0 0.0
  %2999 = vmatpush2.msra.mxu0 0.0
  %3000 = vmatprep.subr.mxu0 0.0
  %3001 = vmatpush2.msra.mxu0 0.0
  %3002 = vmatprep.subr.mxu0 0.0
  %3003 = vmatpush2.msra.mxu0 0.0
  %3004 = vmatprep.subr.mxu0 0.0
  %3005 = vmatpush2.msra.mxu0 0.0
  %3006 = vmatprep.subr.mxu0 0.0
  %3007 = vmatpush2.msra.mxu0 0.0
  %3008 = vmatprep.subr.mxu0 0.0
  %3009 = vmatpush2.msra.mxu0 0.0
  %3010 = vmatprep.mubr.f32.mxu0 0.0
  %v3011 = vand.u32 %v1969, 4294901760
  %3012 = vmatmul.mubr.f32.gmra.mxu0 %v3011
  %v3013 = vpop.f32.mrf.mxu0
  %v3014 = vadd.f32 %v2935, %v3013
  %v3015 = vpop.f32.mrf.mxu0
  %3016 = vmatprep.mubr.f32.mxu0 0.0
  %v3017 = vand.u32 %v1972, 4294901760
  %3018 = vmatmul.mubr.f32.gmra.mxu0 %v3017
  %v3019 = vpop.f32.mrf.mxu0
  %v3020 = vadd.f32 %v2941, %v3019
  %v3021 = vpop.f32.mrf.mxu0
  %3022 = vdwg.mxu0
  %vm3023 = vcmask 7168
  %v3025 = vsel %vm3023, %v1435, 0
  %v3028 = vsel %vm3023, %v1436, 0
  %v3030 = vsel %vm1974, %v933, 0
  %v3032 = vsel %vm1974, %v934, 0
  %v3034 = vsel %vm1974, %v935, 0
  %3036 = vmatprep.subr.mxu0 0.0
  %3037 = vmatpush1.msra.mxu0 0.0
  %3038 = vmatprep.subr.mxu0 0.0
  %3039 = vmatpush1.msra.mxu0 0.0
  %3040 = vmatprep.subr.mxu0 0.0
  %3041 = vmatpush1.msra.mxu0 0.0
  %3042 = vmatprep.subr.mxu0 0.0
  %3043 = vmatpush1.msra.mxu0 0.0
  %3044 = vmatprep.subr.mxu0 0.0
  %3045 = vmatpush1.msra.mxu0 0.0
  %3046 = vmatprep.subr.mxu0 0.0
  %3047 = vmatpush1.msra.mxu0 0.0
  %3048 = vmatprep.subr.mxu0 0.0
  %3049 = vmatpush1.msra.mxu0 0.0
  %3050 = vmatprep.subr.mxu0 0.0
  %3051 = vmatpush1.msra.mxu0 0.0
  %3052 = vmatprep.subr.mxu0 0.0
  %3053 = vmatpush1.msra.mxu0 0.0
  %3054 = vmatprep.subr.mxu0 0.0
  %3055 = vmatpush1.msra.mxu0 0.0
  %3056 = vmatprep.subr.mxu0 0.0
  %3057 = vmatpush1.msra.mxu0 0.0
  %3058 = vmatprep.subr.mxu0 0.0
  %3059 = vmatpush1.msra.mxu0 0.0
  %3060 = vmatprep.subr.mxu0 0.0
  %3061 = vmatpush1.msra.mxu0 0.0
  %3062 = vmatprep.subr.mxu0 0.0
  %3063 = vmatpush1.msra.mxu0 0.0
  %3064 = vmatprep.subr.mxu0 0.0
  %3065 = vmatpush1.msra.mxu0 0.0
  %v3066 = vand.u32 %v3032, 4294901760
  %3067 = vmatprep.subr.mxu0 %v3066
  %v3068 = vand.u32 %v3030, 4294901760
  %3069 = vmatpush1.msra.mxu0 %v3068
  %3070 = vmatprep.subr.mxu0 0.0
  %3071 = vmatpush2.msra.mxu0 0.0
  %3072 = vmatprep.subr.mxu0 0.0
  %3073 = vmatpush2.msra.mxu0 0.0
  %3074 = vmatprep.subr.mxu0 0.0
  %3075 = vmatpush2.msra.mxu0 0.0
  %3076 = vmatprep.subr.mxu0 0.0
  %3077 = vmatpush2.msra.mxu0 0.0
  %3078 = vmatprep.subr.mxu0 0.0
  %3079 = vmatpush2.msra.mxu0 0.0
  %3080 = vmatprep.subr.mxu0 0.0
  %3081 = vmatpush2.msra.mxu0 0.0
  %3082 = vmatprep.subr.mxu0 0.0
  %3083 = vmatpush2.msra.mxu0 0.0
  %3084 = vmatprep.subr.mxu0 0.0
  %3085 = vmatpush2.msra.mxu0 0.0
  %3086 = vmatprep.subr.mxu0 0.0
  %3087 = vmatpush2.msra.mxu0 0.0
  %3088 = vmatprep.subr.mxu0 0.0
  %3089 = vmatpush2.msra.mxu0 0.0
  %3090 = vmatprep.subr.mxu0 0.0
  %3091 = vmatpush2.msra.mxu0 0.0
  %3092 = vmatprep.subr.mxu0 0.0
  %3093 = vmatpush2.msra.mxu0 0.0
  %3094 = vmatprep.subr.mxu0 0.0
  %3095 = vmatpush2.msra.mxu0 0.0
  %3096 = vmatprep.subr.mxu0 0.0
  %3097 = vmatpush2.msra.mxu0 0.0
  %3098 = vmatprep.subr.mxu0 0.0
  %3099 = vmatpush2.msra.mxu0 0.0
  %3100 = vmatprep.subr.mxu0 0.0
  %3101 = vmatpush2.msra.mxu0 0.0
  %3102 = vmatprep.mubr.f32.mxu0 0.0
  %v3103 = vand.u32 %v3025, 4294901760
  %v3104 = vsub.f32 %v3025, %v3103
  %v3105 = vand.u32 %v3104, 4294901760
  %v3106 = vsub.f32 %v3104, %v3105
  %v3107 = vand.u32 %v3106, 4294901760
  %3108 = vmatmul.mubr.f32.gmra.mxu0 %v3107
  %v3109 = vpop.f32.mrf.mxu0
  %v3110 = vadd.f32 %v2510, %v3109
  %v3111 = vpop.f32.mrf.mxu0
  %v3112 = vadd.f32 %v2512, %v3111
  %3113 = vmatprep.mubr.f32.mxu0 0.0
  %v3114 = vand.u32 %v3028, 4294901760
  %v3115 = vsub.f32 %v3028, %v3114
  %v3116 = vand.u32 %v3115, 4294901760
  %v3117 = vsub.f32 %v3115, %v3116
  %v3118 = vand.u32 %v3117, 4294901760
  %3119 = vmatmul.mubr.f32.gmra.mxu0 %v3118
  %v3120 = vpop.f32.mrf.mxu0
  %v3121 = vadd.f32 %v2517, %v3120
  %v3122 = vpop.f32.mrf.mxu0
  %v3123 = vadd.f32 %v2519, %v3122
  %3124 = vdwg.mxu0
  %3125 = vmatprep.subr.mxu0 0.0
  %3126 = vmatpush1.msra.mxu0 0.0
  %3127 = vmatprep.subr.mxu0 0.0
  %3128 = vmatpush1.msra.mxu0 0.0
  %3129 = vmatprep.subr.mxu0 0.0
  %3130 = vmatpush1.msra.mxu0 0.0
  %3131 = vmatprep.subr.mxu0 0.0
  %3132 = vmatpush1.msra.mxu0 0.0
  %3133 = vmatprep.subr.mxu0 0.0
  %3134 = vmatpush1.msra.mxu0 0.0
  %3135 = vmatprep.subr.mxu0 0.0
  %3136 = vmatpush1.msra.mxu0 0.0
  %3137 = vmatprep.subr.mxu0 0.0
  %3138 = vmatpush1.msra.mxu0 0.0
  %3139 = vmatprep.subr.mxu0 0.0
  %3140 = vmatpush1.msra.mxu0 0.0
  %3141 = vmatprep.subr.mxu0 0.0
  %3142 = vmatpush1.msra.mxu0 0.0
  %3143 = vmatprep.subr.mxu0 0.0
  %3144 = vmatpush1.msra.mxu0 0.0
  %3145 = vmatprep.subr.mxu0 0.0
  %3146 = vmatpush1.msra.mxu0 0.0
  %3147 = vmatprep.subr.mxu0 0.0
  %3148 = vmatpush1.msra.mxu0 0.0
  %3149 = vmatprep.subr.mxu0 0.0
  %3150 = vmatpush1.msra.mxu0 0.0
  %3151 = vmatprep.subr.mxu0 0.0
  %3152 = vmatpush1.msra.mxu0 0.0
  %3153 = vmatprep.subr.mxu0 0.0
  %3154 = vmatpush1.msra.mxu0 0.0
  %v3155 = vand.u32 %v3032, 4294901760
  %v3156 = vsub.f32 %v3032, %v3155
  %v3157 = vand.u32 %v3156, 4294901760
  %v3158 = vsub.f32 %v3156, %v3157
  %v3159 = vand.u32 %v3158, 4294901760
  %3160 = vmatprep.subr.mxu0 %v3159
  %v3161 = vand.u32 %v3030, 4294901760
  %v3162 = vsub.f32 %v3030, %v3161
  %v3163 = vand.u32 %v3162, 4294901760
  %v3164 = vsub.f32 %v3162, %v3163
  %v3165 = vand.u32 %v3164, 4294901760
  %3166 = vmatpush1.msra.mxu0 %v3165
  %3167 = vmatprep.subr.mxu0 0.0
  %3168 = vmatpush2.msra.mxu0 0.0
  %3169 = vmatprep.subr.mxu0 0.0
  %3170 = vmatpush2.msra.mxu0 0.0
  %3171 = vmatprep.subr.mxu0 0.0
  %3172 = vmatpush2.msra.mxu0 0.0
  %3173 = vmatprep.subr.mxu0 0.0
  %3174 = vmatpush2.msra.mxu0 0.0
  %3175 = vmatprep.subr.mxu0 0.0
  %3176 = vmatpush2.msra.mxu0 0.0
  %3177 = vmatprep.subr.mxu0 0.0
  %3178 = vmatpush2.msra.mxu0 0.0
  %3179 = vmatprep.subr.mxu0 0.0
  %3180 = vmatpush2.msra.mxu0 0.0
  %3181 = vmatprep.subr.mxu0 0.0
  %3182 = vmatpush2.msra.mxu0 0.0
  %3183 = vmatprep.subr.mxu0 0.0
  %3184 = vmatpush2.msra.mxu0 0.0
  %3185 = vmatprep.subr.mxu0 0.0
  %3186 = vmatpush2.msra.mxu0 0.0
  %3187 = vmatprep.subr.mxu0 0.0
  %3188 = vmatpush2.msra.mxu0 0.0
  %3189 = vmatprep.subr.mxu0 0.0
  %3190 = vmatpush2.msra.mxu0 0.0
  %3191 = vmatprep.subr.mxu0 0.0
  %3192 = vmatpush2.msra.mxu0 0.0
  %3193 = vmatprep.subr.mxu0 0.0
  %3194 = vmatpush2.msra.mxu0 0.0
  %3195 = vmatprep.subr.mxu0 0.0
  %3196 = vmatpush2.msra.mxu0 0.0
  %3197 = vmatprep.subr.mxu0 0.0
  %3198 = vmatpush2.msra.mxu0 0.0
  %3199 = vmatprep.mubr.f32.mxu0 0.0
  %v3200 = vand.u32 %v3025, 4294901760
  %3201 = vmatmul.mubr.f32.gmra.mxu0 %v3200
  %v3202 = vpop.f32.mrf.mxu0
  %v3203 = vadd.f32 %v3110, %v3202
  %v3204 = vpop.f32.mrf.mxu0
  %v3205 = vadd.f32 %v3112, %v3204
  %3206 = vmatprep.mubr.f32.mxu0 0.0
  %v3207 = vand.u32 %v3028, 4294901760
  %3208 = vmatmul.mubr.f32.gmra.mxu0 %v3207
  %v3209 = vpop.f32.mrf.mxu0
  %v3210 = vadd.f32 %v3121, %v3209
  %v3211 = vpop.f32.mrf.mxu0
  %v3212 = vadd.f32 %v3123, %v3211
  %3213 = vdwg.mxu0
  %3214 = vmatprep.subr.mxu0 0.0
  %3215 = vmatpush1.msra.mxu0 0.0
  %3216 = vmatprep.subr.mxu0 0.0
  %3217 = vmatpush1.msra.mxu0 0.0
  %3218 = vmatprep.subr.mxu0 0.0
  %3219 = vmatpush1.msra.mxu0 0.0
  %3220 = vmatprep.subr.mxu0 0.0
  %3221 = vmatpush1.msra.mxu0 0.0
  %3222 = vmatprep.subr.mxu0 0.0
  %3223 = vmatpush1.msra.mxu0 0.0
  %3224 = vmatprep.subr.mxu0 0.0
  %3225 = vmatpush1.msra.mxu0 0.0
  %3226 = vmatprep.subr.mxu0 0.0
  %3227 = vmatpush1.msra.mxu0 0.0
  %3228 = vmatprep.subr.mxu0 0.0
  %3229 = vmatpush1.msra.mxu0 0.0
  %3230 = vmatprep.subr.mxu0 0.0
  %3231 = vmatpush1.msra.mxu0 0.0
  %3232 = vmatprep.subr.mxu0 0.0
  %3233 = vmatpush1.msra.mxu0 0.0
  %3234 = vmatprep.subr.mxu0 0.0
  %3235 = vmatpush1.msra.mxu0 0.0
  %3236 = vmatprep.subr.mxu0 0.0
  %3237 = vmatpush1.msra.mxu0 0.0
  %3238 = vmatprep.subr.mxu0 0.0
  %3239 = vmatpush1.msra.mxu0 0.0
  %3240 = vmatprep.subr.mxu0 0.0
  %3241 = vmatpush1.msra.mxu0 0.0
  %3242 = vmatprep.subr.mxu0 0.0
  %3243 = vmatpush1.msra.mxu0 0.0
  %v3244 = vand.u32 %v3032, 4294901760
  %v3245 = vsub.f32 %v3032, %v3244
  %3246 = vmatprep.subr.mxu0 %v3245
  %v3247 = vand.u32 %v3030, 4294901760
  %v3248 = vsub.f32 %v3030, %v3247
  %3249 = vmatpush1.msra.mxu0 %v3248
  %3250 = vmatprep.subr.mxu0 0.0
  %3251 = vmatpush2.msra.mxu0 0.0
  %3252 = vmatprep.subr.mxu0 0.0
  %3253 = vmatpush2.msra.mxu0 0.0
  %3254 = vmatprep.subr.mxu0 0.0
  %3255 = vmatpush2.msra.mxu0 0.0
  %3256 = vmatprep.subr.mxu0 0.0
  %3257 = vmatpush2.msra.mxu0 0.0
  %3258 = vmatprep.subr.mxu0 0.0
  %3259 = vmatpush2.msra.mxu0 0.0
  %3260 = vmatprep.subr.mxu0 0.0
  %3261 = vmatpush2.msra.mxu0 0.0
  %3262 = vmatprep.subr.mxu0 0.0
  %3263 = vmatpush2.msra.mxu0 0.0
  %3264 = vmatprep.subr.mxu0 0.0
  %3265 = vmatpush2.msra.mxu0 0.0
  %3266 = vmatprep.subr.mxu0 0.0
  %3267 = vmatpush2.msra.mxu0 0.0
  %3268 = vmatprep.subr.mxu0 0.0
  %3269 = vmatpush2.msra.mxu0 0.0
  %3270 = vmatprep.subr.mxu0 0.0
  %3271 = vmatpush2.msra.mxu0 0.0
  %3272 = vmatprep.subr.mxu0 0.0
  %3273 = vmatpush2.msra.mxu0 0.0
  %3274 = vmatprep.subr.mxu0 0.0
  %3275 = vmatpush2.msra.mxu0 0.0
  %3276 = vmatprep.subr.mxu0 0.0
  %3277 = vmatpush2.msra.mxu0 0.0
  %3278 = vmatprep.subr.mxu0 0.0
  %3279 = vmatpush2.msra.mxu0 0.0
  %3280 = vmatprep.subr.mxu0 0.0
  %3281 = vmatpush2.msra.mxu0 0.0
  %3282 = vmatprep.mubr.f32.mxu0 0.0
  %v3283 = vand.u32 %v3025, 4294901760
  %v3284 = vsub.f32 %v3025, %v3283
  %3285 = vmatmul.mubr.f32.gmra.mxu0 %v3284
  %v3286 = vpop.f32.mrf.mxu0
  %v3287 = vadd.f32 %v3203, %v3286
  %v3288 = vpop.f32.mrf.mxu0
  %v3289 = vadd.f32 %v3205, %v3288
  %3290 = vmatprep.mubr.f32.mxu0 0.0
  %v3291 = vand.u32 %v3028, 4294901760
  %v3292 = vsub.f32 %v3028, %v3291
  %3293 = vmatmul.mubr.f32.gmra.mxu0 %v3292
  %v3294 = vpop.f32.mrf.mxu0
  %v3295 = vadd.f32 %v3210, %v3294
  %v3296 = vpop.f32.mrf.mxu0
  %v3297 = vadd.f32 %v3212, %v3296
  %3298 = vdwg.mxu0
  %3299 = vmatprep.subr.mxu0 0.0
  %3300 = vmatpush1.msra.mxu0 0.0
  %3301 = vmatprep.subr.mxu0 0.0
  %3302 = vmatpush1.msra.mxu0 0.0
  %3303 = vmatprep.subr.mxu0 0.0
  %3304 = vmatpush1.msra.mxu0 0.0
  %3305 = vmatprep.subr.mxu0 0.0
  %3306 = vmatpush1.msra.mxu0 0.0
  %3307 = vmatprep.subr.mxu0 0.0
  %3308 = vmatpush1.msra.mxu0 0.0
  %3309 = vmatprep.subr.mxu0 0.0
  %3310 = vmatpush1.msra.mxu0 0.0
  %3311 = vmatprep.subr.mxu0 0.0
  %3312 = vmatpush1.msra.mxu0 0.0
  %3313 = vmatprep.subr.mxu0 0.0
  %3314 = vmatpush1.msra.mxu0 0.0
  %3315 = vmatprep.subr.mxu0 0.0
  %3316 = vmatpush1.msra.mxu0 0.0
  %3317 = vmatprep.subr.mxu0 0.0
  %3318 = vmatpush1.msra.mxu0 0.0
  %3319 = vmatprep.subr.mxu0 0.0
  %3320 = vmatpush1.msra.mxu0 0.0
  %3321 = vmatprep.subr.mxu0 0.0
  %3322 = vmatpush1.msra.mxu0 0.0
  %3323 = vmatprep.subr.mxu0 0.0
  %3324 = vmatpush1.msra.mxu0 0.0
  %3325 = vmatprep.subr.mxu0 0.0
  %3326 = vmatpush1.msra.mxu0 0.0
  %3327 = vmatprep.subr.mxu0 0.0
  %3328 = vmatpush1.msra.mxu0 0.0
  %v3329 = vand.u32 %v3032, 4294901760
  %3330 = vmatprep.subr.mxu0 %v3329
  %v3331 = vand.u32 %v3030, 4294901760
  %3332 = vmatpush1.msra.mxu0 %v3331
  %3333 = vmatprep.subr.mxu0 0.0
  %3334 = vmatpush2.msra.mxu0 0.0
  %3335 = vmatprep.subr.mxu0 0.0
  %3336 = vmatpush2.msra.mxu0 0.0
  %3337 = vmatprep.subr.mxu0 0.0
  %3338 = vmatpush2.msra.mxu0 0.0
  %3339 = vmatprep.subr.mxu0 0.0
  %3340 = vmatpush2.msra.mxu0 0.0
  %3341 = vmatprep.subr.mxu0 0.0
  %3342 = vmatpush2.msra.mxu0 0.0
  %3343 = vmatprep.subr.mxu0 0.0
  %3344 = vmatpush2.msra.mxu0 0.0
  %3345 = vmatprep.subr.mxu0 0.0
  %3346 = vmatpush2.msra.mxu0 0.0
  %3347 = vmatprep.subr.mxu0 0.0
  %3348 = vmatpush2.msra.mxu0 0.0
  %3349 = vmatprep.subr.mxu0 0.0
  %3350 = vmatpush2.msra.mxu0 0.0
  %3351 = vmatprep.subr.mxu0 0.0
  %3352 = vmatpush2.msra.mxu0 0.0
  %3353 = vmatprep.subr.mxu0 0.0
  %3354 = vmatpush2.msra.mxu0 0.0
  %3355 = vmatprep.subr.mxu0 0.0
  %3356 = vmatpush2.msra.mxu0 0.0
  %3357 = vmatprep.subr.mxu0 0.0
  %3358 = vmatpush2.msra.mxu0 0.0
  %3359 = vmatprep.subr.mxu0 0.0
  %3360 = vmatpush2.msra.mxu0 0.0
  %3361 = vmatprep.subr.mxu0 0.0
  %3362 = vmatpush2.msra.mxu0 0.0
  %3363 = vmatprep.subr.mxu0 0.0
  %3364 = vmatpush2.msra.mxu0 0.0
  %3365 = vmatprep.mubr.f32.mxu0 0.0
  %v3366 = vand.u32 %v3025, 4294901760
  %v3367 = vsub.f32 %v3025, %v3366
  %v3368 = vand.u32 %v3367, 4294901760
  %3369 = vmatmul.mubr.f32.gmra.mxu0 %v3368
  %v3370 = vpop.f32.mrf.mxu0
  %v3371 = vadd.f32 %v3287, %v3370
  %v3372 = vpop.f32.mrf.mxu0
  %v3373 = vadd.f32 %v3289, %v3372
  %3374 = vmatprep.mubr.f32.mxu0 0.0
  %v3375 = vand.u32 %v3028, 4294901760
  %v3376 = vsub.f32 %v3028, %v3375
  %v3377 = vand.u32 %v3376, 4294901760
  %3378 = vmatmul.mubr.f32.gmra.mxu0 %v3377
  %v3379 = vpop.f32.mrf.mxu0
  %v3380 = vadd.f32 %v3295, %v3379
  %v3381 = vpop.f32.mrf.mxu0
  %v3382 = vadd.f32 %v3297, %v3381
  %3383 = vdwg.mxu0
  %3384 = vmatprep.subr.mxu0 0.0
  %3385 = vmatpush1.msra.mxu0 0.0
  %3386 = vmatprep.subr.mxu0 0.0
  %3387 = vmatpush1.msra.mxu0 0.0
  %3388 = vmatprep.subr.mxu0 0.0
  %3389 = vmatpush1.msra.mxu0 0.0
  %3390 = vmatprep.subr.mxu0 0.0
  %3391 = vmatpush1.msra.mxu0 0.0
  %3392 = vmatprep.subr.mxu0 0.0
  %3393 = vmatpush1.msra.mxu0 0.0
  %3394 = vmatprep.subr.mxu0 0.0
  %3395 = vmatpush1.msra.mxu0 0.0
  %3396 = vmatprep.subr.mxu0 0.0
  %3397 = vmatpush1.msra.mxu0 0.0
  %3398 = vmatprep.subr.mxu0 0.0
  %3399 = vmatpush1.msra.mxu0 0.0
  %3400 = vmatprep.subr.mxu0 0.0
  %3401 = vmatpush1.msra.mxu0 0.0
  %3402 = vmatprep.subr.mxu0 0.0
  %3403 = vmatpush1.msra.mxu0 0.0
  %3404 = vmatprep.subr.mxu0 0.0
  %3405 = vmatpush1.msra.mxu0 0.0
  %3406 = vmatprep.subr.mxu0 0.0
  %3407 = vmatpush1.msra.mxu0 0.0
  %3408 = vmatprep.subr.mxu0 0.0
  %3409 = vmatpush1.msra.mxu0 0.0
  %3410 = vmatprep.subr.mxu0 0.0
  %3411 = vmatpush1.msra.mxu0 0.0
  %3412 = vmatprep.subr.mxu0 0.0
  %3413 = vmatpush1.msra.mxu0 0.0
  %v3414 = vand.u32 %v3032, 4294901760
  %v3415 = vsub.f32 %v3032, %v3414
  %v3416 = vand.u32 %v3415, 4294901760
  %3417 = vmatprep.subr.mxu0 %v3416
  %v3418 = vand.u32 %v3030, 4294901760
  %v3419 = vsub.f32 %v3030, %v3418
  %v3420 = vand.u32 %v3419, 4294901760
  %3421 = vmatpush1.msra.mxu0 %v3420
  %3422 = vmatprep.subr.mxu0 0.0
  %3423 = vmatpush2.msra.mxu0 0.0
  %3424 = vmatprep.subr.mxu0 0.0
  %3425 = vmatpush2.msra.mxu0 0.0
  %3426 = vmatprep.subr.mxu0 0.0
  %3427 = vmatpush2.msra.mxu0 0.0
  %3428 = vmatprep.subr.mxu0 0.0
  %3429 = vmatpush2.msra.mxu0 0.0
  %3430 = vmatprep.subr.mxu0 0.0
  %3431 = vmatpush2.msra.mxu0 0.0
  %3432 = vmatprep.subr.mxu0 0.0
  %3433 = vmatpush2.msra.mxu0 0.0
  %3434 = vmatprep.subr.mxu0 0.0
  %3435 = vmatpush2.msra.mxu0 0.0
  %3436 = vmatprep.subr.mxu0 0.0
  %3437 = vmatpush2.msra.mxu0 0.0
  %3438 = vmatprep.subr.mxu0 0.0
  %3439 = vmatpush2.msra.mxu0 0.0
  %3440 = vmatprep.subr.mxu0 0.0
  %3441 = vmatpush2.msra.mxu0 0.0
  %3442 = vmatprep.subr.mxu0 0.0
  %3443 = vmatpush2.msra.mxu0 0.0
  %3444 = vmatprep.subr.mxu0 0.0
  %3445 = vmatpush2.msra.mxu0 0.0
  %3446 = vmatprep.subr.mxu0 0.0
  %3447 = vmatpush2.msra.mxu0 0.0
  %3448 = vmatprep.subr.mxu0 0.0
  %3449 = vmatpush2.msra.mxu0 0.0
  %3450 = vmatprep.subr.mxu0 0.0
  %3451 = vmatpush2.msra.mxu0 0.0
  %3452 = vmatprep.subr.mxu0 0.0
  %3453 = vmatpush2.msra.mxu0 0.0
  %3454 = vmatprep.mubr.f32.mxu0 0.0
  %v3455 = vand.u32 %v3025, 4294901760
  %3456 = vmatmul.mubr.f32.gmra.mxu0 %v3455
  %v3457 = vpop.f32.mrf.mxu0
  %v3458 = vadd.f32 %v3371, %v3457
  %v3459 = vpop.f32.mrf.mxu0
  %v3460 = vadd.f32 %v3373, %v3459
  %3461 = vmatprep.mubr.f32.mxu0 0.0
  %v3462 = vand.u32 %v3028, 4294901760
  %3463 = vmatmul.mubr.f32.gmra.mxu0 %v3462
  %v3464 = vpop.f32.mrf.mxu0
  %v3465 = vadd.f32 %v3380, %v3464
  %v3466 = vpop.f32.mrf.mxu0
  %v3467 = vadd.f32 %v3382, %v3466
  %3468 = vdwg.mxu0
  %3469 = vmatprep.subr.mxu0 0.0
  %3470 = vmatpush1.msra.mxu0 0.0
  %3471 = vmatprep.subr.mxu0 0.0
  %3472 = vmatpush1.msra.mxu0 0.0
  %3473 = vmatprep.subr.mxu0 0.0
  %3474 = vmatpush1.msra.mxu0 0.0
  %3475 = vmatprep.subr.mxu0 0.0
  %3476 = vmatpush1.msra.mxu0 0.0
  %3477 = vmatprep.subr.mxu0 0.0
  %3478 = vmatpush1.msra.mxu0 0.0
  %3479 = vmatprep.subr.mxu0 0.0
  %3480 = vmatpush1.msra.mxu0 0.0
  %3481 = vmatprep.subr.mxu0 0.0
  %3482 = vmatpush1.msra.mxu0 0.0
  %3483 = vmatprep.subr.mxu0 0.0
  %3484 = vmatpush1.msra.mxu0 0.0
  %3485 = vmatprep.subr.mxu0 0.0
  %3486 = vmatpush1.msra.mxu0 0.0
  %3487 = vmatprep.subr.mxu0 0.0
  %3488 = vmatpush1.msra.mxu0 0.0
  %3489 = vmatprep.subr.mxu0 0.0
  %3490 = vmatpush1.msra.mxu0 0.0
  %3491 = vmatprep.subr.mxu0 0.0
  %3492 = vmatpush1.msra.mxu0 0.0
  %3493 = vmatprep.subr.mxu0 0.0
  %3494 = vmatpush1.msra.mxu0 0.0
  %3495 = vmatprep.subr.mxu0 0.0
  %3496 = vmatpush1.msra.mxu0 0.0
  %3497 = vmatprep.subr.mxu0 0.0
  %3498 = vmatpush1.msra.mxu0 0.0
  %v3499 = vand.u32 %v3032, 4294901760
  %3500 = vmatprep.subr.mxu0 %v3499
  %v3501 = vand.u32 %v3030, 4294901760
  %3502 = vmatpush1.msra.mxu0 %v3501
  %3503 = vmatprep.subr.mxu0 0.0
  %3504 = vmatpush2.msra.mxu0 0.0
  %3505 = vmatprep.subr.mxu0 0.0
  %3506 = vmatpush2.msra.mxu0 0.0
  %3507 = vmatprep.subr.mxu0 0.0
  %3508 = vmatpush2.msra.mxu0 0.0
  %3509 = vmatprep.subr.mxu0 0.0
  %3510 = vmatpush2.msra.mxu0 0.0
  %3511 = vmatprep.subr.mxu0 0.0
  %3512 = vmatpush2.msra.mxu0 0.0
  %3513 = vmatprep.subr.mxu0 0.0
  %3514 = vmatpush2.msra.mxu0 0.0
  %3515 = vmatprep.subr.mxu0 0.0
  %3516 = vmatpush2.msra.mxu0 0.0
  %3517 = vmatprep.subr.mxu0 0.0
  %3518 = vmatpush2.msra.mxu0 0.0
  %3519 = vmatprep.subr.mxu0 0.0
  %3520 = vmatpush2.msra.mxu0 0.0
  %3521 = vmatprep.subr.mxu0 0.0
  %3522 = vmatpush2.msra.mxu0 0.0
  %3523 = vmatprep.subr.mxu0 0.0
  %3524 = vmatpush2.msra.mxu0 0.0
  %3525 = vmatprep.subr.mxu0 0.0
  %3526 = vmatpush2.msra.mxu0 0.0
  %3527 = vmatprep.subr.mxu0 0.0
  %3528 = vmatpush2.msra.mxu0 0.0
  %3529 = vmatprep.subr.mxu0 0.0
  %3530 = vmatpush2.msra.mxu0 0.0
  %3531 = vmatprep.subr.mxu0 0.0
  %3532 = vmatpush2.msra.mxu0 0.0
  %3533 = vmatprep.subr.mxu0 0.0
  %3534 = vmatpush2.msra.mxu0 0.0
  %3535 = vmatprep.mubr.f32.mxu0 0.0
  %v3536 = vand.u32 %v3025, 4294901760
  %3537 = vmatmul.mubr.f32.gmra.mxu0 %v3536
  %v3538 = vpop.f32.mrf.mxu0
  %v3539 = vadd.f32 %v3458, %v3538
  %v3540 = vpop.f32.mrf.mxu0
  %v3541 = vadd.f32 %v3460, %v3540
  %3542 = vmatprep.mubr.f32.mxu0 0.0
  %v3543 = vand.u32 %v3028, 4294901760
  %3544 = vmatmul.mubr.f32.gmra.mxu0 %v3543
  %v3545 = vpop.f32.mrf.mxu0
  %v3546 = vadd.f32 %v3465, %v3545
  %v3547 = vpop.f32.mrf.mxu0
  %v3548 = vadd.f32 %v3467, %v3547
  %3549 = vdwg.mxu0
  %3550 = vmatprep.subr.mxu0 0.0
  %3551 = vmatpush1.msra.mxu0 0.0
  %3552 = vmatprep.subr.mxu0 0.0
  %3553 = vmatpush1.msra.mxu0 0.0
  %3554 = vmatprep.subr.mxu0 0.0
  %3555 = vmatpush1.msra.mxu0 0.0
  %3556 = vmatprep.subr.mxu0 0.0
  %3557 = vmatpush1.msra.mxu0 0.0
  %3558 = vmatprep.subr.mxu0 0.0
  %3559 = vmatpush1.msra.mxu0 0.0
  %3560 = vmatprep.subr.mxu0 0.0
  %3561 = vmatpush1.msra.mxu0 0.0
  %3562 = vmatprep.subr.mxu0 0.0
  %3563 = vmatpush1.msra.mxu0 0.0
  %3564 = vmatprep.subr.mxu0 0.0
  %3565 = vmatpush1.msra.mxu0 0.0
  %3566 = vmatprep.subr.mxu0 0.0
  %3567 = vmatpush1.msra.mxu0 0.0
  %3568 = vmatprep.subr.mxu0 0.0
  %3569 = vmatpush1.msra.mxu0 0.0
  %3570 = vmatprep.subr.mxu0 0.0
  %3571 = vmatpush1.msra.mxu0 0.0
  %3572 = vmatprep.subr.mxu0 0.0
  %3573 = vmatpush1.msra.mxu0 0.0
  %3574 = vmatprep.subr.mxu0 0.0
  %3575 = vmatpush1.msra.mxu0 0.0
  %3576 = vmatprep.subr.mxu0 0.0
  %3577 = vmatpush1.msra.mxu0 0.0
  %3578 = vmatprep.subr.mxu0 0.0
  %3579 = vmatpush1.msra.mxu0 0.0
  %3580 = vmatprep.subr.mxu0 0.0
  %v3581 = vand.u32 %v3034, 4294901760
  %3582 = vmatpush1.msra.mxu0 %v3581
  %3583 = vmatprep.subr.mxu0 0.0
  %3584 = vmatpush2.msra.mxu0 0.0
  %3585 = vmatprep.subr.mxu0 0.0
  %3586 = vmatpush2.msra.mxu0 0.0
  %3587 = vmatprep.subr.mxu0 0.0
  %3588 = vmatpush2.msra.mxu0 0.0
  %3589 = vmatprep.subr.mxu0 0.0
  %3590 = vmatpush2.msra.mxu0 0.0
  %3591 = vmatprep.subr.mxu0 0.0
  %3592 = vmatpush2.msra.mxu0 0.0
  %3593 = vmatprep.subr.mxu0 0.0
  %3594 = vmatpush2.msra.mxu0 0.0
  %3595 = vmatprep.subr.mxu0 0.0
  %3596 = vmatpush2.msra.mxu0 0.0
  %3597 = vmatprep.subr.mxu0 0.0
  %3598 = vmatpush2.msra.mxu0 0.0
  %3599 = vmatprep.subr.mxu0 0.0
  %3600 = vmatpush2.msra.mxu0 0.0
  %3601 = vmatprep.subr.mxu0 0.0
  %3602 = vmatpush2.msra.mxu0 0.0
  %3603 = vmatprep.subr.mxu0 0.0
  %3604 = vmatpush2.msra.mxu0 0.0
  %3605 = vmatprep.subr.mxu0 0.0
  %3606 = vmatpush2.msra.mxu0 0.0
  %3607 = vmatprep.subr.mxu0 0.0
  %3608 = vmatpush2.msra.mxu0 0.0
  %3609 = vmatprep.subr.mxu0 0.0
  %3610 = vmatpush2.msra.mxu0 0.0
  %3611 = vmatprep.subr.mxu0 0.0
  %3612 = vmatpush2.msra.mxu0 0.0
  %3613 = vmatprep.subr.mxu0 0.0
  %3614 = vmatpush2.msra.mxu0 0.0
  %3615 = vmatprep.mubr.f32.mxu0 0.0
  %v3616 = vand.u32 %v3025, 4294901760
  %v3617 = vsub.f32 %v3025, %v3616
  %v3618 = vand.u32 %v3617, 4294901760
  %v3619 = vsub.f32 %v3617, %v3618
  %v3620 = vand.u32 %v3619, 4294901760
  %3621 = vmatmul.mubr.f32.gmra.mxu0 %v3620
  %v3622 = vpop.f32.mrf.mxu0
  %v3623 = vadd.f32 %v3014, %v3622
  %v3624 = vpop.f32.mrf.mxu0
  %3625 = vmatprep.mubr.f32.mxu0 0.0
  %v3626 = vand.u32 %v3028, 4294901760
  %v3627 = vsub.f32 %v3028, %v3626
  %v3628 = vand.u32 %v3627, 4294901760
  %v3629 = vsub.f32 %v3627, %v3628
  %v3630 = vand.u32 %v3629, 4294901760
  %3631 = vmatmul.mubr.f32.gmra.mxu0 %v3630
  %v3632 = vpop.f32.mrf.mxu0
  %v3633 = vadd.f32 %v3020, %v3632
  %v3634 = vpop.f32.mrf.mxu0
  %3635 = vdwg.mxu0
  %3636 = vmatprep.subr.mxu0 0.0
  %3637 = vmatpush1.msra.mxu0 0.0
  %3638 = vmatprep.subr.mxu0 0.0
  %3639 = vmatpush1.msra.mxu0 0.0
  %3640 = vmatprep.subr.mxu0 0.0
  %3641 = vmatpush1.msra.mxu0 0.0
  %3642 = vmatprep.subr.mxu0 0.0
  %3643 = vmatpush1.msra.mxu0 0.0
  %3644 = vmatprep.subr.mxu0 0.0
  %3645 = vmatpush1.msra.mxu0 0.0
  %3646 = vmatprep.subr.mxu0 0.0
  %3647 = vmatpush1.msra.mxu0 0.0
  %3648 = vmatprep.subr.mxu0 0.0
  %3649 = vmatpush1.msra.mxu0 0.0
  %3650 = vmatprep.subr.mxu0 0.0
  %3651 = vmatpush1.msra.mxu0 0.0
  %3652 = vmatprep.subr.mxu0 0.0
  %3653 = vmatpush1.msra.mxu0 0.0
  %3654 = vmatprep.subr.mxu0 0.0
  %3655 = vmatpush1.msra.mxu0 0.0
  %3656 = vmatprep.subr.mxu0 0.0
  %3657 = vmatpush1.msra.mxu0 0.0
  %3658 = vmatprep.subr.mxu0 0.0
  %3659 = vmatpush1.msra.mxu0 0.0
  %3660 = vmatprep.subr.mxu0 0.0
  %3661 = vmatpush1.msra.mxu0 0.0
  %3662 = vmatprep.subr.mxu0 0.0
  %3663 = vmatpush1.msra.mxu0 0.0
  %3664 = vmatprep.subr.mxu0 0.0
  %3665 = vmatpush1.msra.mxu0 0.0
  %3666 = vmatprep.subr.mxu0 0.0
  %v3667 = vand.u32 %v3034, 4294901760
  %v3668 = vsub.f32 %v3034, %v3667
  %v3669 = vand.u32 %v3668, 4294901760
  %v3670 = vsub.f32 %v3668, %v3669
  %v3671 = vand.u32 %v3670, 4294901760
  %3672 = vmatpush1.msra.mxu0 %v3671
  %3673 = vmatprep.subr.mxu0 0.0
  %3674 = vmatpush2.msra.mxu0 0.0
  %3675 = vmatprep.subr.mxu0 0.0
  %3676 = vmatpush2.msra.mxu0 0.0
  %3677 = vmatprep.subr.mxu0 0.0
  %3678 = vmatpush2.msra.mxu0 0.0
  %3679 = vmatprep.subr.mxu0 0.0
  %3680 = vmatpush2.msra.mxu0 0.0
  %3681 = vmatprep.subr.mxu0 0.0
  %3682 = vmatpush2.msra.mxu0 0.0
  %3683 = vmatprep.subr.mxu0 0.0
  %3684 = vmatpush2.msra.mxu0 0.0
  %3685 = vmatprep.subr.mxu0 0.0
  %3686 = vmatpush2.msra.mxu0 0.0
  %3687 = vmatprep.subr.mxu0 0.0
  %3688 = vmatpush2.msra.mxu0 0.0
  %3689 = vmatprep.subr.mxu0 0.0
  %3690 = vmatpush2.msra.mxu0 0.0
  %3691 = vmatprep.subr.mxu0 0.0
  %3692 = vmatpush2.msra.mxu0 0.0
  %3693 = vmatprep.subr.mxu0 0.0
  %3694 = vmatpush2.msra.mxu0 0.0
  %3695 = vmatprep.subr.mxu0 0.0
  %3696 = vmatpush2.msra.mxu0 0.0
  %3697 = vmatprep.subr.mxu0 0.0
  %3698 = vmatpush2.msra.mxu0 0.0
  %3699 = vmatprep.subr.mxu0 0.0
  %3700 = vmatpush2.msra.mxu0 0.0
  %3701 = vmatprep.subr.mxu0 0.0
  %3702 = vmatpush2.msra.mxu0 0.0
  %3703 = vmatprep.subr.mxu0 0.0
  %3704 = vmatpush2.msra.mxu0 0.0
  %3705 = vmatprep.mubr.f32.mxu0 0.0
  %v3706 = vand.u32 %v3025, 4294901760
  %3707 = vmatmul.mubr.f32.gmra.mxu0 %v3706
  %v3708 = vpop.f32.mrf.mxu0
  %v3709 = vadd.f32 %v3623, %v3708
  %v3710 = vpop.f32.mrf.mxu0
  %3711 = vmatprep.mubr.f32.mxu0 0.0
  %v3712 = vand.u32 %v3028, 4294901760
  %3713 = vmatmul.mubr.f32.gmra.mxu0 %v3712
  %v3714 = vpop.f32.mrf.mxu0
  %v3715 = vadd.f32 %v3633, %v3714
  %v3716 = vpop.f32.mrf.mxu0
  %3717 = vdwg.mxu0
  %3718 = vmatprep.subr.mxu0 0.0
  %3719 = vmatpush1.msra.mxu0 0.0
  %3720 = vmatprep.subr.mxu0 0.0
  %3721 = vmatpush1.msra.mxu0 0.0
  %3722 = vmatprep.subr.mxu0 0.0
  %3723 = vmatpush1.msra.mxu0 0.0
  %3724 = vmatprep.subr.mxu0 0.0
  %3725 = vmatpush1.msra.mxu0 0.0
  %3726 = vmatprep.subr.mxu0 0.0
  %3727 = vmatpush1.msra.mxu0 0.0
  %3728 = vmatprep.subr.mxu0 0.0
  %3729 = vmatpush1.msra.mxu0 0.0
  %3730 = vmatprep.subr.mxu0 0.0
  %3731 = vmatpush1.msra.mxu0 0.0
  %3732 = vmatprep.subr.mxu0 0.0
  %3733 = vmatpush1.msra.mxu0 0.0
  %3734 = vmatprep.subr.mxu0 0.0
  %3735 = vmatpush1.msra.mxu0 0.0
  %3736 = vmatprep.subr.mxu0 0.0
  %3737 = vmatpush1.msra.mxu0 0.0
  %3738 = vmatprep.subr.mxu0 0.0
  %3739 = vmatpush1.msra.mxu0 0.0
  %3740 = vmatprep.subr.mxu0 0.0
  %3741 = vmatpush1.msra.mxu0 0.0
  %3742 = vmatprep.subr.mxu0 0.0
  %3743 = vmatpush1.msra.mxu0 0.0
  %3744 = vmatprep.subr.mxu0 0.0
  %3745 = vmatpush1.msra.mxu0 0.0
  %3746 = vmatprep.subr.mxu0 0.0
  %3747 = vmatpush1.msra.mxu0 0.0
  %3748 = vmatprep.subr.mxu0 0.0
  %v3749 = vand.u32 %v3034, 4294901760
  %v3750 = vsub.f32 %v3034, %v3749
  %3751 = vmatpush1.msra.mxu0 %v3750
  %3752 = vmatprep.subr.mxu0 0.0
  %3753 = vmatpush2.msra.mxu0 0.0
  %3754 = vmatprep.subr.mxu0 0.0
  %3755 = vmatpush2.msra.mxu0 0.0
  %3756 = vmatprep.subr.mxu0 0.0
  %3757 = vmatpush2.msra.mxu0 0.0
  %3758 = vmatprep.subr.mxu0 0.0
  %3759 = vmatpush2.msra.mxu0 0.0
  %3760 = vmatprep.subr.mxu0 0.0
  %3761 = vmatpush2.msra.mxu0 0.0
  %3762 = vmatprep.subr.mxu0 0.0
  %3763 = vmatpush2.msra.mxu0 0.0
  %3764 = vmatprep.subr.mxu0 0.0
  %3765 = vmatpush2.msra.mxu0 0.0
  %3766 = vmatprep.subr.mxu0 0.0
  %3767 = vmatpush2.msra.mxu0 0.0
  %3768 = vmatprep.subr.mxu0 0.0
  %3769 = vmatpush2.msra.mxu0 0.0
  %3770 = vmatprep.subr.mxu0 0.0
  %3771 = vmatpush2.msra.mxu0 0.0
  %3772 = vmatprep.subr.mxu0 0.0
  %3773 = vmatpush2.msra.mxu0 0.0
  %3774 = vmatprep.subr.mxu0 0.0
  %3775 = vmatpush2.msra.mxu0 0.0
  %3776 = vmatprep.subr.mxu0 0.0
  %3777 = vmatpush2.msra.mxu0 0.0
  %3778 = vmatprep.subr.mxu0 0.0
  %3779 = vmatpush2.msra.mxu0 0.0
  %3780 = vmatprep.subr.mxu0 0.0
  %3781 = vmatpush2.msra.mxu0 0.0
  %3782 = vmatprep.subr.mxu0 0.0
  %3783 = vmatpush2.msra.mxu0 0.0
  %3784 = vmatprep.mubr.f32.mxu0 0.0
  %v3785 = vand.u32 %v3025, 4294901760
  %v3786 = vsub.f32 %v3025, %v3785
  %3787 = vmatmul.mubr.f32.gmra.mxu0 %v3786
  %v3788 = vpop.f32.mrf.mxu0
  %v3789 = vadd.f32 %v3709, %v3788
  %v3790 = vpop.f32.mrf.mxu0
  %3791 = vmatprep.mubr.f32.mxu0 0.0
  %v3792 = vand.u32 %v3028, 4294901760
  %v3793 = vsub.f32 %v3028, %v3792
  %3794 = vmatmul.mubr.f32.gmra.mxu0 %v3793
  %v3795 = vpop.f32.mrf.mxu0
  %v3796 = vadd.f32 %v3715, %v3795
  %v3797 = vpop.f32.mrf.mxu0
  %3798 = vdwg.mxu0
  %3799 = vmatprep.subr.mxu0 0.0
  %3800 = vmatpush1.msra.mxu0 0.0
  %3801 = vmatprep.subr.mxu0 0.0
  %3802 = vmatpush1.msra.mxu0 0.0
  %3803 = vmatprep.subr.mxu0 0.0
  %3804 = vmatpush1.msra.mxu0 0.0
  %3805 = vmatprep.subr.mxu0 0.0
  %3806 = vmatpush1.msra.mxu0 0.0
  %3807 = vmatprep.subr.mxu0 0.0
  %3808 = vmatpush1.msra.mxu0 0.0
  %3809 = vmatprep.subr.mxu0 0.0
  %3810 = vmatpush1.msra.mxu0 0.0
  %3811 = vmatprep.subr.mxu0 0.0
  %3812 = vmatpush1.msra.mxu0 0.0
  %3813 = vmatprep.subr.mxu0 0.0
  %3814 = vmatpush1.msra.mxu0 0.0
  %3815 = vmatprep.subr.mxu0 0.0
  %3816 = vmatpush1.msra.mxu0 0.0
  %3817 = vmatprep.subr.mxu0 0.0
  %3818 = vmatpush1.msra.mxu0 0.0
  %3819 = vmatprep.subr.mxu0 0.0
  %3820 = vmatpush1.msra.mxu0 0.0
  %3821 = vmatprep.subr.mxu0 0.0
  %3822 = vmatpush1.msra.mxu0 0.0
  %3823 = vmatprep.subr.mxu0 0.0
  %3824 = vmatpush1.msra.mxu0 0.0
  %3825 = vmatprep.subr.mxu0 0.0
  %3826 = vmatpush1.msra.mxu0 0.0
  %3827 = vmatprep.subr.mxu0 0.0
  %3828 = vmatpush1.msra.mxu0 0.0
  %3829 = vmatprep.subr.mxu0 0.0
  %v3830 = vand.u32 %v3034, 4294901760
  %3831 = vmatpush1.msra.mxu0 %v3830
  %3832 = vmatprep.subr.mxu0 0.0
  %3833 = vmatpush2.msra.mxu0 0.0
  %3834 = vmatprep.subr.mxu0 0.0
  %3835 = vmatpush2.msra.mxu0 0.0
  %3836 = vmatprep.subr.mxu0 0.0
  %3837 = vmatpush2.msra.mxu0 0.0
  %3838 = vmatprep.subr.mxu0 0.0
  %3839 = vmatpush2.msra.mxu0 0.0
  %3840 = vmatprep.subr.mxu0 0.0
  %3841 = vmatpush2.msra.mxu0 0.0
  %3842 = vmatprep.subr.mxu0 0.0
  %3843 = vmatpush2.msra.mxu0 0.0
  %3844 = vmatprep.subr.mxu0 0.0
  %3845 = vmatpush2.msra.mxu0 0.0
  %3846 = vmatprep.subr.mxu0 0.0
  %3847 = vmatpush2.msra.mxu0 0.0
  %3848 = vmatprep.subr.mxu0 0.0
  %3849 = vmatpush2.msra.mxu0 0.0
  %3850 = vmatprep.subr.mxu0 0.0
  %3851 = vmatpush2.msra.mxu0 0.0
  %3852 = vmatprep.subr.mxu0 0.0
  %3853 = vmatpush2.msra.mxu0 0.0
  %3854 = vmatprep.subr.mxu0 0.0
  %3855 = vmatpush2.msra.mxu0 0.0
  %3856 = vmatprep.subr.mxu0 0.0
  %3857 = vmatpush2.msra.mxu0 0.0
  %3858 = vmatprep.subr.mxu0 0.0
  %3859 = vmatpush2.msra.mxu0 0.0
  %3860 = vmatprep.subr.mxu0 0.0
  %3861 = vmatpush2.msra.mxu0 0.0
  %3862 = vmatprep.subr.mxu0 0.0
  %3863 = vmatpush2.msra.mxu0 0.0
  %3864 = vmatprep.mubr.f32.mxu0 0.0
  %v3865 = vand.u32 %v3025, 4294901760
  %v3866 = vsub.f32 %v3025, %v3865
  %v3867 = vand.u32 %v3866, 4294901760
  %3868 = vmatmul.mubr.f32.gmra.mxu0 %v3867
  %v3869 = vpop.f32.mrf.mxu0
  %v3870 = vadd.f32 %v3789, %v3869
  %v3871 = vpop.f32.mrf.mxu0
  %3872 = vmatprep.mubr.f32.mxu0 0.0
  %v3873 = vand.u32 %v3028, 4294901760
  %v3874 = vsub.f32 %v3028, %v3873
  %v3875 = vand.u32 %v3874, 4294901760
  %3876 = vmatmul.mubr.f32.gmra.mxu0 %v3875
  %v3877 = vpop.f32.mrf.mxu0
  %v3878 = vadd.f32 %v3796, %v3877
  %v3879 = vpop.f32.mrf.mxu0
  %3880 = vdwg.mxu0
  %3881 = vmatprep.subr.mxu0 0.0
  %3882 = vmatpush1.msra.mxu0 0.0
  %3883 = vmatprep.subr.mxu0 0.0
  %3884 = vmatpush1.msra.mxu0 0.0
  %3885 = vmatprep.subr.mxu0 0.0
  %3886 = vmatpush1.msra.mxu0 0.0
  %3887 = vmatprep.subr.mxu0 0.0
  %3888 = vmatpush1.msra.mxu0 0.0
  %3889 = vmatprep.subr.mxu0 0.0
  %3890 = vmatpush1.msra.mxu0 0.0
  %3891 = vmatprep.subr.mxu0 0.0
  %3892 = vmatpush1.msra.mxu0 0.0
  %3893 = vmatprep.subr.mxu0 0.0
  %3894 = vmatpush1.msra.mxu0 0.0
  %3895 = vmatprep.subr.mxu0 0.0
  %3896 = vmatpush1.msra.mxu0 0.0
  %3897 = vmatprep.subr.mxu0 0.0
  %3898 = vmatpush1.msra.mxu0 0.0
  %3899 = vmatprep.subr.mxu0 0.0
  %3900 = vmatpush1.msra.mxu0 0.0
  %3901 = vmatprep.subr.mxu0 0.0
  %3902 = vmatpush1.msra.mxu0 0.0
  %3903 = vmatprep.subr.mxu0 0.0
  %3904 = vmatpush1.msra.mxu0 0.0
  %3905 = vmatprep.subr.mxu0 0.0
  %3906 = vmatpush1.msra.mxu0 0.0
  %3907 = vmatprep.subr.mxu0 0.0
  %3908 = vmatpush1.msra.mxu0 0.0
  %3909 = vmatprep.subr.mxu0 0.0
  %3910 = vmatpush1.msra.mxu0 0.0
  %3911 = vmatprep.subr.mxu0 0.0
  %v3912 = vand.u32 %v3034, 4294901760
  %v3913 = vsub.f32 %v3034, %v3912
  %v3914 = vand.u32 %v3913, 4294901760
  %3915 = vmatpush1.msra.mxu0 %v3914
  %3916 = vmatprep.subr.mxu0 0.0
  %3917 = vmatpush2.msra.mxu0 0.0
  %3918 = vmatprep.subr.mxu0 0.0
  %3919 = vmatpush2.msra.mxu0 0.0
  %3920 = vmatprep.subr.mxu0 0.0
  %3921 = vmatpush2.msra.mxu0 0.0
  %3922 = vmatprep.subr.mxu0 0.0
  %3923 = vmatpush2.msra.mxu0 0.0
  %3924 = vmatprep.subr.mxu0 0.0
  %3925 = vmatpush2.msra.mxu0 0.0
  %3926 = vmatprep.subr.mxu0 0.0
  %3927 = vmatpush2.msra.mxu0 0.0
  %3928 = vmatprep.subr.mxu0 0.0
  %3929 = vmatpush2.msra.mxu0 0.0
  %3930 = vmatprep.subr.mxu0 0.0
  %3931 = vmatpush2.msra.mxu0 0.0
  %3932 = vmatprep.subr.mxu0 0.0
  %3933 = vmatpush2.msra.mxu0 0.0
  %3934 = vmatprep.subr.mxu0 0.0
  %3935 = vmatpush2.msra.mxu0 0.0
  %3936 = vmatprep.subr.mxu0 0.0
  %3937 = vmatpush2.msra.mxu0 0.0
  %3938 = vmatprep.subr.mxu0 0.0
  %3939 = vmatpush2.msra.mxu0 0.0
  %3940 = vmatprep.subr.mxu0 0.0
  %3941 = vmatpush2.msra.mxu0 0.0
  %3942 = vmatprep.subr.mxu0 0.0
  %3943 = vmatpush2.msra.mxu0 0.0
  %3944 = vmatprep.subr.mxu0 0.0
  %3945 = vmatpush2.msra.mxu0 0.0
  %3946 = vmatprep.subr.mxu0 0.0
  %3947 = vmatpush2.msra.mxu0 0.0
  %3948 = vmatprep.mubr.f32.mxu0 0.0
  %v3949 = vand.u32 %v3025, 4294901760
  %3950 = vmatmul.mubr.f32.gmra.mxu0 %v3949
  %v3951 = vpop.f32.mrf.mxu0
  %v3952 = vadd.f32 %v3870, %v3951
  %v3953 = vpop.f32.mrf.mxu0
  %3954 = vmatprep.mubr.f32.mxu0 0.0
  %v3955 = vand.u32 %v3028, 4294901760
  %3956 = vmatmul.mubr.f32.gmra.mxu0 %v3955
  %v3957 = vpop.f32.mrf.mxu0
  %v3958 = vadd.f32 %v3878, %v3957
  %v3959 = vpop.f32.mrf.mxu0
  %3960 = vdwg.mxu0
  %3961 = vmatprep.subr.mxu0 0.0
  %3962 = vmatpush1.msra.mxu0 0.0
  %3963 = vmatprep.subr.mxu0 0.0
  %3964 = vmatpush1.msra.mxu0 0.0
  %3965 = vmatprep.subr.mxu0 0.0
  %3966 = vmatpush1.msra.mxu0 0.0
  %3967 = vmatprep.subr.mxu0 0.0
  %3968 = vmatpush1.msra.mxu0 0.0
  %3969 = vmatprep.subr.mxu0 0.0
  %3970 = vmatpush1.msra.mxu0 0.0
  %3971 = vmatprep.subr.mxu0 0.0
  %3972 = vmatpush1.msra.mxu0 0.0
  %3973 = vmatprep.subr.mxu0 0.0
  %3974 = vmatpush1.msra.mxu0 0.0
  %3975 = vmatprep.subr.mxu0 0.0
  %3976 = vmatpush1.msra.mxu0 0.0
  %3977 = vmatprep.subr.mxu0 0.0
  %3978 = vmatpush1.msra.mxu0 0.0
  %3979 = vmatprep.subr.mxu0 0.0
  %3980 = vmatpush1.msra.mxu0 0.0
  %3981 = vmatprep.subr.mxu0 0.0
  %3982 = vmatpush1.msra.mxu0 0.0
  %3983 = vmatprep.subr.mxu0 0.0
  %3984 = vmatpush1.msra.mxu0 0.0
  %3985 = vmatprep.subr.mxu0 0.0
  %3986 = vmatpush1.msra.mxu0 0.0
  %3987 = vmatprep.subr.mxu0 0.0
  %3988 = vmatpush1.msra.mxu0 0.0
  %3989 = vmatprep.subr.mxu0 0.0
  %3990 = vmatpush1.msra.mxu0 0.0
  %3991 = vmatprep.subr.mxu0 0.0
  %v3992 = vand.u32 %v3034, 4294901760
  %3993 = vmatpush1.msra.mxu0 %v3992
  %3994 = vmatprep.subr.mxu0 0.0
  %3995 = vmatpush2.msra.mxu0 0.0
  %3996 = vmatprep.subr.mxu0 0.0
  %3997 = vmatpush2.msra.mxu0 0.0
  %3998 = vmatprep.subr.mxu0 0.0
  %3999 = vmatpush2.msra.mxu0 0.0
  %4000 = vmatprep.subr.mxu0 0.0
  %4001 = vmatpush2.msra.mxu0 0.0
  %4002 = vmatprep.subr.mxu0 0.0
  %4003 = vmatpush2.msra.mxu0 0.0
  %4004 = vmatprep.subr.mxu0 0.0
  %4005 = vmatpush2.msra.mxu0 0.0
  %4006 = vmatprep.subr.mxu0 0.0
  %4007 = vmatpush2.msra.mxu0 0.0
  %4008 = vmatprep.subr.mxu0 0.0
  %4009 = vmatpush2.msra.mxu0 0.0
  %4010 = vmatprep.subr.mxu0 0.0
  %4011 = vmatpush2.msra.mxu0 0.0
  %4012 = vmatprep.subr.mxu0 0.0
  %4013 = vmatpush2.msra.mxu0 0.0
  %4014 = vmatprep.subr.mxu0 0.0
  %4015 = vmatpush2.msra.mxu0 0.0
  %4016 = vmatprep.subr.mxu0 0.0
  %4017 = vmatpush2.msra.mxu0 0.0
  %4018 = vmatprep.subr.mxu0 0.0
  %4019 = vmatpush2.msra.mxu0 0.0
  %4020 = vmatprep.subr.mxu0 0.0
  %4021 = vmatpush2.msra.mxu0 0.0
  %4022 = vmatprep.subr.mxu0 0.0
  %4023 = vmatpush2.msra.mxu0 0.0
  %4024 = vmatprep.subr.mxu0 0.0
  %4025 = vmatpush2.msra.mxu0 0.0
  %4026 = vmatprep.mubr.f32.mxu0 0.0
  %v4027 = vand.u32 %v3025, 4294901760
  %4028 = vmatmul.mubr.f32.gmra.mxu0 %v4027
  %v4029 = vpop.f32.mrf.mxu0
  %v4030 = vadd.f32 %v3952, %v4029
  %v4031 = vpop.f32.mrf.mxu0
  %4032 = vmatprep.mubr.f32.mxu0 0.0
  %v4033 = vand.u32 %v3028, 4294901760
  %4034 = vmatmul.mubr.f32.gmra.mxu0 %v4033
  %v4035 = vpop.f32.mrf.mxu0
  %v4036 = vadd.f32 %v3958, %v4035
  %v4037 = vpop.f32.mrf.mxu0
  %4038 = vdwg.mxu0
  %v4039 = vld [vmem:[%s7] sm:$0xff]
  %v4040 = vld [vmem:[%s7 + $0x8] sm:$0xff]
  %v4041 = vld [vmem:[%s7 + $0x10] sm:$0x1]
  %v4042 = vld [vmem:[%s7 + $0x18] sm:$0x1]
  %v4043 = vld [vmem:[%s5] sm:$0xff]
  %v4044 = vld [vmem:[%s6] sm:$0xff]
  %v4045 = vlaneseq
  %v4046 = vshrl.u32 %v4045, 7
  %v4047 = vsub.s32 0, %v4046
  %v4048 = vrot.slane %v4039, %v4047
  %v4049 = vlaneseq
  %v4050 = vshrl.u32 %v4049, 7
  %v4051 = vsub.s32 0, %v4050
  %v4052 = vrot.slane %v4040, %v4051
  %v4053 = vmul.f32 %v3539, %v4048
  %v4054 = vmul.f32 %v3541, %v4052
  %v4055 = vlaneseq
  %v4056 = vshrl.u32 %v4055, 7
  %v4057 = vsub.s32 1, %v4056
  %v4058 = vrot.slane %v4039, %v4057
  %v4059 = vlaneseq
  %v4060 = vshrl.u32 %v4059, 7
  %v4061 = vsub.s32 1, %v4060
  %v4062 = vrot.slane %v4040, %v4061
  %4065 = vrot.lane.b32.xlu0 %v4058, 1
  %v4066 = vpop.permute.xlu0 %4065
  %4067 = vrot.lane.b32.xlu0 %v4062, 1
  %v4068 = vpop.permute.xlu0 %4067
  %v4069 = vsel %vm3023, %v4066, %v4068
  %v4073 = vmul.f32 %v3539, %v4066
  %v4074 = vmul.f32 %v3541, %v4069
  %v4075 = vmul.f32 %v4030, %v4068
  %v4076 = vlaneseq
  %v4077 = vshrl.u32 %v4076, 7
  %v4078 = vsub.s32 2, %v4077
  %v4079 = vrot.slane %v4039, %v4078
  %v4080 = vlaneseq
  %v4081 = vshrl.u32 %v4080, 7
  %v4082 = vsub.s32 2, %v4081
  %v4083 = vrot.slane %v4040, %v4082
  %4086 = vrot.lane.b32.xlu0 %v4079, 2
  %v4087 = vpop.permute.xlu0 %4086
  %4088 = vrot.lane.b32.xlu0 %v4083, 2
  %v4089 = vpop.permute.xlu0 %4088
  %vm4090 = vcmask 15360
  %v4091 = vsel %vm4090, %v4087, %v4089
  %v4095 = vmul.f32 %v3539, %v4087
  %v4096 = vmul.f32 %v3541, %v4091
  %v4097 = vmul.f32 %v4030, %v4089
  %v4098 = vlaneseq
  %v4099 = vshrl.u32 %v4098, 7
  %v4100 = vsub.s32 3, %v4099
  %v4101 = vrot.slane %v4039, %v4100
  %v4102 = vlaneseq
  %v4103 = vshrl.u32 %v4102, 7
  %v4104 = vsub.s32 3, %v4103
  %v4105 = vrot.slane %v4040, %v4104
  %4108 = vrot.lane.b32.xlu0 %v4101, 16
  %v4109 = vpop.permute.xlu0 %4108
  %4110 = vrot.lane.b32.xlu0 %v4105, 16
  %v4111 = vpop.permute.xlu0 %4110
  %vm4112 = vcmask 130048
  %v4113 = vsel %vm4112, %v4109, %v4111
  %v4117 = vmul.f32 %v3539, %v4109
  %v4118 = vmul.f32 %v3541, %v4113
  %v4119 = vmul.f32 %v4030, %v4111
  %v4120 = vlaneseq
  %v4121 = vshrl.u32 %v4120, 7
  %v4122 = vsub.s32 4, %v4121
  %v4123 = vrot.slane %v4039, %v4122
  %v4124 = vlaneseq
  %v4125 = vshrl.u32 %v4124, 7
  %v4126 = vsub.s32 4, %v4125
  %v4127 = vrot.slane %v4040, %v4126
  %4130 = vrot.lane.b32.xlu0 %v4123, 17
  %v4131 = vpop.permute.xlu0 %4130
  %4132 = vrot.lane.b32.xlu0 %v4127, 17
  %v4133 = vpop.permute.xlu0 %4132
  %vm4134 = vcmask 138240
  %v4135 = vsel %vm4134, %v4131, %v4133
  %v4139 = vmul.f32 %v3539, %v4131
  %v4140 = vmul.f32 %v3541, %v4135
  %v4141 = vmul.f32 %v4030, %v4133
  %v4142 = vlaneseq
  %v4143 = vshrl.u32 %v4142, 7
  %v4144 = vsub.s32 5, %v4143
  %v4145 = vrot.slane %v4039, %v4144
  %v4146 = vlaneseq
  %v4147 = vshrl.u32 %v4146, 7
  %v4148 = vsub.s32 5, %v4147
  %v4149 = vrot.slane %v4040, %v4148
  %4152 = vrot.lane.b32.xlu0 %v4145, 18
  %v4153 = vpop.permute.xlu0 %4152
  %4154 = vrot.lane.b32.xlu0 %v4149, 18
  %v4155 = vpop.permute.xlu0 %4154
  %vm4156 = vcmask 146432
  %v4157 = vsel %vm4156, %v4153, %v4155
  %v4161 = vmul.f32 %v3539, %v4153
  %v4162 = vmul.f32 %v3541, %v4157
  %v4163 = vmul.f32 %v4030, %v4155
  %v4164 = vlaneseq
  %v4165 = vshrl.u32 %v4164, 7
  %v4166 = vsub.s32 6, %v4165
  %v4167 = vrot.slane %v4039, %v4166
  %v4168 = vlaneseq
  %v4169 = vshrl.u32 %v4168, 7
  %v4170 = vsub.s32 6, %v4169
  %v4171 = vrot.slane %v4040, %v4170
  %4174 = vrot.lane.b32.xlu0 %v4167, 32
  %v4175 = vpop.permute.xlu0 %4174
  %4176 = vrot.lane.b32.xlu0 %v4171, 32
  %v4177 = vpop.permute.xlu0 %4176
  %vm4178 = vcmask 261120
  %v4179 = vsel %vm4178, %v4175, %v4177
  %v4183 = vmul.f32 %v3539, %v4175
  %v4184 = vmul.f32 %v3541, %v4179
  %v4185 = vmul.f32 %v4030, %v4177
  %v4186 = vlaneseq
  %v4187 = vshrl.u32 %v4186, 7
  %v4188 = vsub.s32 7, %v4187
  %v4189 = vrot.slane %v4039, %v4188
  %v4190 = vlaneseq
  %v4191 = vshrl.u32 %v4190, 7
  %v4192 = vsub.s32 7, %v4191
  %v4193 = vrot.slane %v4040, %v4192
  %4196 = vrot.lane.b32.xlu0 %v4189, 33
  %v4197 = vpop.permute.xlu0 %4196
  %4198 = vrot.lane.b32.xlu0 %v4193, 33
  %v4199 = vpop.permute.xlu0 %4198
  %vm4200 = vcmask 269312
  %v4201 = vsel %vm4200, %v4197, %v4199
  %v4205 = vmul.f32 %v3539, %v4197
  %v4206 = vmul.f32 %v3541, %v4201
  %v4207 = vmul.f32 %v4030, %v4199
  %v4208 = vlaneseq
  %v4209 = vshrl.u32 %v4208, 7
  %v4210 = vsub.s32 0, %v4209
  %v4211 = vrot.slane %v4041, %v4210
  %v4212 = vlaneseq
  %v4213 = vshrl.u32 %v4212, 7
  %v4214 = vsub.s32 0, %v4213
  %v4215 = vrot.slane %v4042, %v4214
  %4218 = vrot.lane.b32.xlu0 %v4211, 34
  %v4219 = vpop.permute.xlu0 %4218
  %4220 = vrot.lane.b32.xlu0 %v4215, 34
  %v4221 = vpop.permute.xlu0 %4220
  %vm4222 = vcmask 277504
  %v4223 = vsel %vm4222, %v4219, %v4221
  %v4227 = vmul.f32 %v3539, %v4219
  %v4228 = vmul.f32 %v3541, %v4223
  %v4229 = vmul.f32 %v4030, %v4221
  %4233 = vrot.lane.b32.xlu0 %v4073, 127
  %v4234 = vpop.permute.xlu0 %4233
  %4235 = vrot.lane.b32.xlu0 %v4074, 127
  %v4236 = vpop.permute.xlu0 %4235
  %4237 = vrot.lane.b32.xlu0 %v4075, 127
  %v4238 = vpop.permute.xlu0 %4237
  %vm4239 = vcmask 1039360
  %v4240 = vsel %vm4239, %v4234, %v4236
  %v4241 = vsel %vm4239, %v4236, %v4238
  %4247 = vrot.lane.b32.xlu0 %v4095, 126
  %v4248 = vpop.permute.xlu0 %4247
  %4249 = vrot.lane.b32.xlu0 %v4096, 126
  %v4250 = vpop.permute.xlu0 %4249
  %4251 = vrot.lane.b32.xlu0 %v4097, 126
  %v4252 = vpop.permute.xlu0 %4251
  %vm4253 = vcmask 1031168
  %v4254 = vsel %vm4253, %v4248, %v4250
  %v4255 = vsel %vm4253, %v4250, %v4252
  %4261 = vrot.lane.b32.xlu0 %v4117, 112
  %v4262 = vpop.permute.xlu0 %4261
  %4263 = vrot.lane.b32.xlu0 %v4118, 112
  %v4264 = vpop.permute.xlu0 %4263
  %4265 = vrot.lane.b32.xlu0 %v4119, 112
  %v4266 = vpop.permute.xlu0 %4265
  %vm4267 = vcmask 916480
  %v4268 = vsel %vm4267, %v4262, %v4264
  %v4269 = vsel %vm4267, %v4264, %v4266
  %4275 = vrot.lane.b32.xlu0 %v4139, 111
  %v4276 = vpop.permute.xlu0 %4275
  %4277 = vrot.lane.b32.xlu0 %v4140, 111
  %v4278 = vpop.permute.xlu0 %4277
  %4279 = vrot.lane.b32.xlu0 %v4141, 111
  %v4280 = vpop.permute.xlu0 %4279
  %vm4281 = vcmask 908288
  %v4282 = vsel %vm4281, %v4276, %v4278
  %v4283 = vsel %vm4281, %v4278, %v4280
  %4289 = vrot.lane.b32.xlu0 %v4161, 110
  %v4290 = vpop.permute.xlu0 %4289
  %4291 = vrot.lane.b32.xlu0 %v4162, 110
  %v4292 = vpop.permute.xlu0 %4291
  %4293 = vrot.lane.b32.xlu0 %v4163, 110
  %v4294 = vpop.permute.xlu0 %4293
  %vm4295 = vcmask 900096
  %v4296 = vsel %vm4295, %v4290, %v4292
  %v4297 = vsel %vm4295, %v4292, %v4294
  %4303 = vrot.lane.b32.xlu0 %v4183, 96
  %v4304 = vpop.permute.xlu0 %4303
  %4305 = vrot.lane.b32.xlu0 %v4184, 96
  %v4306 = vpop.permute.xlu0 %4305
  %4307 = vrot.lane.b32.xlu0 %v4185, 96
  %v4308 = vpop.permute.xlu0 %4307
  %vm4309 = vcmask 785408
  %v4310 = vsel %vm4309, %v4304, %v4306
  %v4311 = vsel %vm4309, %v4306, %v4308
  %4317 = vrot.lane.b32.xlu0 %v4205, 95
  %v4318 = vpop.permute.xlu0 %4317
  %4319 = vrot.lane.b32.xlu0 %v4206, 95
  %v4320 = vpop.permute.xlu0 %4319
  %4321 = vrot.lane.b32.xlu0 %v4207, 95
  %v4322 = vpop.permute.xlu0 %4321
  %vm4323 = vcmask 777216
  %v4324 = vsel %vm4323, %v4318, %v4320
  %v4325 = vsel %vm4323, %v4320, %v4322
  %4331 = vrot.lane.b32.xlu0 %v4227, 94
  %v4332 = vpop.permute.xlu0 %4331
  %4333 = vrot.lane.b32.xlu0 %v4228, 94
  %v4334 = vpop.permute.xlu0 %4333
  %4335 = vrot.lane.b32.xlu0 %v4229, 94
  %v4336 = vpop.permute.xlu0 %4335
  %vm4337 = vcmask 769024
  %v4338 = vsel %vm4337, %v4332, %v4334
  %v4339 = vsel %vm4337, %v4334, %v4336
  %4343 = vset.pattern.permute.xlu0 0
  %4344 = vperm.xlu0 %4343, %v4044
  %v4345 = vpop.permute.xlu0 %4344
  %vm4347 = vcmask 588800
  %v4349 = vsel %vm4347, %v4043, 0
  %4351 = vmatprep.subr.mxu0 0.0
  %4352 = vmatpush1.msra.mxu0 0.0
  %4353 = vmatprep.subr.mxu0 0.0
  %4354 = vmatpush1.msra.mxu0 0.0
  %4355 = vmatprep.subr.mxu0 0.0
  %4356 = vmatpush1.msra.mxu0 0.0
  %4357 = vmatprep.subr.mxu0 0.0
  %4358 = vmatpush1.msra.mxu0 0.0
  %4359 = vmatprep.subr.mxu0 0.0
  %4360 = vmatpush1.msra.mxu0 0.0
  %4361 = vmatprep.subr.mxu0 0.0
  %4362 = vmatpush1.msra.mxu0 0.0
  %4363 = vmatprep.subr.mxu0 0.0
  %4364 = vmatpush1.msra.mxu0 0.0
  %v4365 = vand.u32 %v4339, 4294901760
  %4366 = vmatprep.subr.mxu0 %v4365
  %v4367 = vand.u32 %v4338, 4294901760
  %4368 = vmatpush1.msra.mxu0 %v4367
  %v4369 = vand.u32 %v4325, 4294901760
  %4370 = vmatprep.subr.mxu0 %v4369
  %v4371 = vand.u32 %v4324, 4294901760
  %4372 = vmatpush1.msra.mxu0 %v4371
  %v4373 = vand.u32 %v4311, 4294901760
  %4374 = vmatprep.subr.mxu0 %v4373
  %v4375 = vand.u32 %v4310, 4294901760
  %4376 = vmatpush1.msra.mxu0 %v4375
  %v4377 = vand.u32 %v4297, 4294901760
  %4378 = vmatprep.subr.mxu0 %v4377
  %v4379 = vand.u32 %v4296, 4294901760
  %4380 = vmatpush1.msra.mxu0 %v4379
  %v4381 = vand.u32 %v4283, 4294901760
  %4382 = vmatprep.subr.mxu0 %v4381
  %v4383 = vand.u32 %v4282, 4294901760
  %4384 = vmatpush1.msra.mxu0 %v4383
  %v4385 = vand.u32 %v4269, 4294901760
  %4386 = vmatprep.subr.mxu0 %v4385
  %v4387 = vand.u32 %v4268, 4294901760
  %4388 = vmatpush1.msra.mxu0 %v4387
  %v4389 = vand.u32 %v4255, 4294901760
  %4390 = vmatprep.subr.mxu0 %v4389
  %v4391 = vand.u32 %v4254, 4294901760
  %4392 = vmatpush1.msra.mxu0 %v4391
  %v4393 = vand.u32 %v4241, 4294901760
  %4394 = vmatprep.subr.mxu0 %v4393
  %v4395 = vand.u32 %v4240, 4294901760
  %4396 = vmatpush1.msra.mxu0 %v4395
  %v4397 = vand.u32 %v4054, 4294901760
  %4398 = vmatprep.subr.mxu0 %v4397
  %v4399 = vand.u32 %v4053, 4294901760
  %4400 = vmatpush1.msra.mxu0 %v4399
  %4401 = vmatprep.subr.mxu0 0.0
  %4402 = vmatpush2.msra.mxu0 0.0
  %4403 = vmatprep.subr.mxu0 0.0
  %4404 = vmatpush2.msra.mxu0 0.0
  %4405 = vmatprep.subr.mxu0 0.0
  %4406 = vmatpush2.msra.mxu0 0.0
  %4407 = vmatprep.subr.mxu0 0.0
  %4408 = vmatpush2.msra.mxu0 0.0
  %4409 = vmatprep.subr.mxu0 0.0
  %4410 = vmatpush2.msra.mxu0 0.0
  %4411 = vmatprep.subr.mxu0 0.0
  %4412 = vmatpush2.msra.mxu0 0.0
  %4413 = vmatprep.subr.mxu0 0.0
  %4414 = vmatpush2.msra.mxu0 0.0
  %4415 = vmatprep.subr.mxu0 0.0
  %4416 = vmatpush2.msra.mxu0 0.0
  %4417 = vmatprep.subr.mxu0 0.0
  %4418 = vmatpush2.msra.mxu0 0.0
  %4419 = vmatprep.subr.mxu0 0.0
  %4420 = vmatpush2.msra.mxu0 0.0
  %4421 = vmatprep.subr.mxu0 0.0
  %4422 = vmatpush2.msra.mxu0 0.0
  %4423 = vmatprep.subr.mxu0 0.0
  %4424 = vmatpush2.msra.mxu0 0.0
  %4425 = vmatprep.subr.mxu0 0.0
  %4426 = vmatpush2.msra.mxu0 0.0
  %4427 = vmatprep.subr.mxu0 0.0
  %4428 = vmatpush2.msra.mxu0 0.0
  %4429 = vmatprep.subr.mxu0 0.0
  %4430 = vmatpush2.msra.mxu0 0.0
  %4431 = vmatprep.subr.mxu0 0.0
  %4432 = vmatpush2.msra.mxu0 0.0
  %4433 = vmatprep.mubr.f32.mxu0 0.0
  %v4434 = vand.u32 %v4349, 4294901760
  %v4435 = vsub.f32 %v4349, %v4434
  %v4436 = vand.u32 %v4435, 4294901760
  %v4437 = vsub.f32 %v4435, %v4436
  %v4438 = vand.u32 %v4437, 4294901760
  %4439 = vmatmul.mubr.f32.gmra.mxu0 %v4438
  %v4440 = vpop.f32.mrf.mxu0
  %v4441 = vadd.f32 %v4345, %v4440
  %v4442 = vpop.f32.mrf.mxu0
  %v4443 = vadd.f32 %v4345, %v4442
  %4444 = vdwg.mxu0
  %4445 = vmatprep.subr.mxu0 0.0
  %4446 = vmatpush1.msra.mxu0 0.0
  %4447 = vmatprep.subr.mxu0 0.0
  %4448 = vmatpush1.msra.mxu0 0.0
  %4449 = vmatprep.subr.mxu0 0.0
  %4450 = vmatpush1.msra.mxu0 0.0
  %4451 = vmatprep.subr.mxu0 0.0
  %4452 = vmatpush1.msra.mxu0 0.0
  %4453 = vmatprep.subr.mxu0 0.0
  %4454 = vmatpush1.msra.mxu0 0.0
  %4455 = vmatprep.subr.mxu0 0.0
  %4456 = vmatpush1.msra.mxu0 0.0
  %4457 = vmatprep.subr.mxu0 0.0
  %4458 = vmatpush1.msra.mxu0 0.0
  %v4459 = vand.u32 %v4339, 4294901760
  %v4460 = vsub.f32 %v4339, %v4459
  %v4461 = vand.u32 %v4460, 4294901760
  %v4462 = vsub.f32 %v4460, %v4461
  %v4463 = vand.u32 %v4462, 4294901760
  %4464 = vmatprep.subr.mxu0 %v4463
  %v4465 = vand.u32 %v4338, 4294901760
  %v4466 = vsub.f32 %v4338, %v4465
  %v4467 = vand.u32 %v4466, 4294901760
  %v4468 = vsub.f32 %v4466, %v4467
  %v4469 = vand.u32 %v4468, 4294901760
  %4470 = vmatpush1.msra.mxu0 %v4469
  %v4471 = vand.u32 %v4325, 4294901760
  %v4472 = vsub.f32 %v4325, %v4471
  %v4473 = vand.u32 %v4472, 4294901760
  %v4474 = vsub.f32 %v4472, %v4473
  %v4475 = vand.u32 %v4474, 4294901760
  %4476 = vmatprep.subr.mxu0 %v4475
  %v4477 = vand.u32 %v4324, 4294901760
  %v4478 = vsub.f32 %v4324, %v4477
  %v4479 = vand.u32 %v4478, 4294901760
  %v4480 = vsub.f32 %v4478, %v4479
  %v4481 = vand.u32 %v4480, 4294901760
  %4482 = vmatpush1.msra.mxu0 %v4481
  %v4483 = vand.u32 %v4311, 4294901760
  %v4484 = vsub.f32 %v4311, %v4483
  %v4485 = vand.u32 %v4484, 4294901760
  %v4486 = vsub.f32 %v4484, %v4485
  %v4487 = vand.u32 %v4486, 4294901760
  %4488 = vmatprep.subr.mxu0 %v4487
  %v4489 = vand.u32 %v4310, 4294901760
  %v4490 = vsub.f32 %v4310, %v4489
  %v4491 = vand.u32 %v4490, 4294901760
  %v4492 = vsub.f32 %v4490, %v4491
  %v4493 = vand.u32 %v4492, 4294901760
  %4494 = vmatpush1.msra.mxu0 %v4493
  %v4495 = vand.u32 %v4297, 4294901760
  %v4496 = vsub.f32 %v4297, %v4495
  %v4497 = vand.u32 %v4496, 4294901760
  %v4498 = vsub.f32 %v4496, %v4497
  %v4499 = vand.u32 %v4498, 4294901760
  %4500 = vmatprep.subr.mxu0 %v4499
  %v4501 = vand.u32 %v4296, 4294901760
  %v4502 = vsub.f32 %v4296, %v4501
  %v4503 = vand.u32 %v4502, 4294901760
  %v4504 = vsub.f32 %v4502, %v4503
  %v4505 = vand.u32 %v4504, 4294901760
  %4506 = vmatpush1.msra.mxu0 %v4505
  %v4507 = vand.u32 %v4283, 4294901760
  %v4508 = vsub.f32 %v4283, %v4507
  %v4509 = vand.u32 %v4508, 4294901760
  %v4510 = vsub.f32 %v4508, %v4509
  %v4511 = vand.u32 %v4510, 4294901760
  %4512 = vmatprep.subr.mxu0 %v4511
  %v4513 = vand.u32 %v4282, 4294901760
  %v4514 = vsub.f32 %v4282, %v4513
  %v4515 = vand.u32 %v4514, 4294901760
  %v4516 = vsub.f32 %v4514, %v4515
  %v4517 = vand.u32 %v4516, 4294901760
  %4518 = vmatpush1.msra.mxu0 %v4517
  %v4519 = vand.u32 %v4269, 4294901760
  %v4520 = vsub.f32 %v4269, %v4519
  %v4521 = vand.u32 %v4520, 4294901760
  %v4522 = vsub.f32 %v4520, %v4521
  %v4523 = vand.u32 %v4522, 4294901760
  %4524 = vmatprep.subr.mxu0 %v4523
  %v4525 = vand.u32 %v4268, 4294901760
  %v4526 = vsub.f32 %v4268, %v4525
  %v4527 = vand.u32 %v4526, 4294901760
  %v4528 = vsub.f32 %v4526, %v4527
  %v4529 = vand.u32 %v4528, 4294901760
  %4530 = vmatpush1.msra.mxu0 %v4529
  %v4531 = vand.u32 %v4255, 4294901760
  %v4532 = vsub.f32 %v4255, %v4531
  %v4533 = vand.u32 %v4532, 4294901760
  %v4534 = vsub.f32 %v4532, %v4533
  %v4535 = vand.u32 %v4534, 4294901760
  %4536 = vmatprep.subr.mxu0 %v4535
  %v4537 = vand.u32 %v4254, 4294901760
  %v4538 = vsub.f32 %v4254, %v4537
  %v4539 = vand.u32 %v4538, 4294901760
  %v4540 = vsub.f32 %v4538, %v4539
  %v4541 = vand.u32 %v4540, 4294901760
  %4542 = vmatpush1.msra.mxu0 %v4541
  %v4543 = vand.u32 %v4241, 4294901760
  %v4544 = vsub.f32 %v4241, %v4543
  %v4545 = vand.u32 %v4544, 4294901760
  %v4546 = vsub.f32 %v4544, %v4545
  %v4547 = vand.u32 %v4546, 4294901760
  %4548 = vmatprep.subr.mxu0 %v4547
  %v4549 = vand.u32 %v4240, 4294901760
  %v4550 = vsub.f32 %v4240, %v4549
  %v4551 = vand.u32 %v4550, 4294901760
  %v4552 = vsub.f32 %v4550, %v4551
  %v4553 = vand.u32 %v4552, 4294901760
  %4554 = vmatpush1.msra.mxu0 %v4553
  %v4555 = vand.u32 %v4054, 4294901760
  %v4556 = vsub.f32 %v4054, %v4555
  %v4557 = vand.u32 %v4556, 4294901760
  %v4558 = vsub.f32 %v4556, %v4557
  %v4559 = vand.u32 %v4558, 4294901760
  %4560 = vmatprep.subr.mxu0 %v4559
  %v4561 = vand.u32 %v4053, 4294901760
  %v4562 = vsub.f32 %v4053, %v4561
  %v4563 = vand.u32 %v4562, 4294901760
  %v4564 = vsub.f32 %v4562, %v4563
  %v4565 = vand.u32 %v4564, 4294901760
  %4566 = vmatpush1.msra.mxu0 %v4565
  %4567 = vmatprep.subr.mxu0 0.0
  %4568 = vmatpush2.msra.mxu0 0.0
  %4569 = vmatprep.subr.mxu0 0.0
  %4570 = vmatpush2.msra.mxu0 0.0
  %4571 = vmatprep.subr.mxu0 0.0
  %4572 = vmatpush2.msra.mxu0 0.0
  %4573 = vmatprep.subr.mxu0 0.0
  %4574 = vmatpush2.msra.mxu0 0.0
  %4575 = vmatprep.subr.mxu0 0.0
  %4576 = vmatpush2.msra.mxu0 0.0
  %4577 = vmatprep.subr.mxu0 0.0
  %4578 = vmatpush2.msra.mxu0 0.0
  %4579 = vmatprep.subr.mxu0 0.0
  %4580 = vmatpush2.msra.mxu0 0.0
  %4581 = vmatprep.subr.mxu0 0.0
  %4582 = vmatpush2.msra.mxu0 0.0
  %4583 = vmatprep.subr.mxu0 0.0
  %4584 = vmatpush2.msra.mxu0 0.0
  %4585 = vmatprep.subr.mxu0 0.0
  %4586 = vmatpush2.msra.mxu0 0.0
  %4587 = vmatprep.subr.mxu0 0.0
  %4588 = vmatpush2.msra.mxu0 0.0
  %4589 = vmatprep.subr.mxu0 0.0
  %4590 = vmatpush2.msra.mxu0 0.0
  %4591 = vmatprep.subr.mxu0 0.0
  %4592 = vmatpush2.msra.mxu0 0.0
  %4593 = vmatprep.subr.mxu0 0.0
  %4594 = vmatpush2.msra.mxu0 0.0
  %4595 = vmatprep.subr.mxu0 0.0
  %4596 = vmatpush2.msra.mxu0 0.0
  %4597 = vmatprep.subr.mxu0 0.0
  %4598 = vmatpush2.msra.mxu0 0.0
  %4599 = vmatprep.mubr.f32.mxu0 0.0
  %v4600 = vand.u32 %v4349, 4294901760
  %4601 = vmatmul.mubr.f32.gmra.mxu0 %v4600
  %v4602 = vpop.f32.mrf.mxu0
  %v4603 = vadd.f32 %v4441, %v4602
  %v4604 = vpop.f32.mrf.mxu0
  %v4605 = vadd.f32 %v4443, %v4604
  %4606 = vdwg.mxu0
  %4607 = vmatprep.subr.mxu0 0.0
  %4608 = vmatpush1.msra.mxu0 0.0
  %4609 = vmatprep.subr.mxu0 0.0
  %4610 = vmatpush1.msra.mxu0 0.0
  %4611 = vmatprep.subr.mxu0 0.0
  %4612 = vmatpush1.msra.mxu0 0.0
  %4613 = vmatprep.subr.mxu0 0.0
  %4614 = vmatpush1.msra.mxu0 0.0
  %4615 = vmatprep.subr.mxu0 0.0
  %4616 = vmatpush1.msra.mxu0 0.0
  %4617 = vmatprep.subr.mxu0 0.0
  %4618 = vmatpush1.msra.mxu0 0.0
  %4619 = vmatprep.subr.mxu0 0.0
  %4620 = vmatpush1.msra.mxu0 0.0
  %v4621 = vand.u32 %v4339, 4294901760
  %v4622 = vsub.f32 %v4339, %v4621
  %4623 = vmatprep.subr.mxu0 %v4622
  %v4624 = vand.u32 %v4338, 4294901760
  %v4625 = vsub.f32 %v4338, %v4624
  %4626 = vmatpush1.msra.mxu0 %v4625
  %v4627 = vand.u32 %v4325, 4294901760
  %v4628 = vsub.f32 %v4325, %v4627
  %4629 = vmatprep.subr.mxu0 %v4628
  %v4630 = vand.u32 %v4324, 4294901760
  %v4631 = vsub.f32 %v4324, %v4630
  %4632 = vmatpush1.msra.mxu0 %v4631
  %v4633 = vand.u32 %v4311, 4294901760
  %v4634 = vsub.f32 %v4311, %v4633
  %4635 = vmatprep.subr.mxu0 %v4634
  %v4636 = vand.u32 %v4310, 4294901760
  %v4637 = vsub.f32 %v4310, %v4636
  %4638 = vmatpush1.msra.mxu0 %v4637
  %v4639 = vand.u32 %v4297, 4294901760
  %v4640 = vsub.f32 %v4297, %v4639
  %4641 = vmatprep.subr.mxu0 %v4640
  %v4642 = vand.u32 %v4296, 4294901760
  %v4643 = vsub.f32 %v4296, %v4642
  %4644 = vmatpush1.msra.mxu0 %v4643
  %v4645 = vand.u32 %v4283, 4294901760
  %v4646 = vsub.f32 %v4283, %v4645
  %4647 = vmatprep.subr.mxu0 %v4646
  %v4648 = vand.u32 %v4282, 4294901760
  %v4649 = vsub.f32 %v4282, %v4648
  %4650 = vmatpush1.msra.mxu0 %v4649
  %v4651 = vand.u32 %v4269, 4294901760
  %v4652 = vsub.f32 %v4269, %v4651
  %4653 = vmatprep.subr.mxu0 %v4652
  %v4654 = vand.u32 %v4268, 4294901760
  %v4655 = vsub.f32 %v4268, %v4654
  %4656 = vmatpush1.msra.mxu0 %v4655
  %v4657 = vand.u32 %v4255, 4294901760
  %v4658 = vsub.f32 %v4255, %v4657
  %4659 = vmatprep.subr.mxu0 %v4658
  %v4660 = vand.u32 %v4254, 4294901760
  %v4661 = vsub.f32 %v4254, %v4660
  %4662 = vmatpush1.msra.mxu0 %v4661
  %v4663 = vand.u32 %v4241, 4294901760
  %v4664 = vsub.f32 %v4241, %v4663
  %4665 = vmatprep.subr.mxu0 %v4664
  %v4666 = vand.u32 %v4240, 4294901760
  %v4667 = vsub.f32 %v4240, %v4666
  %4668 = vmatpush1.msra.mxu0 %v4667
  %v4669 = vand.u32 %v4054, 4294901760
  %v4670 = vsub.f32 %v4054, %v4669
  %4671 = vmatprep.subr.mxu0 %v4670
  %v4672 = vand.u32 %v4053, 4294901760
  %v4673 = vsub.f32 %v4053, %v4672
  %4674 = vmatpush1.msra.mxu0 %v4673
  %4675 = vmatprep.subr.mxu0 0.0
  %4676 = vmatpush2.msra.mxu0 0.0
  %4677 = vmatprep.subr.mxu0 0.0
  %4678 = vmatpush2.msra.mxu0 0.0
  %4679 = vmatprep.subr.mxu0 0.0
  %4680 = vmatpush2.msra.mxu0 0.0
  %4681 = vmatprep.subr.mxu0 0.0
  %4682 = vmatpush2.msra.mxu0 0.0
  %4683 = vmatprep.subr.mxu0 0.0
  %4684 = vmatpush2.msra.mxu0 0.0
  %4685 = vmatprep.subr.mxu0 0.0
  %4686 = vmatpush2.msra.mxu0 0.0
  %4687 = vmatprep.subr.mxu0 0.0
  %4688 = vmatpush2.msra.mxu0 0.0
  %4689 = vmatprep.subr.mxu0 0.0
  %4690 = vmatpush2.msra.mxu0 0.0
  %4691 = vmatprep.subr.mxu0 0.0
  %4692 = vmatpush2.msra.mxu0 0.0
  %4693 = vmatprep.subr.mxu0 0.0
  %4694 = vmatpush2.msra.mxu0 0.0
  %4695 = vmatprep.subr.mxu0 0.0
  %4696 = vmatpush2.msra.mxu0 0.0
  %4697 = vmatprep.subr.mxu0 0.0
  %4698 = vmatpush2.msra.mxu0 0.0
  %4699 = vmatprep.subr.mxu0 0.0
  %4700 = vmatpush2.msra.mxu0 0.0
  %4701 = vmatprep.subr.mxu0 0.0
  %4702 = vmatpush2.msra.mxu0 0.0
  %4703 = vmatprep.subr.mxu0 0.0
  %4704 = vmatpush2.msra.mxu0 0.0
  %4705 = vmatprep.subr.mxu0 0.0
  %4706 = vmatpush2.msra.mxu0 0.0
  %4707 = vmatprep.mubr.f32.mxu0 0.0
  %v4708 = vand.u32 %v4349, 4294901760
  %v4709 = vsub.f32 %v4349, %v4708
  %4710 = vmatmul.mubr.f32.gmra.mxu0 %v4709
  %v4711 = vpop.f32.mrf.mxu0
  %v4712 = vadd.f32 %v4603, %v4711
  %v4713 = vpop.f32.mrf.mxu0
  %v4714 = vadd.f32 %v4605, %v4713
  %4715 = vdwg.mxu0
  %4716 = vmatprep.subr.mxu0 0.0
  %4717 = vmatpush1.msra.mxu0 0.0
  %4718 = vmatprep.subr.mxu0 0.0
  %4719 = vmatpush1.msra.mxu0 0.0
  %4720 = vmatprep.subr.mxu0 0.0
  %4721 = vmatpush1.msra.mxu0 0.0
  %4722 = vmatprep.subr.mxu0 0.0
  %4723 = vmatpush1.msra.mxu0 0.0
  %4724 = vmatprep.subr.mxu0 0.0
  %4725 = vmatpush1.msra.mxu0 0.0
  %4726 = vmatprep.subr.mxu0 0.0
  %4727 = vmatpush1.msra.mxu0 0.0
  %4728 = vmatprep.subr.mxu0 0.0
  %4729 = vmatpush1.msra.mxu0 0.0
  %v4730 = vand.u32 %v4339, 4294901760
  %4731 = vmatprep.subr.mxu0 %v4730
  %v4732 = vand.u32 %v4338, 4294901760
  %4733 = vmatpush1.msra.mxu0 %v4732
  %v4734 = vand.u32 %v4325, 4294901760
  %4735 = vmatprep.subr.mxu0 %v4734
  %v4736 = vand.u32 %v4324, 4294901760
  %4737 = vmatpush1.msra.mxu0 %v4736
  %v4738 = vand.u32 %v4311, 4294901760
  %4739 = vmatprep.subr.mxu0 %v4738
  %v4740 = vand.u32 %v4310, 4294901760
  %4741 = vmatpush1.msra.mxu0 %v4740
  %v4742 = vand.u32 %v4297, 4294901760
  %4743 = vmatprep.subr.mxu0 %v4742
  %v4744 = vand.u32 %v4296, 4294901760
  %4745 = vmatpush1.msra.mxu0 %v4744
  %v4746 = vand.u32 %v4283, 4294901760
  %4747 = vmatprep.subr.mxu0 %v4746
  %v4748 = vand.u32 %v4282, 4294901760
  %4749 = vmatpush1.msra.mxu0 %v4748
  %v4750 = vand.u32 %v4269, 4294901760
  %4751 = vmatprep.subr.mxu0 %v4750
  %v4752 = vand.u32 %v4268, 4294901760
  %4753 = vmatpush1.msra.mxu0 %v4752
  %v4754 = vand.u32 %v4255, 4294901760
  %4755 = vmatprep.subr.mxu0 %v4754
  %v4756 = vand.u32 %v4254, 4294901760
  %4757 = vmatpush1.msra.mxu0 %v4756
  %v4758 = vand.u32 %v4241, 4294901760
  %4759 = vmatprep.subr.mxu0 %v4758
  %v4760 = vand.u32 %v4240, 4294901760
  %4761 = vmatpush1.msra.mxu0 %v4760
  %v4762 = vand.u32 %v4054, 4294901760
  %4763 = vmatprep.subr.mxu0 %v4762
  %v4764 = vand.u32 %v4053, 4294901760
  %4765 = vmatpush1.msra.mxu0 %v4764
  %4766 = vmatprep.subr.mxu0 0.0
  %4767 = vmatpush2.msra.mxu0 0.0
  %4768 = vmatprep.subr.mxu0 0.0
  %4769 = vmatpush2.msra.mxu0 0.0
  %4770 = vmatprep.subr.mxu0 0.0
  %4771 = vmatpush2.msra.mxu0 0.0
  %4772 = vmatprep.subr.mxu0 0.0
  %4773 = vmatpush2.msra.mxu0 0.0
  %4774 = vmatprep.subr.mxu0 0.0
  %4775 = vmatpush2.msra.mxu0 0.0
  %4776 = vmatprep.subr.mxu0 0.0
  %4777 = vmatpush2.msra.mxu0 0.0
  %4778 = vmatprep.subr.mxu0 0.0
  %4779 = vmatpush2.msra.mxu0 0.0
  %4780 = vmatprep.subr.mxu0 0.0
  %4781 = vmatpush2.msra.mxu0 0.0
  %4782 = vmatprep.subr.mxu0 0.0
  %4783 = vmatpush2.msra.mxu0 0.0
  %4784 = vmatprep.subr.mxu0 0.0
  %4785 = vmatpush2.msra.mxu0 0.0
  %4786 = vmatprep.subr.mxu0 0.0
  %4787 = vmatpush2.msra.mxu0 0.0
  %4788 = vmatprep.subr.mxu0 0.0
  %4789 = vmatpush2.msra.mxu0 0.0
  %4790 = vmatprep.subr.mxu0 0.0
  %4791 = vmatpush2.msra.mxu0 0.0
  %4792 = vmatprep.subr.mxu0 0.0
  %4793 = vmatpush2.msra.mxu0 0.0
  %4794 = vmatprep.subr.mxu0 0.0
  %4795 = vmatpush2.msra.mxu0 0.0
  %4796 = vmatprep.subr.mxu0 0.0
  %4797 = vmatpush2.msra.mxu0 0.0
  %4798 = vmatprep.mubr.f32.mxu0 0.0
  %v4799 = vand.u32 %v4349, 4294901760
  %v4800 = vsub.f32 %v4349, %v4799
  %v4801 = vand.u32 %v4800, 4294901760
  %4802 = vmatmul.mubr.f32.gmra.mxu0 %v4801
  %v4803 = vpop.f32.mrf.mxu0
  %v4804 = vadd.f32 %v4712, %v4803
  %v4805 = vpop.f32.mrf.mxu0
  %v4806 = vadd.f32 %v4714, %v4805
  %4807 = vdwg.mxu0
  %4808 = vmatprep.subr.mxu0 0.0
  %4809 = vmatpush1.msra.mxu0 0.0
  %4810 = vmatprep.subr.mxu0 0.0
  %4811 = vmatpush1.msra.mxu0 0.0
  %4812 = vmatprep.subr.mxu0 0.0
  %4813 = vmatpush1.msra.mxu0 0.0
  %4814 = vmatprep.subr.mxu0 0.0
  %4815 = vmatpush1.msra.mxu0 0.0
  %4816 = vmatprep.subr.mxu0 0.0
  %4817 = vmatpush1.msra.mxu0 0.0
  %4818 = vmatprep.subr.mxu0 0.0
  %4819 = vmatpush1.msra.mxu0 0.0
  %4820 = vmatprep.subr.mxu0 0.0
  %4821 = vmatpush1.msra.mxu0 0.0
  %v4822 = vand.u32 %v4339, 4294901760
  %v4823 = vsub.f32 %v4339, %v4822
  %v4824 = vand.u32 %v4823, 4294901760
  %4825 = vmatprep.subr.mxu0 %v4824
  %v4826 = vand.u32 %v4338, 4294901760
  %v4827 = vsub.f32 %v4338, %v4826
  %v4828 = vand.u32 %v4827, 4294901760
  %4829 = vmatpush1.msra.mxu0 %v4828
  %v4830 = vand.u32 %v4325, 4294901760
  %v4831 = vsub.f32 %v4325, %v4830
  %v4832 = vand.u32 %v4831, 4294901760
  %4833 = vmatprep.subr.mxu0 %v4832
  %v4834 = vand.u32 %v4324, 4294901760
  %v4835 = vsub.f32 %v4324, %v4834
  %v4836 = vand.u32 %v4835, 4294901760
  %4837 = vmatpush1.msra.mxu0 %v4836
  %v4838 = vand.u32 %v4311, 4294901760
  %v4839 = vsub.f32 %v4311, %v4838
  %v4840 = vand.u32 %v4839, 4294901760
  %4841 = vmatprep.subr.mxu0 %v4840
  %v4842 = vand.u32 %v4310, 4294901760
  %v4843 = vsub.f32 %v4310, %v4842
  %v4844 = vand.u32 %v4843, 4294901760
  %4845 = vmatpush1.msra.mxu0 %v4844
  %v4846 = vand.u32 %v4297, 4294901760
  %v4847 = vsub.f32 %v4297, %v4846
  %v4848 = vand.u32 %v4847, 4294901760
  %4849 = vmatprep.subr.mxu0 %v4848
  %v4850 = vand.u32 %v4296, 4294901760
  %v4851 = vsub.f32 %v4296, %v4850
  %v4852 = vand.u32 %v4851, 4294901760
  %4853 = vmatpush1.msra.mxu0 %v4852
  %v4854 = vand.u32 %v4283, 4294901760
  %v4855 = vsub.f32 %v4283, %v4854
  %v4856 = vand.u32 %v4855, 4294901760
  %4857 = vmatprep.subr.mxu0 %v4856
  %v4858 = vand.u32 %v4282, 4294901760
  %v4859 = vsub.f32 %v4282, %v4858
  %v4860 = vand.u32 %v4859, 4294901760
  %4861 = vmatpush1.msra.mxu0 %v4860
  %v4862 = vand.u32 %v4269, 4294901760
  %v4863 = vsub.f32 %v4269, %v4862
  %v4864 = vand.u32 %v4863, 4294901760
  %4865 = vmatprep.subr.mxu0 %v4864
  %v4866 = vand.u32 %v4268, 4294901760
  %v4867 = vsub.f32 %v4268, %v4866
  %v4868 = vand.u32 %v4867, 4294901760
  %4869 = vmatpush1.msra.mxu0 %v4868
  %v4870 = vand.u32 %v4255, 4294901760
  %v4871 = vsub.f32 %v4255, %v4870
  %v4872 = vand.u32 %v4871, 4294901760
  %4873 = vmatprep.subr.mxu0 %v4872
  %v4874 = vand.u32 %v4254, 4294901760
  %v4875 = vsub.f32 %v4254, %v4874
  %v4876 = vand.u32 %v4875, 4294901760
  %4877 = vmatpush1.msra.mxu0 %v4876
  %v4878 = vand.u32 %v4241, 4294901760
  %v4879 = vsub.f32 %v4241, %v4878
  %v4880 = vand.u32 %v4879, 4294901760
  %4881 = vmatprep.subr.mxu0 %v4880
  %v4882 = vand.u32 %v4240, 4294901760
  %v4883 = vsub.f32 %v4240, %v4882
  %v4884 = vand.u32 %v4883, 4294901760
  %4885 = vmatpush1.msra.mxu0 %v4884
  %v4886 = vand.u32 %v4054, 4294901760
  %v4887 = vsub.f32 %v4054, %v4886
  %v4888 = vand.u32 %v4887, 4294901760
  %4889 = vmatprep.subr.mxu0 %v4888
  %v4890 = vand.u32 %v4053, 4294901760
  %v4891 = vsub.f32 %v4053, %v4890
  %v4892 = vand.u32 %v4891, 4294901760
  %4893 = vmatpush1.msra.mxu0 %v4892
  %4894 = vmatprep.subr.mxu0 0.0
  %4895 = vmatpush2.msra.mxu0 0.0
  %4896 = vmatprep.subr.mxu0 0.0
  %4897 = vmatpush2.msra.mxu0 0.0
  %4898 = vmatprep.subr.mxu0 0.0
  %4899 = vmatpush2.msra.mxu0 0.0
  %4900 = vmatprep.subr.mxu0 0.0
  %4901 = vmatpush2.msra.mxu0 0.0
  %4902 = vmatprep.subr.mxu0 0.0
  %4903 = vmatpush2.msra.mxu0 0.0
  %4904 = vmatprep.subr.mxu0 0.0
  %4905 = vmatpush2.msra.mxu0 0.0
  %4906 = vmatprep.subr.mxu0 0.0
  %4907 = vmatpush2.msra.mxu0 0.0
  %4908 = vmatprep.subr.mxu0 0.0
  %4909 = vmatpush2.msra.mxu0 0.0
  %4910 = vmatprep.subr.mxu0 0.0
  %4911 = vmatpush2.msra.mxu0 0.0
  %4912 = vmatprep.subr.mxu0 0.0
  %4913 = vmatpush2.msra.mxu0 0.0
  %4914 = vmatprep.subr.mxu0 0.0
  %4915 = vmatpush2.msra.mxu0 0.0
  %4916 = vmatprep.subr.mxu0 0.0
  %4917 = vmatpush2.msra.mxu0 0.0
  %4918 = vmatprep.subr.mxu0 0.0
  %4919 = vmatpush2.msra.mxu0 0.0
  %4920 = vmatprep.subr.mxu0 0.0
  %4921 = vmatpush2.msra.mxu0 0.0
  %4922 = vmatprep.subr.mxu0 0.0
  %4923 = vmatpush2.msra.mxu0 0.0
  %4924 = vmatprep.subr.mxu0 0.0
  %4925 = vmatpush2.msra.mxu0 0.0
  %4926 = vmatprep.mubr.f32.mxu0 0.0
  %v4927 = vand.u32 %v4349, 4294901760
  %4928 = vmatmul.mubr.f32.gmra.mxu0 %v4927
  %v4929 = vpop.f32.mrf.mxu0
  %v4930 = vadd.f32 %v4804, %v4929
  %v4931 = vpop.f32.mrf.mxu0
  %v4932 = vadd.f32 %v4806, %v4931
  %4933 = vdwg.mxu0
  %4934 = vmatprep.subr.mxu0 0.0
  %4935 = vmatpush1.msra.mxu0 0.0
  %4936 = vmatprep.subr.mxu0 0.0
  %4937 = vmatpush1.msra.mxu0 0.0
  %4938 = vmatprep.subr.mxu0 0.0
  %4939 = vmatpush1.msra.mxu0 0.0
  %4940 = vmatprep.subr.mxu0 0.0
  %4941 = vmatpush1.msra.mxu0 0.0
  %4942 = vmatprep.subr.mxu0 0.0
  %4943 = vmatpush1.msra.mxu0 0.0
  %4944 = vmatprep.subr.mxu0 0.0
  %4945 = vmatpush1.msra.mxu0 0.0
  %4946 = vmatprep.subr.mxu0 0.0
  %4947 = vmatpush1.msra.mxu0 0.0
  %v4948 = vand.u32 %v4339, 4294901760
  %4949 = vmatprep.subr.mxu0 %v4948
  %v4950 = vand.u32 %v4338, 4294901760
  %4951 = vmatpush1.msra.mxu0 %v4950
  %v4952 = vand.u32 %v4325, 4294901760
  %4953 = vmatprep.subr.mxu0 %v4952
  %v4954 = vand.u32 %v4324, 4294901760
  %4955 = vmatpush1.msra.mxu0 %v4954
  %v4956 = vand.u32 %v4311, 4294901760
  %4957 = vmatprep.subr.mxu0 %v4956
  %v4958 = vand.u32 %v4310, 4294901760
  %4959 = vmatpush1.msra.mxu0 %v4958
  %v4960 = vand.u32 %v4297, 4294901760
  %4961 = vmatprep.subr.mxu0 %v4960
  %v4962 = vand.u32 %v4296, 4294901760
  %4963 = vmatpush1.msra.mxu0 %v4962
  %v4964 = vand.u32 %v4283, 4294901760
  %4965 = vmatprep.subr.mxu0 %v4964
  %v4966 = vand.u32 %v4282, 4294901760
  %4967 = vmatpush1.msra.mxu0 %v4966
  %v4968 = vand.u32 %v4269, 4294901760
  %4969 = vmatprep.subr.mxu0 %v4968
  %v4970 = vand.u32 %v4268, 4294901760
  %4971 = vmatpush1.msra.mxu0 %v4970
  %v4972 = vand.u32 %v4255, 4294901760
  %4973 = vmatprep.subr.mxu0 %v4972
  %v4974 = vand.u32 %v4254, 4294901760
  %4975 = vmatpush1.msra.mxu0 %v4974
  %v4976 = vand.u32 %v4241, 4294901760
  %4977 = vmatprep.subr.mxu0 %v4976
  %v4978 = vand.u32 %v4240, 4294901760
  %4979 = vmatpush1.msra.mxu0 %v4978
  %v4980 = vand.u32 %v4054, 4294901760
  %4981 = vmatprep.subr.mxu0 %v4980
  %v4982 = vand.u32 %v4053, 4294901760
  %4983 = vmatpush1.msra.mxu0 %v4982
  %4984 = vmatprep.subr.mxu0 0.0
  %4985 = vmatpush2.msra.mxu0 0.0
  %4986 = vmatprep.subr.mxu0 0.0
  %4987 = vmatpush2.msra.mxu0 0.0
  %4988 = vmatprep.subr.mxu0 0.0
  %4989 = vmatpush2.msra.mxu0 0.0
  %4990 = vmatprep.subr.mxu0 0.0
  %4991 = vmatpush2.msra.mxu0 0.0
  %4992 = vmatprep.subr.mxu0 0.0
  %4993 = vmatpush2.msra.mxu0 0.0
  %4994 = vmatprep.subr.mxu0 0.0
  %4995 = vmatpush2.msra.mxu0 0.0
  %4996 = vmatprep.subr.mxu0 0.0
  %4997 = vmatpush2.msra.mxu0 0.0
  %4998 = vmatprep.subr.mxu0 0.0
  %4999 = vmatpush2.msra.mxu0 0.0
  %5000 = vmatprep.subr.mxu0 0.0
  %5001 = vmatpush2.msra.mxu0 0.0
  %5002 = vmatprep.subr.mxu0 0.0
  %5003 = vmatpush2.msra.mxu0 0.0
  %5004 = vmatprep.subr.mxu0 0.0
  %5005 = vmatpush2.msra.mxu0 0.0
  %5006 = vmatprep.subr.mxu0 0.0
  %5007 = vmatpush2.msra.mxu0 0.0
  %5008 = vmatprep.subr.mxu0 0.0
  %5009 = vmatpush2.msra.mxu0 0.0
  %5010 = vmatprep.subr.mxu0 0.0
  %5011 = vmatpush2.msra.mxu0 0.0
  %5012 = vmatprep.subr.mxu0 0.0
  %5013 = vmatpush2.msra.mxu0 0.0
  %5014 = vmatprep.subr.mxu0 0.0
  %5015 = vmatpush2.msra.mxu0 0.0
  %5016 = vmatprep.mubr.f32.mxu0 0.0
  %v5017 = vand.u32 %v4349, 4294901760
  %5018 = vmatmul.mubr.f32.gmra.mxu0 %v5017
  %v5019 = vpop.f32.mrf.mxu0
  %v5020 = vadd.f32 %v4930, %v5019
  %v5021 = vpop.f32.mrf.mxu0
  %v5022 = vadd.f32 %v4932, %v5021
  %5023 = vdwg.mxu0
  %v5024 = vmax.f32 %v5020, 0.0
  %v5025 = vmax.f32 %v5022, 0.0
  %5026 = vst [vmem:[%s8] sm:$0xff] %v5024
  %5027 = vst [vmem:[%s8 + $0x8] sm:$0xff] %v5025
  %v5028 = vmul.f32 %v3546, %v4048
  %v5029 = vmul.f32 %v3548, %v4052
  %v5030 = vmul.f32 %v3546, %v4066
  %v5031 = vmul.f32 %v3548, %v4069
  %v5032 = vmul.f32 %v4036, %v4068
  %v5033 = vmul.f32 %v3546, %v4087
  %v5034 = vmul.f32 %v3548, %v4091
  %v5035 = vmul.f32 %v4036, %v4089
  %v5036 = vmul.f32 %v3546, %v4109
  %v5037 = vmul.f32 %v3548, %v4113
  %v5038 = vmul.f32 %v4036, %v4111
  %v5039 = vmul.f32 %v3546, %v4131
  %v5040 = vmul.f32 %v3548, %v4135
  %v5041 = vmul.f32 %v4036, %v4133
  %v5042 = vmul.f32 %v3546, %v4153
  %v5043 = vmul.f32 %v3548, %v4157
  %v5044 = vmul.f32 %v4036, %v4155
  %v5045 = vmul.f32 %v3546, %v4175
  %v5046 = vmul.f32 %v3548, %v4179
  %v5047 = vmul.f32 %v4036, %v4177
  %v5048 = vmul.f32 %v3546, %v4197
  %v5049 = vmul.f32 %v3548, %v4201
  %v5050 = vmul.f32 %v4036, %v4199
  %v5051 = vmul.f32 %v3546, %v4219
  %v5052 = vmul.f32 %v3548, %v4223
  %v5053 = vmul.f32 %v4036, %v4221
  %5057 = vrot.lane.b32.xlu0 %v5030, 127
  %v5058 = vpop.permute.xlu0 %5057
  %5059 = vrot.lane.b32.xlu0 %v5031, 127
  %v5060 = vpop.permute.xlu0 %5059
  %5061 = vrot.lane.b32.xlu0 %v5032, 127
  %v5062 = vpop.permute.xlu0 %5061
  %v5063 = vsel %vm4239, %v5058, %v5060
  %v5064 = vsel %vm4239, %v5060, %v5062
  %5070 = vrot.lane.b32.xlu0 %v5033, 126
  %v5071 = vpop.permute.xlu0 %5070
  %5072 = vrot.lane.b32.xlu0 %v5034, 126
  %v5073 = vpop.permute.xlu0 %5072
  %5074 = vrot.lane.b32.xlu0 %v5035, 126
  %v5075 = vpop.permute.xlu0 %5074
  %v5076 = vsel %vm4253, %v5071, %v5073
  %v5077 = vsel %vm4253, %v5073, %v5075
  %5083 = vrot.lane.b32.xlu0 %v5036, 112
  %v5084 = vpop.permute.xlu0 %5083
  %5085 = vrot.lane.b32.xlu0 %v5037, 112
  %v5086 = vpop.permute.xlu0 %5085
  %5087 = vrot.lane.b32.xlu0 %v5038, 112
  %v5088 = vpop.permute.xlu0 %5087
  %v5089 = vsel %vm4267, %v5084, %v5086
  %v5090 = vsel %vm4267, %v5086, %v5088
  %5096 = vrot.lane.b32.xlu0 %v5039, 111
  %v5097 = vpop.permute.xlu0 %5096
  %5098 = vrot.lane.b32.xlu0 %v5040, 111
  %v5099 = vpop.permute.xlu0 %5098
  %5100 = vrot.lane.b32.xlu0 %v5041, 111
  %v5101 = vpop.permute.xlu0 %5100
  %v5102 = vsel %vm4281, %v5097, %v5099
  %v5103 = vsel %vm4281, %v5099, %v5101
  %5109 = vrot.lane.b32.xlu0 %v5042, 110
  %v5110 = vpop.permute.xlu0 %5109
  %5111 = vrot.lane.b32.xlu0 %v5043, 110
  %v5112 = vpop.permute.xlu0 %5111
  %5113 = vrot.lane.b32.xlu0 %v5044, 110
  %v5114 = vpop.permute.xlu0 %5113
  %v5115 = vsel %vm4295, %v5110, %v5112
  %v5116 = vsel %vm4295, %v5112, %v5114
  %5122 = vrot.lane.b32.xlu0 %v5045, 96
  %v5123 = vpop.permute.xlu0 %5122
  %5124 = vrot.lane.b32.xlu0 %v5046, 96
  %v5125 = vpop.permute.xlu0 %5124
  %5126 = vrot.lane.b32.xlu0 %v5047, 96
  %v5127 = vpop.permute.xlu0 %5126
  %v5128 = vsel %vm4309, %v5123, %v5125
  %v5129 = vsel %vm4309, %v5125, %v5127
  %5135 = vrot.lane.b32.xlu0 %v5048, 95
  %v5136 = vpop.permute.xlu0 %5135
  %5137 = vrot.lane.b32.xlu0 %v5049, 95
  %v5138 = vpop.permute.xlu0 %5137
  %5139 = vrot.lane.b32.xlu0 %v5050, 95
  %v5140 = vpop.permute.xlu0 %5139
  %v5141 = vsel %vm4323, %v5136, %v5138
  %v5142 = vsel %vm4323, %v5138, %v5140
  %5148 = vrot.lane.b32.xlu0 %v5051, 94
  %v5149 = vpop.permute.xlu0 %5148
  %5150 = vrot.lane.b32.xlu0 %v5052, 94
  %v5151 = vpop.permute.xlu0 %5150
  %5152 = vrot.lane.b32.xlu0 %v5053, 94
  %v5153 = vpop.permute.xlu0 %5152
  %v5154 = vsel %vm4337, %v5149, %v5151
  %v5155 = vsel %vm4337, %v5151, %v5153
  %5158 = vmatprep.subr.mxu0 0.0
  %5159 = vmatpush1.msra.mxu0 0.0
  %5160 = vmatprep.subr.mxu0 0.0
  %5161 = vmatpush1.msra.mxu0 0.0
  %5162 = vmatprep.subr.mxu0 0.0
  %5163 = vmatpush1.msra.mxu0 0.0
  %5164 = vmatprep.subr.mxu0 0.0
  %5165 = vmatpush1.msra.mxu0 0.0
  %5166 = vmatprep.subr.mxu0 0.0
  %5167 = vmatpush1.msra.mxu0 0.0
  %5168 = vmatprep.subr.mxu0 0.0
  %5169 = vmatpush1.msra.mxu0 0.0
  %5170 = vmatprep.subr.mxu0 0.0
  %5171 = vmatpush1.msra.mxu0 0.0
  %v5172 = vand.u32 %v5155, 4294901760
  %5173 = vmatprep.subr.mxu0 %v5172
  %v5174 = vand.u32 %v5154, 4294901760
  %5175 = vmatpush1.msra.mxu0 %v5174
  %v5176 = vand.u32 %v5142, 4294901760
  %5177 = vmatprep.subr.mxu0 %v5176
  %v5178 = vand.u32 %v5141, 4294901760
  %5179 = vmatpush1.msra.mxu0 %v5178
  %v5180 = vand.u32 %v5129, 4294901760
  %5181 = vmatprep.subr.mxu0 %v5180
  %v5182 = vand.u32 %v5128, 4294901760
  %5183 = vmatpush1.msra.mxu0 %v5182
  %v5184 = vand.u32 %v5116, 4294901760
  %5185 = vmatprep.subr.mxu0 %v5184
  %v5186 = vand.u32 %v5115, 4294901760
  %5187 = vmatpush1.msra.mxu0 %v5186
  %v5188 = vand.u32 %v5103, 4294901760
  %5189 = vmatprep.subr.mxu0 %v5188
  %v5190 = vand.u32 %v5102, 4294901760
  %5191 = vmatpush1.msra.mxu0 %v5190
  %v5192 = vand.u32 %v5090, 4294901760
  %5193 = vmatprep.subr.mxu0 %v5192
  %v5194 = vand.u32 %v5089, 4294901760
  %5195 = vmatpush1.msra.mxu0 %v5194
  %v5196 = vand.u32 %v5077, 4294901760
  %5197 = vmatprep.subr.mxu0 %v5196
  %v5198 = vand.u32 %v5076, 4294901760
  %5199 = vmatpush1.msra.mxu0 %v5198
  %v5200 = vand.u32 %v5064, 4294901760
  %5201 = vmatprep.subr.mxu0 %v5200
  %v5202 = vand.u32 %v5063, 4294901760
  %5203 = vmatpush1.msra.mxu0 %v5202
  %v5204 = vand.u32 %v5029, 4294901760
  %5205 = vmatprep.subr.mxu0 %v5204
  %v5206 = vand.u32 %v5028, 4294901760
  %5207 = vmatpush1.msra.mxu0 %v5206
  %5208 = vmatprep.subr.mxu0 0.0
  %5209 = vmatpush2.msra.mxu0 0.0
  %5210 = vmatprep.subr.mxu0 0.0
  %5211 = vmatpush2.msra.mxu0 0.0
  %5212 = vmatprep.subr.mxu0 0.0
  %5213 = vmatpush2.msra.mxu0 0.0
  %5214 = vmatprep.subr.mxu0 0.0
  %5215 = vmatpush2.msra.mxu0 0.0
  %5216 = vmatprep.subr.mxu0 0.0
  %5217 = vmatpush2.msra.mxu0 0.0
  %5218 = vmatprep.subr.mxu0 0.0
  %5219 = vmatpush2.msra.mxu0 0.0
  %5220 = vmatprep.subr.mxu0 0.0
  %5221 = vmatpush2.msra.mxu0 0.0
  %5222 = vmatprep.subr.mxu0 0.0
  %5223 = vmatpush2.msra.mxu0 0.0
  %5224 = vmatprep.subr.mxu0 0.0
  %5225 = vmatpush2.msra.mxu0 0.0
  %5226 = vmatprep.subr.mxu0 0.0
  %5227 = vmatpush2.msra.mxu0 0.0
  %5228 = vmatprep.subr.mxu0 0.0
  %5229 = vmatpush2.msra.mxu0 0.0
  %5230 = vmatprep.subr.mxu0 0.0
  %5231 = vmatpush2.msra.mxu0 0.0
  %5232 = vmatprep.subr.mxu0 0.0
  %5233 = vmatpush2.msra.mxu0 0.0
  %5234 = vmatprep.subr.mxu0 0.0
  %5235 = vmatpush2.msra.mxu0 0.0
  %5236 = vmatprep.subr.mxu0 0.0
  %5237 = vmatpush2.msra.mxu0 0.0
  %5238 = vmatprep.subr.mxu0 0.0
  %5239 = vmatpush2.msra.mxu0 0.0
  %5240 = vmatprep.mubr.f32.mxu0 0.0
  %v5241 = vand.u32 %v4349, 4294901760
  %v5242 = vsub.f32 %v4349, %v5241
  %v5243 = vand.u32 %v5242, 4294901760
  %v5244 = vsub.f32 %v5242, %v5243
  %v5245 = vand.u32 %v5244, 4294901760
  %5246 = vmatmul.mubr.f32.gmra.mxu0 %v5245
  %v5247 = vpop.f32.mrf.mxu0
  %v5248 = vadd.f32 %v4345, %v5247
  %v5249 = vpop.f32.mrf.mxu0
  %v5250 = vadd.f32 %v4345, %v5249
  %5251 = vdwg.mxu0
  %5252 = vmatprep.subr.mxu0 0.0
  %5253 = vmatpush1.msra.mxu0 0.0
  %5254 = vmatprep.subr.mxu0 0.0
  %5255 = vmatpush1.msra.mxu0 0.0
  %5256 = vmatprep.subr.mxu0 0.0
  %5257 = vmatpush1.msra.mxu0 0.0
  %5258 = vmatprep.subr.mxu0 0.0
  %5259 = vmatpush1.msra.mxu0 0.0
  %5260 = vmatprep.subr.mxu0 0.0
  %5261 = vmatpush1.msra.mxu0 0.0
  %5262 = vmatprep.subr.mxu0 0.0
  %5263 = vmatpush1.msra.mxu0 0.0
  %5264 = vmatprep.subr.mxu0 0.0
  %5265 = vmatpush1.msra.mxu0 0.0
  %v5266 = vand.u32 %v5155, 4294901760
  %v5267 = vsub.f32 %v5155, %v5266
  %v5268 = vand.u32 %v5267, 4294901760
  %v5269 = vsub.f32 %v5267, %v5268
  %v5270 = vand.u32 %v5269, 4294901760
  %5271 = vmatprep.subr.mxu0 %v5270
  %v5272 = vand.u32 %v5154, 4294901760
  %v5273 = vsub.f32 %v5154, %v5272
  %v5274 = vand.u32 %v5273, 4294901760
  %v5275 = vsub.f32 %v5273, %v5274
  %v5276 = vand.u32 %v5275, 4294901760
  %5277 = vmatpush1.msra.mxu0 %v5276
  %v5278 = vand.u32 %v5142, 4294901760
  %v5279 = vsub.f32 %v5142, %v5278
  %v5280 = vand.u32 %v5279, 4294901760
  %v5281 = vsub.f32 %v5279, %v5280
  %v5282 = vand.u32 %v5281, 4294901760
  %5283 = vmatprep.subr.mxu0 %v5282
  %v5284 = vand.u32 %v5141, 4294901760
  %v5285 = vsub.f32 %v5141, %v5284
  %v5286 = vand.u32 %v5285, 4294901760
  %v5287 = vsub.f32 %v5285, %v5286
  %v5288 = vand.u32 %v5287, 4294901760
  %5289 = vmatpush1.msra.mxu0 %v5288
  %v5290 = vand.u32 %v5129, 4294901760
  %v5291 = vsub.f32 %v5129, %v5290
  %v5292 = vand.u32 %v5291, 4294901760
  %v5293 = vsub.f32 %v5291, %v5292
  %v5294 = vand.u32 %v5293, 4294901760
  %5295 = vmatprep.subr.mxu0 %v5294
  %v5296 = vand.u32 %v5128, 4294901760
  %v5297 = vsub.f32 %v5128, %v5296
  %v5298 = vand.u32 %v5297, 4294901760
  %v5299 = vsub.f32 %v5297, %v5298
  %v5300 = vand.u32 %v5299, 4294901760
  %5301 = vmatpush1.msra.mxu0 %v5300
  %v5302 = vand.u32 %v5116, 4294901760
  %v5303 = vsub.f32 %v5116, %v5302
  %v5304 = vand.u32 %v5303, 4294901760
  %v5305 = vsub.f32 %v5303, %v5304
  %v5306 = vand.u32 %v5305, 4294901760
  %5307 = vmatprep.subr.mxu0 %v5306
  %v5308 = vand.u32 %v5115, 4294901760
  %v5309 = vsub.f32 %v5115, %v5308
  %v5310 = vand.u32 %v5309, 4294901760
  %v5311 = vsub.f32 %v5309, %v5310
  %v5312 = vand.u32 %v5311, 4294901760
  %5313 = vmatpush1.msra.mxu0 %v5312
  %v5314 = vand.u32 %v5103, 4294901760
  %v5315 = vsub.f32 %v5103, %v5314
  %v5316 = vand.u32 %v5315, 4294901760
  %v5317 = vsub.f32 %v5315, %v5316
  %v5318 = vand.u32 %v5317, 4294901760
  %5319 = vmatprep.subr.mxu0 %v5318
  %v5320 = vand.u32 %v5102, 4294901760
  %v5321 = vsub.f32 %v5102, %v5320
  %v5322 = vand.u32 %v5321, 4294901760
  %v5323 = vsub.f32 %v5321, %v5322
  %v5324 = vand.u32 %v5323, 4294901760
  %5325 = vmatpush1.msra.mxu0 %v5324
  %v5326 = vand.u32 %v5090, 4294901760
  %v5327 = vsub.f32 %v5090, %v5326
  %v5328 = vand.u32 %v5327, 4294901760
  %v5329 = vsub.f32 %v5327, %v5328
  %v5330 = vand.u32 %v5329, 4294901760
  %5331 = vmatprep.subr.mxu0 %v5330
  %v5332 = vand.u32 %v5089, 4294901760
  %v5333 = vsub.f32 %v5089, %v5332
  %v5334 = vand.u32 %v5333, 4294901760
  %v5335 = vsub.f32 %v5333, %v5334
  %v5336 = vand.u32 %v5335, 4294901760
  %5337 = vmatpush1.msra.mxu0 %v5336
  %v5338 = vand.u32 %v5077, 4294901760
  %v5339 = vsub.f32 %v5077, %v5338
  %v5340 = vand.u32 %v5339, 4294901760
  %v5341 = vsub.f32 %v5339, %v5340
  %v5342 = vand.u32 %v5341, 4294901760
  %5343 = vmatprep.subr.mxu0 %v5342
  %v5344 = vand.u32 %v5076, 4294901760
  %v5345 = vsub.f32 %v5076, %v5344
  %v5346 = vand.u32 %v5345, 4294901760
  %v5347 = vsub.f32 %v5345, %v5346
  %v5348 = vand.u32 %v5347, 4294901760
  %5349 = vmatpush1.msra.mxu0 %v5348
  %v5350 = vand.u32 %v5064, 4294901760
  %v5351 = vsub.f32 %v5064, %v5350
  %v5352 = vand.u32 %v5351, 4294901760
  %v5353 = vsub.f32 %v5351, %v5352
  %v5354 = vand.u32 %v5353, 4294901760
  %5355 = vmatprep.subr.mxu0 %v5354
  %v5356 = vand.u32 %v5063, 4294901760
  %v5357 = vsub.f32 %v5063, %v5356
  %v5358 = vand.u32 %v5357, 4294901760
  %v5359 = vsub.f32 %v5357, %v5358
  %v5360 = vand.u32 %v5359, 4294901760
  %5361 = vmatpush1.msra.mxu0 %v5360
  %v5362 = vand.u32 %v5029, 4294901760
  %v5363 = vsub.f32 %v5029, %v5362
  %v5364 = vand.u32 %v5363, 4294901760
  %v5365 = vsub.f32 %v5363, %v5364
  %v5366 = vand.u32 %v5365, 4294901760
  %5367 = vmatprep.subr.mxu0 %v5366
  %v5368 = vand.u32 %v5028, 4294901760
  %v5369 = vsub.f32 %v5028, %v5368
  %v5370 = vand.u32 %v5369, 4294901760
  %v5371 = vsub.f32 %v5369, %v5370
  %v5372 = vand.u32 %v5371, 4294901760
  %5373 = vmatpush1.msra.mxu0 %v5372
  %5374 = vmatprep.subr.mxu0 0.0
  %5375 = vmatpush2.msra.mxu0 0.0
  %5376 = vmatprep.subr.mxu0 0.0
  %5377 = vmatpush2.msra.mxu0 0.0
  %5378 = vmatprep.subr.mxu0 0.0
  %5379 = vmatpush2.msra.mxu0 0.0
  %5380 = vmatprep.subr.mxu0 0.0
  %5381 = vmatpush2.msra.mxu0 0.0
  %5382 = vmatprep.subr.mxu0 0.0
  %5383 = vmatpush2.msra.mxu0 0.0
  %5384 = vmatprep.subr.mxu0 0.0
  %5385 = vmatpush2.msra.mxu0 0.0
  %5386 = vmatprep.subr.mxu0 0.0
  %5387 = vmatpush2.msra.mxu0 0.0
  %5388 = vmatprep.subr.mxu0 0.0
  %5389 = vmatpush2.msra.mxu0 0.0
  %5390 = vmatprep.subr.mxu0 0.0
  %5391 = vmatpush2.msra.mxu0 0.0
  %5392 = vmatprep.subr.mxu0 0.0
  %5393 = vmatpush2.msra.mxu0 0.0
  %5394 = vmatprep.subr.mxu0 0.0
  %5395 = vmatpush2.msra.mxu0 0.0
  %5396 = vmatprep.subr.mxu0 0.0
  %5397 = vmatpush2.msra.mxu0 0.0
  %5398 = vmatprep.subr.mxu0 0.0
  %5399 = vmatpush2.msra.mxu0 0.0
  %5400 = vmatprep.subr.mxu0 0.0
  %5401 = vmatpush2.msra.mxu0 0.0
  %5402 = vmatprep.subr.mxu0 0.0
  %5403 = vmatpush2.msra.mxu0 0.0
  %5404 = vmatprep.subr.mxu0 0.0
  %5405 = vmatpush2.msra.mxu0 0.0
  %5406 = vmatprep.mubr.f32.mxu0 0.0
  %v5407 = vand.u32 %v4349, 4294901760
  %5408 = vmatmul.mubr.f32.gmra.mxu0 %v5407
  %v5409 = vpop.f32.mrf.mxu0
  %v5410 = vadd.f32 %v5248, %v5409
  %v5411 = vpop.f32.mrf.mxu0
  %v5412 = vadd.f32 %v5250, %v5411
  %5413 = vdwg.mxu0
  %5414 = vmatprep.subr.mxu0 0.0
  %5415 = vmatpush1.msra.mxu0 0.0
  %5416 = vmatprep.subr.mxu0 0.0
  %5417 = vmatpush1.msra.mxu0 0.0
  %5418 = vmatprep.subr.mxu0 0.0
  %5419 = vmatpush1.msra.mxu0 0.0
  %5420 = vmatprep.subr.mxu0 0.0
  %5421 = vmatpush1.msra.mxu0 0.0
  %5422 = vmatprep.subr.mxu0 0.0
  %5423 = vmatpush1.msra.mxu0 0.0
  %5424 = vmatprep.subr.mxu0 0.0
  %5425 = vmatpush1.msra.mxu0 0.0
  %5426 = vmatprep.subr.mxu0 0.0
  %5427 = vmatpush1.msra.mxu0 0.0
  %v5428 = vand.u32 %v5155, 4294901760
  %v5429 = vsub.f32 %v5155, %v5428
  %5430 = vmatprep.subr.mxu0 %v5429
  %v5431 = vand.u32 %v5154, 4294901760
  %v5432 = vsub.f32 %v5154, %v5431
  %5433 = vmatpush1.msra.mxu0 %v5432
  %v5434 = vand.u32 %v5142, 4294901760
  %v5435 = vsub.f32 %v5142, %v5434
  %5436 = vmatprep.subr.mxu0 %v5435
  %v5437 = vand.u32 %v5141, 4294901760
  %v5438 = vsub.f32 %v5141, %v5437
  %5439 = vmatpush1.msra.mxu0 %v5438
  %v5440 = vand.u32 %v5129, 4294901760
  %v5441 = vsub.f32 %v5129, %v5440
  %5442 = vmatprep.subr.mxu0 %v5441
  %v5443 = vand.u32 %v5128, 4294901760
  %v5444 = vsub.f32 %v5128, %v5443
  %5445 = vmatpush1.msra.mxu0 %v5444
  %v5446 = vand.u32 %v5116, 4294901760
  %v5447 = vsub.f32 %v5116, %v5446
  %5448 = vmatprep.subr.mxu0 %v5447
  %v5449 = vand.u32 %v5115, 4294901760
  %v5450 = vsub.f32 %v5115, %v5449
  %5451 = vmatpush1.msra.mxu0 %v5450
  %v5452 = vand.u32 %v5103, 4294901760
  %v5453 = vsub.f32 %v5103, %v5452
  %5454 = vmatprep.subr.mxu0 %v5453
  %v5455 = vand.u32 %v5102, 4294901760
  %v5456 = vsub.f32 %v5102, %v5455
  %5457 = vmatpush1.msra.mxu0 %v5456
  %v5458 = vand.u32 %v5090, 4294901760
  %v5459 = vsub.f32 %v5090, %v5458
  %5460 = vmatprep.subr.mxu0 %v5459
  %v5461 = vand.u32 %v5089, 4294901760
  %v5462 = vsub.f32 %v5089, %v5461
  %5463 = vmatpush1.msra.mxu0 %v5462
  %v5464 = vand.u32 %v5077, 4294901760
  %v5465 = vsub.f32 %v5077, %v5464
  %5466 = vmatprep.subr.mxu0 %v5465
  %v5467 = vand.u32 %v5076, 4294901760
  %v5468 = vsub.f32 %v5076, %v5467
  %5469 = vmatpush1.msra.mxu0 %v5468
  %v5470 = vand.u32 %v5064, 4294901760
  %v5471 = vsub.f32 %v5064, %v5470
  %5472 = vmatprep.subr.mxu0 %v5471
  %v5473 = vand.u32 %v5063, 4294901760
  %v5474 = vsub.f32 %v5063, %v5473
  %5475 = vmatpush1.msra.mxu0 %v5474
  %v5476 = vand.u32 %v5029, 4294901760
  %v5477 = vsub.f32 %v5029, %v5476
  %5478 = vmatprep.subr.mxu0 %v5477
  %v5479 = vand.u32 %v5028, 4294901760
  %v5480 = vsub.f32 %v5028, %v5479
  %5481 = vmatpush1.msra.mxu0 %v5480
  %5482 = vmatprep.subr.mxu0 0.0
  %5483 = vmatpush2.msra.mxu0 0.0
  %5484 = vmatprep.subr.mxu0 0.0
  %5485 = vmatpush2.msra.mxu0 0.0
  %5486 = vmatprep.subr.mxu0 0.0
  %5487 = vmatpush2.msra.mxu0 0.0
  %5488 = vmatprep.subr.mxu0 0.0
  %5489 = vmatpush2.msra.mxu0 0.0
  %5490 = vmatprep.subr.mxu0 0.0
  %5491 = vmatpush2.msra.mxu0 0.0
  %5492 = vmatprep.subr.mxu0 0.0
  %5493 = vmatpush2.msra.mxu0 0.0
  %5494 = vmatprep.subr.mxu0 0.0
  %5495 = vmatpush2.msra.mxu0 0.0
  %5496 = vmatprep.subr.mxu0 0.0
  %5497 = vmatpush2.msra.mxu0 0.0
  %5498 = vmatprep.subr.mxu0 0.0
  %5499 = vmatpush2.msra.mxu0 0.0
  %5500 = vmatprep.subr.mxu0 0.0
  %5501 = vmatpush2.msra.mxu0 0.0
  %5502 = vmatprep.subr.mxu0 0.0
  %5503 = vmatpush2.msra.mxu0 0.0
  %5504 = vmatprep.subr.mxu0 0.0
  %5505 = vmatpush2.msra.mxu0 0.0
  %5506 = vmatprep.subr.mxu0 0.0
  %5507 = vmatpush2.msra.mxu0 0.0
  %5508 = vmatprep.subr.mxu0 0.0
  %5509 = vmatpush2.msra.mxu0 0.0
  %5510 = vmatprep.subr.mxu0 0.0
  %5511 = vmatpush2.msra.mxu0 0.0
  %5512 = vmatprep.subr.mxu0 0.0
  %5513 = vmatpush2.msra.mxu0 0.0
  %5514 = vmatprep.mubr.f32.mxu0 0.0
  %v5515 = vand.u32 %v4349, 4294901760
  %v5516 = vsub.f32 %v4349, %v5515
  %5517 = vmatmul.mubr.f32.gmra.mxu0 %v5516
  %v5518 = vpop.f32.mrf.mxu0
  %v5519 = vadd.f32 %v5410, %v5518
  %v5520 = vpop.f32.mrf.mxu0
  %v5521 = vadd.f32 %v5412, %v5520
  %5522 = vdwg.mxu0
  %5523 = vmatprep.subr.mxu0 0.0
  %5524 = vmatpush1.msra.mxu0 0.0
  %5525 = vmatprep.subr.mxu0 0.0
  %5526 = vmatpush1.msra.mxu0 0.0
  %5527 = vmatprep.subr.mxu0 0.0
  %5528 = vmatpush1.msra.mxu0 0.0
  %5529 = vmatprep.subr.mxu0 0.0
  %5530 = vmatpush1.msra.mxu0 0.0
  %5531 = vmatprep.subr.mxu0 0.0
  %5532 = vmatpush1.msra.mxu0 0.0
  %5533 = vmatprep.subr.mxu0 0.0
  %5534 = vmatpush1.msra.mxu0 0.0
  %5535 = vmatprep.subr.mxu0 0.0
  %5536 = vmatpush1.msra.mxu0 0.0
  %v5537 = vand.u32 %v5155, 4294901760
  %5538 = vmatprep.subr.mxu0 %v5537
  %v5539 = vand.u32 %v5154, 4294901760
  %5540 = vmatpush1.msra.mxu0 %v5539
  %v5541 = vand.u32 %v5142, 4294901760
  %5542 = vmatprep.subr.mxu0 %v5541
  %v5543 = vand.u32 %v5141, 4294901760
  %5544 = vmatpush1.msra.mxu0 %v5543
  %v5545 = vand.u32 %v5129, 4294901760
  %5546 = vmatprep.subr.mxu0 %v5545
  %v5547 = vand.u32 %v5128, 4294901760
  %5548 = vmatpush1.msra.mxu0 %v5547
  %v5549 = vand.u32 %v5116, 4294901760
  %5550 = vmatprep.subr.mxu0 %v5549
  %v5551 = vand.u32 %v5115, 4294901760
  %5552 = vmatpush1.msra.mxu0 %v5551
  %v5553 = vand.u32 %v5103, 4294901760
  %5554 = vmatprep.subr.mxu0 %v5553
  %v5555 = vand.u32 %v5102, 4294901760
  %5556 = vmatpush1.msra.mxu0 %v5555
  %v5557 = vand.u32 %v5090, 4294901760
  %5558 = vmatprep.subr.mxu0 %v5557
  %v5559 = vand.u32 %v5089, 4294901760
  %5560 = vmatpush1.msra.mxu0 %v5559
  %v5561 = vand.u32 %v5077, 4294901760
  %5562 = vmatprep.subr.mxu0 %v5561
  %v5563 = vand.u32 %v5076, 4294901760
  %5564 = vmatpush1.msra.mxu0 %v5563
  %v5565 = vand.u32 %v5064, 4294901760
  %5566 = vmatprep.subr.mxu0 %v5565
  %v5567 = vand.u32 %v5063, 4294901760
  %5568 = vmatpush1.msra.mxu0 %v5567
  %v5569 = vand.u32 %v5029, 4294901760
  %5570 = vmatprep.subr.mxu0 %v5569
  %v5571 = vand.u32 %v5028, 4294901760
  %5572 = vmatpush1.msra.mxu0 %v5571
  %5573 = vmatprep.subr.mxu0 0.0
  %5574 = vmatpush2.msra.mxu0 0.0
  %5575 = vmatprep.subr.mxu0 0.0
  %5576 = vmatpush2.msra.mxu0 0.0
  %5577 = vmatprep.subr.mxu0 0.0
  %5578 = vmatpush2.msra.mxu0 0.0
  %5579 = vmatprep.subr.mxu0 0.0
  %5580 = vmatpush2.msra.mxu0 0.0
  %5581 = vmatprep.subr.mxu0 0.0
  %5582 = vmatpush2.msra.mxu0 0.0
  %5583 = vmatprep.subr.mxu0 0.0
  %5584 = vmatpush2.msra.mxu0 0.0
  %5585 = vmatprep.subr.mxu0 0.0
  %5586 = vmatpush2.msra.mxu0 0.0
  %5587 = vmatprep.subr.mxu0 0.0
  %5588 = vmatpush2.msra.mxu0 0.0
  %5589 = vmatprep.subr.mxu0 0.0
  %5590 = vmatpush2.msra.mxu0 0.0
  %5591 = vmatprep.subr.mxu0 0.0
  %5592 = vmatpush2.msra.mxu0 0.0
  %5593 = vmatprep.subr.mxu0 0.0
  %5594 = vmatpush2.msra.mxu0 0.0
  %5595 = vmatprep.subr.mxu0 0.0
  %5596 = vmatpush2.msra.mxu0 0.0
  %5597 = vmatprep.subr.mxu0 0.0
  %5598 = vmatpush2.msra.mxu0 0.0
  %5599 = vmatprep.subr.mxu0 0.0
  %5600 = vmatpush2.msra.mxu0 0.0
  %5601 = vmatprep.subr.mxu0 0.0
  %5602 = vmatpush2.msra.mxu0 0.0
  %5603 = vmatprep.subr.mxu0 0.0
  %5604 = vmatpush2.msra.mxu0 0.0
  %5605 = vmatprep.mubr.f32.mxu0 0.0
  %v5606 = vand.u32 %v4349, 4294901760
  %v5607 = vsub.f32 %v4349, %v5606
  %v5608 = vand.u32 %v5607, 4294901760
  %5609 = vmatmul.mubr.f32.gmra.mxu0 %v5608
  %v5610 = vpop.f32.mrf.mxu0
  %v5611 = vadd.f32 %v5519, %v5610
  %v5612 = vpop.f32.mrf.mxu0
  %v5613 = vadd.f32 %v5521, %v5612
  %5614 = vdwg.mxu0
  %5615 = vmatprep.subr.mxu0 0.0
  %5616 = vmatpush1.msra.mxu0 0.0
  %5617 = vmatprep.subr.mxu0 0.0
  %5618 = vmatpush1.msra.mxu0 0.0
  %5619 = vmatprep.subr.mxu0 0.0
  %5620 = vmatpush1.msra.mxu0 0.0
  %5621 = vmatprep.subr.mxu0 0.0
  %5622 = vmatpush1.msra.mxu0 0.0
  %5623 = vmatprep.subr.mxu0 0.0
  %5624 = vmatpush1.msra.mxu0 0.0
  %5625 = vmatprep.subr.mxu0 0.0
  %5626 = vmatpush1.msra.mxu0 0.0
  %5627 = vmatprep.subr.mxu0 0.0
  %5628 = vmatpush1.msra.mxu0 0.0
  %v5629 = vand.u32 %v5155, 4294901760
  %v5630 = vsub.f32 %v5155, %v5629
  %v5631 = vand.u32 %v5630, 4294901760
  %5632 = vmatprep.subr.mxu0 %v5631
  %v5633 = vand.u32 %v5154, 4294901760
  %v5634 = vsub.f32 %v5154, %v5633
  %v5635 = vand.u32 %v5634, 4294901760
  %5636 = vmatpush1.msra.mxu0 %v5635
  %v5637 = vand.u32 %v5142, 4294901760
  %v5638 = vsub.f32 %v5142, %v5637
  %v5639 = vand.u32 %v5638, 4294901760
  %5640 = vmatprep.subr.mxu0 %v5639
  %v5641 = vand.u32 %v5141, 4294901760
  %v5642 = vsub.f32 %v5141, %v5641
  %v5643 = vand.u32 %v5642, 4294901760
  %5644 = vmatpush1.msra.mxu0 %v5643
  %v5645 = vand.u32 %v5129, 4294901760
  %v5646 = vsub.f32 %v5129, %v5645
  %v5647 = vand.u32 %v5646, 4294901760
  %5648 = vmatprep.subr.mxu0 %v5647
  %v5649 = vand.u32 %v5128, 4294901760
  %v5650 = vsub.f32 %v5128, %v5649
  %v5651 = vand.u32 %v5650, 4294901760
  %5652 = vmatpush1.msra.mxu0 %v5651
  %v5653 = vand.u32 %v5116, 4294901760
  %v5654 = vsub.f32 %v5116, %v5653
  %v5655 = vand.u32 %v5654, 4294901760
  %5656 = vmatprep.subr.mxu0 %v5655
  %v5657 = vand.u32 %v5115, 4294901760
  %v5658 = vsub.f32 %v5115, %v5657
  %v5659 = vand.u32 %v5658, 4294901760
  %5660 = vmatpush1.msra.mxu0 %v5659
  %v5661 = vand.u32 %v5103, 4294901760
  %v5662 = vsub.f32 %v5103, %v5661
  %v5663 = vand.u32 %v5662, 4294901760
  %5664 = vmatprep.subr.mxu0 %v5663
  %v5665 = vand.u32 %v5102, 4294901760
  %v5666 = vsub.f32 %v5102, %v5665
  %v5667 = vand.u32 %v5666, 4294901760
  %5668 = vmatpush1.msra.mxu0 %v5667
  %v5669 = vand.u32 %v5090, 4294901760
  %v5670 = vsub.f32 %v5090, %v5669
  %v5671 = vand.u32 %v5670, 4294901760
  %5672 = vmatprep.subr.mxu0 %v5671
  %v5673 = vand.u32 %v5089, 4294901760
  %v5674 = vsub.f32 %v5089, %v5673
  %v5675 = vand.u32 %v5674, 4294901760
  %5676 = vmatpush1.msra.mxu0 %v5675
  %v5677 = vand.u32 %v5077, 4294901760
  %v5678 = vsub.f32 %v5077, %v5677
  %v5679 = vand.u32 %v5678, 4294901760
  %5680 = vmatprep.subr.mxu0 %v5679
  %v5681 = vand.u32 %v5076, 4294901760
  %v5682 = vsub.f32 %v5076, %v5681
  %v5683 = vand.u32 %v5682, 4294901760
  %5684 = vmatpush1.msra.mxu0 %v5683
  %v5685 = vand.u32 %v5064, 4294901760
  %v5686 = vsub.f32 %v5064, %v5685
  %v5687 = vand.u32 %v5686, 4294901760
  %5688 = vmatprep.subr.mxu0 %v5687
  %v5689 = vand.u32 %v5063, 4294901760
  %v5690 = vsub.f32 %v5063, %v5689
  %v5691 = vand.u32 %v5690, 4294901760
  %5692 = vmatpush1.msra.mxu0 %v5691
  %v5693 = vand.u32 %v5029, 4294901760
  %v5694 = vsub.f32 %v5029, %v5693
  %v5695 = vand.u32 %v5694, 4294901760
  %5696 = vmatprep.subr.mxu0 %v5695
  %v5697 = vand.u32 %v5028, 4294901760
  %v5698 = vsub.f32 %v5028, %v5697
  %v5699 = vand.u32 %v5698, 4294901760
  %5700 = vmatpush1.msra.mxu0 %v5699
  %5701 = vmatprep.subr.mxu0 0.0
  %5702 = vmatpush2.msra.mxu0 0.0
  %5703 = vmatprep.subr.mxu0 0.0
  %5704 = vmatpush2.msra.mxu0 0.0
  %5705 = vmatprep.subr.mxu0 0.0
  %5706 = vmatpush2.msra.mxu0 0.0
  %5707 = vmatprep.subr.mxu0 0.0
  %5708 = vmatpush2.msra.mxu0 0.0
  %5709 = vmatprep.subr.mxu0 0.0
  %5710 = vmatpush2.msra.mxu0 0.0
  %5711 = vmatprep.subr.mxu0 0.0
  %5712 = vmatpush2.msra.mxu0 0.0
  %5713 = vmatprep.subr.mxu0 0.0
  %5714 = vmatpush2.msra.mxu0 0.0
  %5715 = vmatprep.subr.mxu0 0.0
  %5716 = vmatpush2.msra.mxu0 0.0
  %5717 = vmatprep.subr.mxu0 0.0
  %5718 = vmatpush2.msra.mxu0 0.0
  %5719 = vmatprep.subr.mxu0 0.0
  %5720 = vmatpush2.msra.mxu0 0.0
  %5721 = vmatprep.subr.mxu0 0.0
  %5722 = vmatpush2.msra.mxu0 0.0
  %5723 = vmatprep.subr.mxu0 0.0
  %5724 = vmatpush2.msra.mxu0 0.0
  %5725 = vmatprep.subr.mxu0 0.0
  %5726 = vmatpush2.msra.mxu0 0.0
  %5727 = vmatprep.subr.mxu0 0.0
  %5728 = vmatpush2.msra.mxu0 0.0
  %5729 = vmatprep.subr.mxu0 0.0
  %5730 = vmatpush2.msra.mxu0 0.0
  %5731 = vmatprep.subr.mxu0 0.0
  %5732 = vmatpush2.msra.mxu0 0.0
  %5733 = vmatprep.mubr.f32.mxu0 0.0
  %v5734 = vand.u32 %v4349, 4294901760
  %5735 = vmatmul.mubr.f32.gmra.mxu0 %v5734
  %v5736 = vpop.f32.mrf.mxu0
  %v5737 = vadd.f32 %v5611, %v5736
  %v5738 = vpop.f32.mrf.mxu0
  %v5739 = vadd.f32 %v5613, %v5738
  %5740 = vdwg.mxu0
  %5741 = vmatprep.subr.mxu0 0.0
  %5742 = vmatpush1.msra.mxu0 0.0
  %5743 = vmatprep.subr.mxu0 0.0
  %5744 = vmatpush1.msra.mxu0 0.0
  %5745 = vmatprep.subr.mxu0 0.0
  %5746 = vmatpush1.msra.mxu0 0.0
  %5747 = vmatprep.subr.mxu0 0.0
  %5748 = vmatpush1.msra.mxu0 0.0
  %5749 = vmatprep.subr.mxu0 0.0
  %5750 = vmatpush1.msra.mxu0 0.0
  %5751 = vmatprep.subr.mxu0 0.0
  %5752 = vmatpush1.msra.mxu0 0.0
  %5753 = vmatprep.subr.mxu0 0.0
  %5754 = vmatpush1.msra.mxu0 0.0
  %v5755 = vand.u32 %v5155, 4294901760
  %5756 = vmatprep.subr.mxu0 %v5755
  %v5757 = vand.u32 %v5154, 4294901760
  %5758 = vmatpush1.msra.mxu0 %v5757
  %v5759 = vand.u32 %v5142, 4294901760
  %5760 = vmatprep.subr.mxu0 %v5759
  %v5761 = vand.u32 %v5141, 4294901760
  %5762 = vmatpush1.msra.mxu0 %v5761
  %v5763 = vand.u32 %v5129, 4294901760
  %5764 = vmatprep.subr.mxu0 %v5763
  %v5765 = vand.u32 %v5128, 4294901760
  %5766 = vmatpush1.msra.mxu0 %v5765
  %v5767 = vand.u32 %v5116, 4294901760
  %5768 = vmatprep.subr.mxu0 %v5767
  %v5769 = vand.u32 %v5115, 4294901760
  %5770 = vmatpush1.msra.mxu0 %v5769
  %v5771 = vand.u32 %v5103, 4294901760
  %5772 = vmatprep.subr.mxu0 %v5771
  %v5773 = vand.u32 %v5102, 4294901760
  %5774 = vmatpush1.msra.mxu0 %v5773
  %v5775 = vand.u32 %v5090, 4294901760
  %5776 = vmatprep.subr.mxu0 %v5775
  %v5777 = vand.u32 %v5089, 4294901760
  %5778 = vmatpush1.msra.mxu0 %v5777
  %v5779 = vand.u32 %v5077, 4294901760
  %5780 = vmatprep.subr.mxu0 %v5779
  %v5781 = vand.u32 %v5076, 4294901760
  %5782 = vmatpush1.msra.mxu0 %v5781
  %v5783 = vand.u32 %v5064, 4294901760
  %5784 = vmatprep.subr.mxu0 %v5783
  %v5785 = vand.u32 %v5063, 4294901760
  %5786 = vmatpush1.msra.mxu0 %v5785
  %v5787 = vand.u32 %v5029, 4294901760
  %5788 = vmatprep.subr.mxu0 %v5787
  %v5789 = vand.u32 %v5028, 4294901760
  %5790 = vmatpush1.msra.mxu0 %v5789
  %5791 = vmatprep.subr.mxu0 0.0
  %5792 = vmatpush2.msra.mxu0 0.0
  %5793 = vmatprep.subr.mxu0 0.0
  %5794 = vmatpush2.msra.mxu0 0.0
  %5795 = vmatprep.subr.mxu0 0.0
  %5796 = vmatpush2.msra.mxu0 0.0
  %5797 = vmatprep.subr.mxu0 0.0
  %5798 = vmatpush2.msra.mxu0 0.0
  %5799 = vmatprep.subr.mxu0 0.0
  %5800 = vmatpush2.msra.mxu0 0.0
  %5801 = vmatprep.subr.mxu0 0.0
  %5802 = vmatpush2.msra.mxu0 0.0
  %5803 = vmatprep.subr.mxu0 0.0
  %5804 = vmatpush2.msra.mxu0 0.0
  %5805 = vmatprep.subr.mxu0 0.0
  %5806 = vmatpush2.msra.mxu0 0.0
  %5807 = vmatprep.subr.mxu0 0.0
  %5808 = vmatpush2.msra.mxu0 0.0
  %5809 = vmatprep.subr.mxu0 0.0
  %5810 = vmatpush2.msra.mxu0 0.0
  %5811 = vmatprep.subr.mxu0 0.0
  %5812 = vmatpush2.msra.mxu0 0.0
  %5813 = vmatprep.subr.mxu0 0.0
  %5814 = vmatpush2.msra.mxu0 0.0
  %5815 = vmatprep.subr.mxu0 0.0
  %5816 = vmatpush2.msra.mxu0 0.0
  %5817 = vmatprep.subr.mxu0 0.0
  %5818 = vmatpush2.msra.mxu0 0.0
  %5819 = vmatprep.subr.mxu0 0.0
  %5820 = vmatpush2.msra.mxu0 0.0
  %5821 = vmatprep.subr.mxu0 0.0
  %5822 = vmatpush2.msra.mxu0 0.0
  %5823 = vmatprep.mubr.f32.mxu0 0.0
  %v5824 = vand.u32 %v4349, 4294901760
  %5825 = vmatmul.mubr.f32.gmra.mxu0 %v5824
  %v5826 = vpop.f32.mrf.mxu0
  %v5827 = vadd.f32 %v5737, %v5826
  %v5828 = vpop.f32.mrf.mxu0
  %v5829 = vadd.f32 %v5739, %v5828
  %5830 = vdwg.mxu0
  %v5831 = vmax.f32 %v5827, 0.0
  %v5832 = vmax.f32 %v5829, 0.0
  %5833 = vst [vmem:[%s8 + $0x10] sm:$0xff] %v5831
  %5834 = vst [vmem:[%s8 + $0x18] sm:$0xff] %v5832
  // Predicated region
  $region34: #{pp_context_forward.1} parent=0 // pred_check
    _
  $region35: #{pp_context_forward.1} parent=0 // pred_check_branch
    %5836 = sbr.rel (0) target = $region37
  $region36: #{pp_context_forward.1} parent=0 // pred_region
    _
  $region37: #{pp_context_forward.1} parent=0 // pred_fallthru
    _
  // Predicated region
  $region38: #{pp_context_forward.1} parent=0 // pred_check
    _
  $region39: #{pp_context_forward.1} parent=0 // pred_check_branch
    %5838 = sbr.rel (0) target = $region41
  $region40: #{pp_context_forward.1} parent=0 // pred_region
    _
  $region41: #{pp_context_forward.1} parent=0 // pred_fallthru
    _

</llo_original>
